<compile_context>
chip_gen: v6e
topology: v6e:2x2x1
jax: 0.10.0
libtpu: 0.0.40
codegen_flags: <defaults>
</compile_context>

<pallas_src>
import functools
import math

import jax
import jax.numpy as jnp
from jax import lax
from jax.experimental import pallas as pl
from jax.experimental.pallas import tpu as pltpu


def _round_up(x, m):
    return (x + m - 1) // m * m


def _gru_chunk_kernel(h0_ref, xp_ref, wh_ref, out_ref, h_scratch, *,
                      chunk, update_bias, size_p):
    """One grid step == `chunk` GRU timesteps for one batch tile.

    h0_ref:    (TB, size_p)            initial hidden state (read at t_chunk == 0)
    xp_ref:    (chunk, TB, 3*size_p)   precomputed x @ w_x pre-activations (f32)
    wh_ref:    (size_p, 3*size_p)      recurrent weights, bf16, resident in VMEM
    out_ref:   (chunk, TB, size_p)     hidden states for this chunk
    h_scratch: VMEM (TB, size_p) f32   hidden state carried across grid steps
    """
    @pl.when(pl.program_id(1) == 0)
    def _():
        h_scratch[...] = h0_ref[...].astype(jnp.float32)

    wh = wh_ref[...]  # resident bf16 weight tile, loaded once per chunk

    def step(c, h):
        # Single fused recurrent matmul per step (bf16 operands, f32 accumulation).
        parts = xp_ref[c] + jnp.dot(h.astype(wh.dtype), wh,
                                    preferred_element_type=jnp.float32)
        reset = jax.nn.sigmoid(parts[:, :size_p])
        cand = jnp.tanh(reset * parts[:, size_p:2 * size_p])
        update = jax.nn.sigmoid(parts[:, 2 * size_p:] + update_bias)
        h_new = h + update * (cand - h)          # == update*cand + (1-update)*h
        out_ref[c] = h_new.astype(out_ref.dtype)
        return h_new

    h_scratch[...] = lax.fori_loop(0, chunk, step, h_scratch[...], unroll=True)


def gru_rollout(xs, h0, w_x, w_h, *, update_bias=-1.0, time_chunk=8,
                batch_block=None):
    """Fused GRU rollout over a whole sequence in one pallas_call.

    xs:  (T, B, inp_size)
    h0:  (B, size)
    w_x: (inp_size, 3*size), w_h: (size, 3*size)   gate order: reset | cand | update
    Returns hs: (T, B, size) — hidden state after each step.
    """
    T, B, inp = xs.shape
    size = h0.shape[-1]
    assert w_x.shape == (inp, 3 * size) and w_h.shape == (size, 3 * size)

    size_p = _round_up(size, 128)            # lane-dense per-gate blocks
    if batch_block is None:
        batch_block = B
    assert B % batch_block == 0
    assert batch_block == B or batch_block % 8 == 0
    chunk = min(time_chunk, T)
    while T % chunk:
        chunk -= 1

    # ---- Hoisted input projection (one big MXU-friendly matmul, outside the
    #      serial recurrence), then pad each gate block to size_p (128-aligned). ----
    xparts = jnp.einsum("tbi,ig->tbg", xs.astype(jnp.float32),
                        w_x.astype(jnp.float32))                  # (T, B, 3*size)
    xparts = xparts.reshape(T, B, 3, size)
    xparts = jnp.pad(xparts, ((0, 0), (0, 0), (0, 0), (0, size_p - size)))
    xparts = xparts.reshape(T, B, 3 * size_p)                     # f32

    # ---- Recurrent weight: pad to (size_p, 3*size_p) with gate blocks 128-aligned,
    #      cast to bf16 (f32 accumulation in-kernel). ----
    wh_p = w_h.astype(jnp.float32).reshape(size, 3, size)
    wh_p = jnp.pad(wh_p, ((0, size_p - size), (0, 0), (0, size_p - size)))
    wh_p = wh_p.reshape(size_p, 3 * size_p).astype(jnp.bfloat16)

    h0_p = jnp.pad(h0.astype(jnp.float32), ((0, 0), (0, size_p - size)))

    kernel = functools.partial(_gru_chunk_kernel, chunk=chunk,
                               update_bias=float(update_bias), size_p=size_p)

    nb, nt = B // batch_block, T // chunk

    # VMEM budget: resident weight + double-buffered streamed blocks + scratch.
    est = (wh_p.size * 2
           + 2 * (chunk * batch_block * 3 * size_p * 4        # xparts block
                  + chunk * batch_block * size_p * 4          # out block
                  + batch_block * size_p * 4)                 # h0 block
           + batch_block * size_p * 4)                        # scratch
    vmem_limit = min(64 * 1024 * 1024,
                     max(int(1.5 * est) + (1 << 20), 32 * 1024 * 1024))

    def run(single_buffer_weights):
        wh_kwargs = {}
        if single_buffer_weights:
            # Constant index_map => tile never changes; single-buffer so realistic
            # sizes fit v7x's 64 MiB VMEM.
            wh_kwargs = dict(pipeline_mode=pl.Buffered(1))
        return pl.pallas_call(
            kernel,
            out_shape=jax.ShapeDtypeStruct((T, B, size_p), xs.dtype),
            grid=(nb, nt),
            in_specs=[
                pl.BlockSpec((batch_block, size_p), lambda b, t: (b, 0)),
                pl.BlockSpec((chunk, batch_block, 3 * size_p),
                             lambda b, t: (t, b, 0)),
                pl.BlockSpec((size_p, 3 * size_p), lambda b, t: (0, 0),
                             **wh_kwargs),
            ],
            out_specs=pl.BlockSpec((chunk, batch_block, size_p),
                                   lambda b, t: (t, b, 0)),
            scratch_shapes=[pltpu.VMEM((batch_block, size_p), jnp.float32)],
            compiler_params=pltpu.CompilerParams(
                dimension_semantics=("parallel", "arbitrary"),  # batch ∥, time serial
                vmem_limit_bytes=vmem_limit),
        )(h0_p, xparts, wh_p)

    try:
        hs_p = run(single_buffer_weights=True)
    except Exception:
        # Runtimes without pipeline_mode support: fall back to default buffering.
        hs_p = run(single_buffer_weights=False)

    return hs_p[..., :size]


def gru_cell(inputs, state, w_x, w_h, *, update_bias=-1.0):
    """Single-step call matching the torch module's forward: returns (output, [output])."""
    if isinstance(state, (list, tuple)):
        state = state[0]
    out = gru_rollout(inputs[None], state, w_x, w_h, update_bias=update_bias)[0]
    return out, [out]


# -------------------- pure-JAX reference (mirrors the torch module) --------------------

def _step_ref(x, h, w_x, w_h, update_bias):
    parts = jnp.concatenate([x, h], -1) @ jnp.concatenate([w_x, w_h], 0)
    reset, cand, update = jnp.split(parts, 3, axis=-1)
    reset = jax.nn.sigmoid(reset)
    cand = jnp.tanh(reset * cand)
    update = jax.nn.sigmoid(update + update_bias)
    return update * cand + (1.0 - update) * h


def _rollout_ref(xs, h0, w_x, w_h, update_bias):
    def body(h, x):
        h_new = _step_ref(x, h, w_x, w_h, update_bias)
        return h_new, h_new
    _, hs = jax.lax.scan(body, h0, xs)
    return hs


if __name__ == "__main__":
    T, B, inp_size, size = 8, 8, 32, 32

    key = jax.random.PRNGKey(0)
    k_x, k_h, k_w = jax.random.split(key, 3)

    xs = jax.random.normal(k_x, (T, B, inp_size), dtype=jnp.float32)
    h0 = jax.random.normal(k_h, (B, size), dtype=jnp.float32)

    # Deterministic init matching torch.nn.Linear default: U(-1/sqrt(fan_in), 1/sqrt(fan_in)).
    fan_in = inp_size + size
    bound = 1.0 / math.sqrt(fan_in)
    w_full = jax.random.uniform(k_w, (fan_in, 3 * size), dtype=jnp.float32,
                                minval=-bound, maxval=bound)
    w_x = w_full[:inp_size, :]
    w_h = w_full[inp_size:, :]

    # Fused sequence rollout: x-projection hoisted, bf16 recurrent weight resident
    # in VMEM, hidden state carried in f32 scratch, time axis chunked.
    hs = jax.block_until_ready(gru_rollout(xs, h0, w_x, w_h, update_bias=-1.0))
    hs_ref = _rollout_ref(xs, h0, w_x, w_h, -1.0)
    assert hs.shape == (T, B, size)
    # bf16 recurrent weights on the MXU -> looser tolerance vs the f32 reference.
    assert jnp.allclose(hs, hs_ref, atol=2e-2, rtol=2e-2), "rollout mismatch vs reference"

    # Single-step call matching the torch module's forward signature/semantics.
    out, (out_state,) = gru_cell(xs[0], [h0], w_x, w_h, update_bias=-1.0)
    out = jax.block_until_ready(out)
    assert out.shape == (B, size)
    assert jnp.allclose(out, _step_ref(xs[0], h0, w_x, w_h, -1.0),
                        atol=2e-2, rtol=2e-2), "single-step mismatch vs reference"

    print("KERNEL_OK")
</pallas_src>

<mosaic_0001>
module attributes {stable_mosaic.version = 11 : i64} {
  func.func @_gru_chunk_kernel(%arg0: i32, %arg1: i32, %arg2: memref<8x128xf32, #tpu.memory_space<vmem>>, %arg3: memref<8x8x384xf32, #tpu.memory_space<vmem>>, %arg4: memref<128x384xbf16, #tpu.memory_space<vmem>>, %arg5: memref<8x8x128xf32, #tpu.memory_space<vmem>>, %arg6: memref<8x128xf32, #tpu.memory_space<vmem>>) attributes {dimension_semantics = [#tpu.dimension_semantics<parallel>, #tpu.dimension_semantics<arbitrary>], iteration_bounds = array<i64: 1, 1>, scalar_prefetch = 0 : i64, scratch_operands = 1 : i64, tpu.core_type = #tpu.core_type<tc>, window_params = [{transform_indices = @transform_0, window_bounds = array<i64: 8, 128>}, {transform_indices = @transform_1, window_bounds = array<i64: 8, 8, 384>}, {pipeline_mode = #tpu.pipeline_mode<synchronous>, transform_indices = @transform_2, window_bounds = array<i64: 128, 384>}, {transform_indices = @transform_3, window_bounds = array<i64: 8, 8, 128>}]} {
    %c0_i32 = arith.constant 0 : i32
    %0 = arith.cmpi eq, %arg1, %c0_i32 : i32
    %1 = arith.extui %0 : i1 to i32
    %c0_i32_0 = arith.constant 0 : i32
    %2 = arith.cmpi ne, %1, %c0_i32_0 : i32
    scf.if %2 {
      %c0_70 = arith.constant 0 : index
      %c0_71 = arith.constant 0 : index
      %246 = vector.load %arg2[%c0_70, %c0_71] : memref<8x128xf32, #tpu.memory_space<vmem>>, vector<8x128xf32>
      %c0_72 = arith.constant 0 : index
      %c0_73 = arith.constant 0 : index
      %247 = vector.load %arg6[%c0_72, %c0_73] : memref<8x128xf32, #tpu.memory_space<vmem>>, vector<8x128xf32>
      tpu.vector_store %arg6[%c0_72, %c0_73], %246 {strides = array<i32>} : memref<8x128xf32, #tpu.memory_space<vmem>>, vector<8x128xf32>,
    } else {
    }
    %c0 = arith.constant 0 : index
    %c0_1 = arith.constant 0 : index
    %3 = vector.load %arg4[%c0, %c0_1] : memref<128x384xbf16, #tpu.memory_space<vmem>>, vector<128x384xbf16>
    %c0_2 = arith.constant 0 : index
    %c0_3 = arith.constant 0 : index
    %4 = vector.load %arg6[%c0_2, %c0_3] : memref<8x128xf32, #tpu.memory_space<vmem>>, vector<8x128xf32>
    %c0_i32_4 = arith.constant 0 : i32
    %5 = arith.index_cast %c0_i32_4 : i32 to index
    %c0_5 = arith.constant 0 : index
    %c0_6 = arith.constant 0 : index
    %6 = vector.load %arg3[%5, %c0_5, %c0_6] : memref<8x8x384xf32, #tpu.memory_space<vmem>>, vector<1x8x384xf32>
    %7 = vector.shape_cast %6 : vector<1x8x384xf32> to vector<8x384xf32>
    %8 = arith.truncf %4 : vector<8x128xf32> to vector<8x128xbf16>
    %cst = arith.constant dense<0.000000e+00> : vector<8x384xf32>
    %9 = tpu.matmul %8, %3, %cst {dimension_numbers = #tpu.dot_dimension_numbers<[1], [0], [0], [1], [0, 0, 1, 1], [], []>} : vector<8x128xbf16>, vector<128x384xbf16>, vector<8x384xf32> -> vector<8x384xf32>
    %10 = arith.addf %7, %9 : vector<8x384xf32>
    %11 = vector.extract_strided_slice %10 {offsets = [0, 0], sizes = [8, 128], strides = [1, 1]} : vector<8x384xf32> to vector<8x128xf32>
    %12 = arith.negf %11 : vector<8x128xf32>
    %13 = math.exp %12 : vector<8x128xf32>
    %cst_7 = arith.constant 1.000000e+00 : f32
    %14 = vector.broadcast %cst_7 : f32 to vector<8x128xf32>
    %15 = arith.addf %14, %13 : vector<8x128xf32>
    %16 = arith.divf %14, %15 : vector<8x128xf32>
    %17 = vector.extract_strided_slice %10 {offsets = [0, 128], sizes = [8, 128], strides = [1, 1]} : vector<8x384xf32> to vector<8x128xf32>
    %18 = arith.mulf %16, %17 : vector<8x128xf32>
    %19 = math.tanh %18 : vector<8x128xf32>
    %20 = vector.extract_strided_slice %10 {offsets = [0, 256], sizes = [8, 128], strides = [1, 1]} : vector<8x384xf32> to vector<8x128xf32>
    %cst_8 = arith.constant -1.000000e+00 : f32
    %21 = vector.broadcast %cst_8 : f32 to vector<8x128xf32>
    %22 = arith.addf %20, %21 : vector<8x128xf32>
    %23 = arith.negf %22 : vector<8x128xf32>
    %24 = math.exp %23 : vector<8x128xf32>
    %cst_9 = arith.constant 1.000000e+00 : f32
    %25 = vector.broadcast %cst_9 : f32 to vector<8x128xf32>
    %26 = arith.addf %25, %24 : vector<8x128xf32>
    %27 = arith.divf %25, %26 : vector<8x128xf32>
    %28 = arith.subf %19, %4 : vector<8x128xf32>
    %29 = arith.mulf %27, %28 : vector<8x128xf32>
    %30 = arith.addf %4, %29 : vector<8x128xf32>
    %31 = arith.index_cast %c0_i32_4 : i32 to index
    %c0_10 = arith.constant 0 : index
    %c0_11 = arith.constant 0 : index
    %32 = vector.load %arg5[%31, %c0_10, %c0_11] : memref<8x8x128xf32, #tpu.memory_space<vmem>>, vector<1x8x128xf32>
    %33 = vector.shape_cast %32 : vector<1x8x128xf32> to vector<8x128xf32>
    %34 = vector.shape_cast %30 : vector<8x128xf32> to vector<1x8x128xf32>
    tpu.vector_store %arg5[%31, %c0_10, %c0_11], %34 {strides = array<i32>} : memref<8x8x128xf32, #tpu.memory_space<vmem>>, vector<1x8x128xf32>,
    %c1_i32 = arith.constant 1 : i32
    %35 = arith.index_cast %c1_i32 : i32 to index
    %c0_12 = arith.constant 0 : index
    %c0_13 = arith.constant 0 : index
    %36 = vector.load %arg3[%35, %c0_12, %c0_13] : memref<8x8x384xf32, #tpu.memory_space<vmem>>, vector<1x8x384xf32>
    %37 = vector.shape_cast %36 : vector<1x8x384xf32> to vector<8x384xf32>
    %38 = arith.truncf %30 : vector<8x128xf32> to vector<8x128xbf16>
    %cst_14 = arith.constant dense<0.000000e+00> : vector<8x384xf32>
    %39 = tpu.matmul %38, %3, %cst_14 {dimension_numbers = #tpu.dot_dimension_numbers<[1], [0], [0], [1], [0, 0, 1, 1], [], []>} : vector<8x128xbf16>, vector<128x384xbf16>, vector<8x384xf32> -> vector<8x384xf32>
    %40 = arith.addf %37, %39 : vector<8x384xf32>
    %41 = vector.extract_strided_slice %40 {offsets = [0, 0], sizes = [8, 128], strides = [1, 1]} : vector<8x384xf32> to vector<8x128xf32>
    %42 = arith.negf %41 : vector<8x128xf32>
    %43 = math.exp %42 : vector<8x128xf32>
    %cst_15 = arith.constant 1.000000e+00 : f32
    %44 = vector.broadcast %cst_15 : f32 to vector<8x128xf32>
    %45 = arith.addf %44, %43 : vector<8x128xf32>
    %46 = arith.divf %44, %45 : vector<8x128xf32>
    %47 = vector.extract_strided_slice %40 {offsets = [0, 128], sizes = [8, 128], strides = [1, 1]} : vector<8x384xf32> to vector<8x128xf32>
    %48 = arith.mulf %46, %47 : vector<8x128xf32>
    %49 = math.tanh %48 : vector<8x128xf32>
    %50 = vector.extract_strided_slice %40 {offsets = [0, 256], sizes = [8, 128], strides = [1, 1]} : vector<8x384xf32> to vector<8x128xf32>
    %cst_16 = arith.constant -1.000000e+00 : f32
    %51 = vector.broadcast %cst_16 : f32 to vector<8x128xf32>
    %52 = arith.addf %50, %51 : vector<8x128xf32>
    %53 = arith.negf %52 : vector<8x128xf32>
    %54 = math.exp %53 : vector<8x128xf32>
    %cst_17 = arith.constant 1.000000e+00 : f32
    %55 = vector.broadcast %cst_17 : f32 to vector<8x128xf32>
    %56 = arith.addf %55, %54 : vector<8x128xf32>
    %57 = arith.divf %55, %56 : vector<8x128xf32>
    %58 = arith.subf %49, %30 : vector<8x128xf32>
    %59 = arith.mulf %57, %58 : vector<8x128xf32>
    %60 = arith.addf %30, %59 : vector<8x128xf32>
    %61 = arith.index_cast %c1_i32 : i32 to index
    %c0_18 = arith.constant 0 : index
    %c0_19 = arith.constant 0 : index
    %62 = vector.load %arg5[%61, %c0_18, %c0_19] : memref<8x8x128xf32, #tpu.memory_space<vmem>>, vector<1x8x128xf32>
    %63 = vector.shape_cast %62 : vector<1x8x128xf32> to vector<8x128xf32>
    %64 = vector.shape_cast %60 : vector<8x128xf32> to vector<1x8x128xf32>
    tpu.vector_store %arg5[%61, %c0_18, %c0_19], %64 {strides = array<i32>} : memref<8x8x128xf32, #tpu.memory_space<vmem>>, vector<1x8x128xf32>,
    %c2_i32 = arith.constant 2 : i32
    %65 = arith.index_cast %c2_i32 : i32 to index
    %c0_20 = arith.constant 0 : index
    %c0_21 = arith.constant 0 : index
    %66 = vector.load %arg3[%65, %c0_20, %c0_21] : memref<8x8x384xf32, #tpu.memory_space<vmem>>, vector<1x8x384xf32>
    %67 = vector.shape_cast %66 : vector<1x8x384xf32> to vector<8x384xf32>
    %68 = arith.truncf %60 : vector<8x128xf32> to vector<8x128xbf16>
    %cst_22 = arith.constant dense<0.000000e+00> : vector<8x384xf32>
    %69 = tpu.matmul %68, %3, %cst_22 {dimension_numbers = #tpu.dot_dimension_numbers<[1], [0], [0], [1], [0, 0, 1, 1], [], []>} : vector<8x128xbf16>, vector<128x384xbf16>, vector<8x384xf32> -> vector<8x384xf32>
    %70 = arith.addf %67, %69 : vector<8x384xf32>
    %71 = vector.extract_strided_slice %70 {offsets = [0, 0], sizes = [8, 128], strides = [1, 1]} : vector<8x384xf32> to vector<8x128xf32>
    %72 = arith.negf %71 : vector<8x128xf32>
    %73 = math.exp %72 : vector<8x128xf32>
    %cst_23 = arith.constant 1.000000e+00 : f32
    %74 = vector.broadcast %cst_23 : f32 to vector<8x128xf32>
    %75 = arith.addf %74, %73 : vector<8x128xf32>
    %76 = arith.divf %74, %75 : vector<8x128xf32>
    %77 = vector.extract_strided_slice %70 {offsets = [0, 128], sizes = [8, 128], strides = [1, 1]} : vector<8x384xf32> to vector<8x128xf32>
    %78 = arith.mulf %76, %77 : vector<8x128xf32>
    %79 = math.tanh %78 : vector<8x128xf32>
    %80 = vector.extract_strided_slice %70 {offsets = [0, 256], sizes = [8, 128], strides = [1, 1]} : vector<8x384xf32> to vector<8x128xf32>
    %cst_24 = arith.constant -1.000000e+00 : f32
    %81 = vector.broadcast %cst_24 : f32 to vector<8x128xf32>
    %82 = arith.addf %80, %81 : vector<8x128xf32>
    %83 = arith.negf %82 : vector<8x128xf32>
    %84 = math.exp %83 : vector<8x128xf32>
    %cst_25 = arith.constant 1.000000e+00 : f32
    %85 = vector.broadcast %cst_25 : f32 to vector<8x128xf32>
    %86 = arith.addf %85, %84 : vector<8x128xf32>
    %87 = arith.divf %85, %86 : vector<8x128xf32>
    %88 = arith.subf %79, %60 : vector<8x128xf32>
    %89 = arith.mulf %87, %88 : vector<8x128xf32>
    %90 = arith.addf %60, %89 : vector<8x128xf32>
    %91 = arith.index_cast %c2_i32 : i32 to index
    %c0_26 = arith.constant 0 : index
    %c0_27 = arith.constant 0 : index
    %92 = vector.load %arg5[%91, %c0_26, %c0_27] : memref<8x8x128xf32, #tpu.memory_space<vmem>>, vector<1x8x128xf32>
    %93 = vector.shape_cast %92 : vector<1x8x128xf32> to vector<8x128xf32>
    %94 = vector.shape_cast %90 : vector<8x128xf32> to vector<1x8x128xf32>
    tpu.vector_store %arg5[%91, %c0_26, %c0_27], %94 {strides = array<i32>} : memref<8x8x128xf32, #tpu.memory_space<vmem>>, vector<1x8x128xf32>,
    %c3_i32 = arith.constant 3 : i32
    %95 = arith.index_cast %c3_i32 : i32 to index
    %c0_28 = arith.constant 0 : index
    %c0_29 = arith.constant 0 : index
    %96 = vector.load %arg3[%95, %c0_28, %c0_29] : memref<8x8x384xf32, #tpu.memory_space<vmem>>, vector<1x8x384xf32>
    %97 = vector.shape_cast %96 : vector<1x8x384xf32> to vector<8x384xf32>
    %98 = arith.truncf %90 : vector<8x128xf32> to vector<8x128xbf16>
    %cst_30 = arith.constant dense<0.000000e+00> : vector<8x384xf32>
    %99 = tpu.matmul %98, %3, %cst_30 {dimension_numbers = #tpu.dot_dimension_numbers<[1], [0], [0], [1], [0, 0, 1, 1], [], []>} : vector<8x128xbf16>, vector<128x384xbf16>, vector<8x384xf32> -> vector<8x384xf32>
    %100 = arith.addf %97, %99 : vector<8x384xf32>
    %101 = vector.extract_strided_slice %100 {offsets = [0, 0], sizes = [8, 128], strides = [1, 1]} : vector<8x384xf32> to vector<8x128xf32>
    %102 = arith.negf %101 : vector<8x128xf32>
    %103 = math.exp %102 : vector<8x128xf32>
    %cst_31 = arith.constant 1.000000e+00 : f32
    %104 = vector.broadcast %cst_31 : f32 to vector<8x128xf32>
    %105 = arith.addf %104, %103 : vector<8x128xf32>
    %106 = arith.divf %104, %105 : vector<8x128xf32>
    %107 = vector.extract_strided_slice %100 {offsets = [0, 128], sizes = [8, 128], strides = [1, 1]} : vector<8x384xf32> to vector<8x128xf32>
    %108 = arith.mulf %106, %107 : vector<8x128xf32>
    %109 = math.tanh %108 : vector<8x128xf32>
    %110 = vector.extract_strided_slice %100 {offsets = [0, 256], sizes = [8, 128], strides = [1, 1]} : vector<8x384xf32> to vector<8x128xf32>
    %cst_32 = arith.constant -1.000000e+00 : f32
    %111 = vector.broadcast %cst_32 : f32 to vector<8x128xf32>
    %112 = arith.addf %110, %111 : vector<8x128xf32>
    %113 = arith.negf %112 : vector<8x128xf32>
    %114 = math.exp %113 : vector<8x128xf32>
    %cst_33 = arith.constant 1.000000e+00 : f32
    %115 = vector.broadcast %cst_33 : f32 to vector<8x128xf32>
    %116 = arith.addf %115, %114 : vector<8x128xf32>
    %117 = arith.divf %115, %116 : vector<8x128xf32>
    %118 = arith.subf %109, %90 : vector<8x128xf32>
    %119 = arith.mulf %117, %118 : vector<8x128xf32>
    %120 = arith.addf %90, %119 : vector<8x128xf32>
    %121 = arith.index_cast %c3_i32 : i32 to index
    %c0_34 = arith.constant 0 : index
    %c0_35 = arith.constant 0 : index
    %122 = vector.load %arg5[%121, %c0_34, %c0_35] : memref<8x8x128xf32, #tpu.memory_space<vmem>>, vector<1x8x128xf32>
    %123 = vector.shape_cast %122 : vector<1x8x128xf32> to vector<8x128xf32>
    %124 = vector.shape_cast %120 : vector<8x128xf32> to vector<1x8x128xf32>
    tpu.vector_store %arg5[%121, %c0_34, %c0_35], %124 {strides = array<i32>} : memref<8x8x128xf32, #tpu.memory_space<vmem>>, vector<1x8x128xf32>,
    %c4_i32 = arith.constant 4 : i32
    %125 = arith.index_cast %c4_i32 : i32 to index
    %c0_36 = arith.constant 0 : index
    %c0_37 = arith.constant 0 : index
    %126 = vector.load %arg3[%125, %c0_36, %c0_37] : memref<8x8x384xf32, #tpu.memory_space<vmem>>, vector<1x8x384xf32>
    %127 = vector.shape_cast %126 : vector<1x8x384xf32> to vector<8x384xf32>
    %128 = arith.truncf %120 : vector<8x128xf32> to vector<8x128xbf16>
    %cst_38 = arith.constant dense<0.000000e+00> : vector<8x384xf32>
    %129 = tpu.matmul %128, %3, %cst_38 {dimension_numbers = #tpu.dot_dimension_numbers<[1], [0], [0], [1], [0, 0, 1, 1], [], []>} : vector<8x128xbf16>, vector<128x384xbf16>, vector<8x384xf32> -> vector<8x384xf32>
    %130 = arith.addf %127, %129 : vector<8x384xf32>
    %131 = vector.extract_strided_slice %130 {offsets = [0, 0], sizes = [8, 128], strides = [1, 1]} : vector<8x384xf32> to vector<8x128xf32>
    %132 = arith.negf %131 : vector<8x128xf32>
    %133 = math.exp %132 : vector<8x128xf32>
    %cst_39 = arith.constant 1.000000e+00 : f32
    %134 = vector.broadcast %cst_39 : f32 to vector<8x128xf32>
    %135 = arith.addf %134, %133 : vector<8x128xf32>
    %136 = arith.divf %134, %135 : vector<8x128xf32>
    %137 = vector.extract_strided_slice %130 {offsets = [0, 128], sizes = [8, 128], strides = [1, 1]} : vector<8x384xf32> to vector<8x128xf32>
    %138 = arith.mulf %136, %137 : vector<8x128xf32>
    %139 = math.tanh %138 : vector<8x128xf32>
    %140 = vector.extract_strided_slice %130 {offsets = [0, 256], sizes = [8, 128], strides = [1, 1]} : vector<8x384xf32> to vector<8x128xf32>
    %cst_40 = arith.constant -1.000000e+00 : f32
    %141 = vector.broadcast %cst_40 : f32 to vector<8x128xf32>
    %142 = arith.addf %140, %141 : vector<8x128xf32>
    %143 = arith.negf %142 : vector<8x128xf32>
    %144 = math.exp %143 : vector<8x128xf32>
    %cst_41 = arith.constant 1.000000e+00 : f32
    %145 = vector.broadcast %cst_41 : f32 to vector<8x128xf32>
    %146 = arith.addf %145, %144 : vector<8x128xf32>
    %147 = arith.divf %145, %146 : vector<8x128xf32>
    %148 = arith.subf %139, %120 : vector<8x128xf32>
    %149 = arith.mulf %147, %148 : vector<8x128xf32>
    %150 = arith.addf %120, %149 : vector<8x128xf32>
    %151 = arith.index_cast %c4_i32 : i32 to index
    %c0_42 = arith.constant 0 : index
    %c0_43 = arith.constant 0 : index
    %152 = vector.load %arg5[%151, %c0_42, %c0_43] : memref<8x8x128xf32, #tpu.memory_space<vmem>>, vector<1x8x128xf32>
    %153 = vector.shape_cast %152 : vector<1x8x128xf32> to vector<8x128xf32>
    %154 = vector.shape_cast %150 : vector<8x128xf32> to vector<1x8x128xf32>
    tpu.vector_store %arg5[%151, %c0_42, %c0_43], %154 {strides = array<i32>} : memref<8x8x128xf32, #tpu.memory_space<vmem>>, vector<1x8x128xf32>,
    %c5_i32 = arith.constant 5 : i32
    %155 = arith.index_cast %c5_i32 : i32 to index
    %c0_44 = arith.constant 0 : index
    %c0_45 = arith.constant 0 : index
    %156 = vector.load %arg3[%155, %c0_44, %c0_45] : memref<8x8x384xf32, #tpu.memory_space<vmem>>, vector<1x8x384xf32>
    %157 = vector.shape_cast %156 : vector<1x8x384xf32> to vector<8x384xf32>
    %158 = arith.truncf %150 : vector<8x128xf32> to vector<8x128xbf16>
    %cst_46 = arith.constant dense<0.000000e+00> : vector<8x384xf32>
    %159 = tpu.matmul %158, %3, %cst_46 {dimension_numbers = #tpu.dot_dimension_numbers<[1], [0], [0], [1], [0, 0, 1, 1], [], []>} : vector<8x128xbf16>, vector<128x384xbf16>, vector<8x384xf32> -> vector<8x384xf32>
    %160 = arith.addf %157, %159 : vector<8x384xf32>
    %161 = vector.extract_strided_slice %160 {offsets = [0, 0], sizes = [8, 128], strides = [1, 1]} : vector<8x384xf32> to vector<8x128xf32>
    %162 = arith.negf %161 : vector<8x128xf32>
    %163 = math.exp %162 : vector<8x128xf32>
    %cst_47 = arith.constant 1.000000e+00 : f32
    %164 = vector.broadcast %cst_47 : f32 to vector<8x128xf32>
    %165 = arith.addf %164, %163 : vector<8x128xf32>
    %166 = arith.divf %164, %165 : vector<8x128xf32>
    %167 = vector.extract_strided_slice %160 {offsets = [0, 128], sizes = [8, 128], strides = [1, 1]} : vector<8x384xf32> to vector<8x128xf32>
    %168 = arith.mulf %166, %167 : vector<8x128xf32>
    %169 = math.tanh %168 : vector<8x128xf32>
    %170 = vector.extract_strided_slice %160 {offsets = [0, 256], sizes = [8, 128], strides = [1, 1]} : vector<8x384xf32> to vector<8x128xf32>
    %cst_48 = arith.constant -1.000000e+00 : f32
    %171 = vector.broadcast %cst_48 : f32 to vector<8x128xf32>
    %172 = arith.addf %170, %171 : vector<8x128xf32>
    %173 = arith.negf %172 : vector<8x128xf32>
    %174 = math.exp %173 : vector<8x128xf32>
    %cst_49 = arith.constant 1.000000e+00 : f32
    %175 = vector.broadcast %cst_49 : f32 to vector<8x128xf32>
    %176 = arith.addf %175, %174 : vector<8x128xf32>
    %177 = arith.divf %175, %176 : vector<8x128xf32>
    %178 = arith.subf %169, %150 : vector<8x128xf32>
    %179 = arith.mulf %177, %178 : vector<8x128xf32>
    %180 = arith.addf %150, %179 : vector<8x128xf32>
    %181 = arith.index_cast %c5_i32 : i32 to index
    %c0_50 = arith.constant 0 : index
    %c0_51 = arith.constant 0 : index
    %182 = vector.load %arg5[%181, %c0_50, %c0_51] : memref<8x8x128xf32, #tpu.memory_space<vmem>>, vector<1x8x128xf32>
    %183 = vector.shape_cast %182 : vector<1x8x128xf32> to vector<8x128xf32>
    %184 = vector.shape_cast %180 : vector<8x128xf32> to vector<1x8x128xf32>
    tpu.vector_store %arg5[%181, %c0_50, %c0_51], %184 {strides = array<i32>} : memref<8x8x128xf32, #tpu.memory_space<vmem>>, vector<1x8x128xf32>,
    %c6_i32 = arith.constant 6 : i32
    %185 = arith.index_cast %c6_i32 : i32 to index
    %c0_52 = arith.constant 0 : index
    %c0_53 = arith.constant 0 : index
    %186 = vector.load %arg3[%185, %c0_52, %c0_53] : memref<8x8x384xf32, #tpu.memory_space<vmem>>, vector<1x8x384xf32>
    %187 = vector.shape_cast %186 : vector<1x8x384xf32> to vector<8x384xf32>
    %188 = arith.truncf %180 : vector<8x128xf32> to vector<8x128xbf16>
    %cst_54 = arith.constant dense<0.000000e+00> : vector<8x384xf32>
    %189 = tpu.matmul %188, %3, %cst_54 {dimension_numbers = #tpu.dot_dimension_numbers<[1], [0], [0], [1], [0, 0, 1, 1], [], []>} : vector<8x128xbf16>, vector<128x384xbf16>, vector<8x384xf32> -> vector<8x384xf32>
    %190 = arith.addf %187, %189 : vector<8x384xf32>
    %191 = vector.extract_strided_slice %190 {offsets = [0, 0], sizes = [8, 128], strides = [1, 1]} : vector<8x384xf32> to vector<8x128xf32>
    %192 = arith.negf %191 : vector<8x128xf32>
    %193 = math.exp %192 : vector<8x128xf32>
    %cst_55 = arith.constant 1.000000e+00 : f32
    %194 = vector.broadcast %cst_55 : f32 to vector<8x128xf32>
    %195 = arith.addf %194, %193 : vector<8x128xf32>
    %196 = arith.divf %194, %195 : vector<8x128xf32>
    %197 = vector.extract_strided_slice %190 {offsets = [0, 128], sizes = [8, 128], strides = [1, 1]} : vector<8x384xf32> to vector<8x128xf32>
    %198 = arith.mulf %196, %197 : vector<8x128xf32>
    %199 = math.tanh %198 : vector<8x128xf32>
    %200 = vector.extract_strided_slice %190 {offsets = [0, 256], sizes = [8, 128], strides = [1, 1]} : vector<8x384xf32> to vector<8x128xf32>
    %cst_56 = arith.constant -1.000000e+00 : f32
    %201 = vector.broadcast %cst_56 : f32 to vector<8x128xf32>
    %202 = arith.addf %200, %201 : vector<8x128xf32>
    %203 = arith.negf %202 : vector<8x128xf32>
    %204 = math.exp %203 : vector<8x128xf32>
    %cst_57 = arith.constant 1.000000e+00 : f32
    %205 = vector.broadcast %cst_57 : f32 to vector<8x128xf32>
    %206 = arith.addf %205, %204 : vector<8x128xf32>
    %207 = arith.divf %205, %206 : vector<8x128xf32>
    %208 = arith.subf %199, %180 : vector<8x128xf32>
    %209 = arith.mulf %207, %208 : vector<8x128xf32>
    %210 = arith.addf %180, %209 : vector<8x128xf32>
    %211 = arith.index_cast %c6_i32 : i32 to index
    %c0_58 = arith.constant 0 : index
    %c0_59 = arith.constant 0 : index
    %212 = vector.load %arg5[%211, %c0_58, %c0_59] : memref<8x8x128xf32, #tpu.memory_space<vmem>>, vector<1x8x128xf32>
    %213 = vector.shape_cast %212 : vector<1x8x128xf32> to vector<8x128xf32>
    %214 = vector.shape_cast %210 : vector<8x128xf32> to vector<1x8x128xf32>
    tpu.vector_store %arg5[%211, %c0_58, %c0_59], %214 {strides = array<i32>} : memref<8x8x128xf32, #tpu.memory_space<vmem>>, vector<1x8x128xf32>,
    %c7_i32 = arith.constant 7 : i32
    %215 = arith.index_cast %c7_i32 : i32 to index
    %c0_60 = arith.constant 0 : index
    %c0_61 = arith.constant 0 : index
    %216 = vector.load %arg3[%215, %c0_60, %c0_61] : memref<8x8x384xf32, #tpu.memory_space<vmem>>, vector<1x8x384xf32>
    %217 = vector.shape_cast %216 : vector<1x8x384xf32> to vector<8x384xf32>
    %218 = arith.truncf %210 : vector<8x128xf32> to vector<8x128xbf16>
    %cst_62 = arith.constant dense<0.000000e+00> : vector<8x384xf32>
    %219 = tpu.matmul %218, %3, %cst_62 {dimension_numbers = #tpu.dot_dimension_numbers<[1], [0], [0], [1], [0, 0, 1, 1], [], []>} : vector<8x128xbf16>, vector<128x384xbf16>, vector<8x384xf32> -> vector<8x384xf32>
    %220 = arith.addf %217, %219 : vector<8x384xf32>
    %221 = vector.extract_strided_slice %220 {offsets = [0, 0], sizes = [8, 128], strides = [1, 1]} : vector<8x384xf32> to vector<8x128xf32>
    %222 = arith.negf %221 : vector<8x128xf32>
    %223 = math.exp %222 : vector<8x128xf32>
    %cst_63 = arith.constant 1.000000e+00 : f32
    %224 = vector.broadcast %cst_63 : f32 to vector<8x128xf32>
    %225 = arith.addf %224, %223 : vector<8x128xf32>
    %226 = arith.divf %224, %225 : vector<8x128xf32>
    %227 = vector.extract_strided_slice %220 {offsets = [0, 128], sizes = [8, 128], strides = [1, 1]} : vector<8x384xf32> to vector<8x128xf32>
    %228 = arith.mulf %226, %227 : vector<8x128xf32>
    %229 = math.tanh %228 : vector<8x128xf32>
    %230 = vector.extract_strided_slice %220 {offsets = [0, 256], sizes = [8, 128], strides = [1, 1]} : vector<8x384xf32> to vector<8x128xf32>
    %cst_64 = arith.constant -1.000000e+00 : f32
    %231 = vector.broadcast %cst_64 : f32 to vector<8x128xf32>
    %232 = arith.addf %230, %231 : vector<8x128xf32>
    %233 = arith.negf %232 : vector<8x128xf32>
    %234 = math.exp %233 : vector<8x128xf32>
    %cst_65 = arith.constant 1.000000e+00 : f32
    %235 = vector.broadcast %cst_65 : f32 to vector<8x128xf32>
    %236 = arith.addf %235, %234 : vector<8x128xf32>
    %237 = arith.divf %235, %236 : vector<8x128xf32>
    %238 = arith.subf %229, %210 : vector<8x128xf32>
    %239 = arith.mulf %237, %238 : vector<8x128xf32>
    %240 = arith.addf %210, %239 : vector<8x128xf32>
    %241 = arith.index_cast %c7_i32 : i32 to index
    %c0_66 = arith.constant 0 : index
    %c0_67 = arith.constant 0 : index
    %242 = vector.load %arg5[%241, %c0_66, %c0_67] : memref<8x8x128xf32, #tpu.memory_space<vmem>>, vector<1x8x128xf32>
    %243 = vector.shape_cast %242 : vector<1x8x128xf32> to vector<8x128xf32>
    %244 = vector.shape_cast %240 : vector<8x128xf32> to vector<1x8x128xf32>
    tpu.vector_store %arg5[%241, %c0_66, %c0_67], %244 {strides = array<i32>} : memref<8x8x128xf32, #tpu.memory_space<vmem>>, vector<1x8x128xf32>,
    %c8_i32 = arith.constant 8 : i32
    %c0_68 = arith.constant 0 : index
    %c0_69 = arith.constant 0 : index
    %245 = vector.load %arg6[%c0_68, %c0_69] : memref<8x128xf32, #tpu.memory_space<vmem>>, vector<8x128xf32>
    tpu.vector_store %arg6[%c0_68, %c0_69], %240 {strides = array<i32>} : memref<8x128xf32, #tpu.memory_space<vmem>>, vector<8x128xf32>,
    return
  }
  func.func @transform_0(%arg0: i32, %arg1: i32) -> (i32, i32) {
    %c0_i32 = arith.constant 0 : i32
    %c0_i32_0 = arith.constant 0 : i32
    return %arg0, %c0_i32 : i32, i32
  }
  func.func @transform_1(%arg0: i32, %arg1: i32) -> (i32, i32, i32) {
    %c0_i32 = arith.constant 0 : i32
    %c0_i32_0 = arith.constant 0 : i32
    return %arg1, %arg0, %c0_i32 : i32, i32, i32
  }
  func.func @transform_2(%arg0: i32, %arg1: i32) -> (i32, i32) {
    %c0_i32 = arith.constant 0 : i32
    %c0_i32_0 = arith.constant 0 : i32
    %c0_i32_1 = arith.constant 0 : i32
    return %c0_i32, %c0_i32_0 : i32, i32
  }
  func.func @transform_3(%arg0: i32, %arg1: i32) -> (i32, i32, i32) {
    %c0_i32 = arith.constant 0 : i32
    %c0_i32_0 = arith.constant 0 : i32
    return %arg1, %arg0, %c0_i32 : i32, i32, i32
  }
}

module attributes {stable_mosaic.version = 11 : i64} {
  func.func @_gru_chunk_kernel(%arg0: i32, %arg1: i32, %arg2: memref<8x128xf32, #tpu.memory_space<vmem>>, %arg3: memref<8x8x384xf32, #tpu.memory_space<vmem>>, %arg4: memref<128x384xbf16, #tpu.memory_space<vmem>>, %arg5: memref<8x8x128xf32, #tpu.memory_space<vmem>>, %arg6: memref<8x128xf32, #tpu.memory_space<vmem>>) attributes {dimension_semantics = [#tpu.dimension_semantics<parallel>, #tpu.dimension_semantics<arbitrary>], iteration_bounds = array<i64: 1, 1>, scalar_prefetch = 0 : i64, scratch_operands = 1 : i64, tpu.core_type = #tpu.core_type<tc>, window_params = [{transform_indices = @transform_0, window_bounds = array<i64: 8, 128>}, {transform_indices = @transform_1, window_bounds = array<i64: 8, 8, 384>}, {pipeline_mode = #tpu.pipeline_mode<synchronous>, transform_indices = @transform_2, window_bounds = array<i64: 128, 384>}, {transform_indices = @transform_3, window_bounds = array<i64: 8, 8, 128>}]} {
    %c0_i32 = arith.constant 0 : i32
    %0 = arith.cmpi eq, %arg1, %c0_i32 : i32
    %1 = arith.extui %0 : i1 to i32
    %c0_i32_0 = arith.constant 0 : i32
    %2 = arith.cmpi ne, %1, %c0_i32_0 : i32
    scf.if %2 {
      %c0_70 = arith.constant 0 : index
      %c0_71 = arith.constant 0 : index
      %246 = vector.load %arg2[%c0_70, %c0_71] : memref<8x128xf32, #tpu.memory_space<vmem>>, vector<8x128xf32>
      %c0_72 = arith.constant 0 : index
      %c0_73 = arith.constant 0 : index
      %247 = vector.load %arg6[%c0_72, %c0_73] : memref<8x128xf32, #tpu.memory_space<vmem>>, vector<8x128xf32>
      tpu.vector_store %arg6[%c0_72, %c0_73], %246 {strides = array<i32>} : memref<8x128xf32, #tpu.memory_space<vmem>>, vector<8x128xf32>,
    } else {
    }
    %c0 = arith.constant 0 : index
    %c0_1 = arith.constant 0 : index
    %3 = vector.load %arg4[%c0, %c0_1] : memref<128x384xbf16, #tpu.memory_space<vmem>>, vector<128x384xbf16>
    %c0_2 = arith.constant 0 : index
    %c0_3 = arith.constant 0 : index
    %4 = vector.load %arg6[%c0_2, %c0_3] : memref<8x128xf32, #tpu.memory_space<vmem>>, vector<8x128xf32>
    %c0_i32_4 = arith.constant 0 : i32
    %5 = arith.index_cast %c0_i32_4 : i32 to index
    %c0_5 = arith.constant 0 : index
    %c0_6 = arith.constant 0 : index
    %6 = vector.load %arg3[%5, %c0_5, %c0_6] : memref<8x8x384xf32, #tpu.memory_space<vmem>>, vector<1x8x384xf32>
    %7 = vector.shape_cast %6 : vector<1x8x384xf32> to vector<8x384xf32>
    %8 = arith.truncf %4 : vector<8x128xf32> to vector<8x128xbf16>
    %cst = arith.constant dense<0.000000e+00> : vector<8x384xf32>
    %9 = tpu.matmul %8, %3, %cst {dimension_numbers = #tpu.dot_dimension_numbers<[1], [0], [0], [1], [0, 0, 1, 1], [], []>} : vector<8x128xbf16>, vector<128x384xbf16>, vector<8x384xf32> -> vector<8x384xf32>
    %10 = arith.addf %7, %9 : vector<8x384xf32>
    %11 = vector.extract_strided_slice %10 {offsets = [0, 0], sizes = [8, 128], strides = [1, 1]} : vector<8x384xf32> to vector<8x128xf32>
    %12 = arith.negf %11 : vector<8x128xf32>
    %13 = math.exp %12 : vector<8x128xf32>
    %cst_7 = arith.constant 1.000000e+00 : f32
    %14 = vector.broadcast %cst_7 : f32 to vector<8x128xf32>
    %15 = arith.addf %14, %13 : vector<8x128xf32>
    %16 = arith.divf %14, %15 : vector<8x128xf32>
    %17 = vector.extract_strided_slice %10 {offsets = [0, 128], sizes = [8, 128], strides = [1, 1]} : vector<8x384xf32> to vector<8x128xf32>
    %18 = arith.mulf %16, %17 : vector<8x128xf32>
    %19 = math.tanh %18 : vector<8x128xf32>
    %20 = vector.extract_strided_slice %10 {offsets = [0, 256], sizes = [8, 128], strides = [1, 1]} : vector<8x384xf32> to vector<8x128xf32>
    %cst_8 = arith.constant -1.000000e+00 : f32
    %21 = vector.broadcast %cst_8 : f32 to vector<8x128xf32>
    %22 = arith.addf %20, %21 : vector<8x128xf32>
    %23 = arith.negf %22 : vector<8x128xf32>
    %24 = math.exp %23 : vector<8x128xf32>
    %cst_9 = arith.constant 1.000000e+00 : f32
    %25 = vector.broadcast %cst_9 : f32 to vector<8x128xf32>
    %26 = arith.addf %25, %24 : vector<8x128xf32>
    %27 = arith.divf %25, %26 : vector<8x128xf32>
    %28 = arith.subf %19, %4 : vector<8x128xf32>
    %29 = arith.mulf %27, %28 : vector<8x128xf32>
    %30 = arith.addf %4, %29 : vector<8x128xf32>
    %31 = arith.index_cast %c0_i32_4 : i32 to index
    %c0_10 = arith.constant 0 : index
    %c0_11 = arith.constant 0 : index
    %32 = vector.load %arg5[%31, %c0_10, %c0_11] : memref<8x8x128xf32, #tpu.memory_space<vmem>>, vector<1x8x128xf32>
    %33 = vector.shape_cast %32 : vector<1x8x128xf32> to vector<8x128xf32>
    %34 = vector.shape_cast %30 : vector<8x128xf32> to vector<1x8x128xf32>
    tpu.vector_store %arg5[%31, %c0_10, %c0_11], %34 {strides = array<i32>} : memref<8x8x128xf32, #tpu.memory_space<vmem>>, vector<1x8x128xf32>,
    %c1_i32 = arith.constant 1 : i32
    %35 = arith.index_cast %c1_i32 : i32 to index
    %c0_12 = arith.constant 0 : index
    %c0_13 = arith.constant 0 : index
    %36 = vector.load %arg3[%35, %c0_12, %c0_13] : memref<8x8x384xf32, #tpu.memory_space<vmem>>, vector<1x8x384xf32>
    %37 = vector.shape_cast %36 : vector<1x8x384xf32> to vector<8x384xf32>
    %38 = arith.truncf %30 : vector<8x128xf32> to vector<8x128xbf16>
    %cst_14 = arith.constant dense<0.000000e+00> : vector<8x384xf32>
    %39 = tpu.matmul %38, %3, %cst_14 {dimension_numbers = #tpu.dot_dimension_numbers<[1], [0], [0], [1], [0, 0, 1, 1], [], []>} : vector<8x128xbf16>, vector<128x384xbf16>, vector<8x384xf32> -> vector<8x384xf32>
    %40 = arith.addf %37, %39 : vector<8x384xf32>
    %41 = vector.extract_strided_slice %40 {offsets = [0, 0], sizes = [8, 128], strides = [1, 1]} : vector<8x384xf32> to vector<8x128xf32>
    %42 = arith.negf %41 : vector<8x128xf32>
    %43 = math.exp %42 : vector<8x128xf32>
    %cst_15 = arith.constant 1.000000e+00 : f32
    %44 = vector.broadcast %cst_15 : f32 to vector<8x128xf32>
    %45 = arith.addf %44, %43 : vector<8x128xf32>
    %46 = arith.divf %44, %45 : vector<8x128xf32>
    %47 = vector.extract_strided_slice %40 {offsets = [0, 128], sizes = [8, 128], strides = [1, 1]} : vector<8x384xf32> to vector<8x128xf32>
    %48 = arith.mulf %46, %47 : vector<8x128xf32>
    %49 = math.tanh %48 : vector<8x128xf32>
    %50 = vector.extract_strided_slice %40 {offsets = [0, 256], sizes = [8, 128], strides = [1, 1]} : vector<8x384xf32> to vector<8x128xf32>
    %cst_16 = arith.constant -1.000000e+00 : f32
    %51 = vector.broadcast %cst_16 : f32 to vector<8x128xf32>
    %52 = arith.addf %50, %51 : vector<8x128xf32>
    %53 = arith.negf %52 : vector<8x128xf32>
    %54 = math.exp %53 : vector<8x128xf32>
    %cst_17 = arith.constant 1.000000e+00 : f32
    %55 = vector.broadcast %cst_17 : f32 to vector<8x128xf32>
    %56 = arith.addf %55, %54 : vector<8x128xf32>
    %57 = arith.divf %55, %56 : vector<8x128xf32>
    %58 = arith.subf %49, %30 : vector<8x128xf32>
    %59 = arith.mulf %57, %58 : vector<8x128xf32>
    %60 = arith.addf %30, %59 : vector<8x128xf32>
    %61 = arith.index_cast %c1_i32 : i32 to index
    %c0_18 = arith.constant 0 : index
    %c0_19 = arith.constant 0 : index
    %62 = vector.load %arg5[%61, %c0_18, %c0_19] : memref<8x8x128xf32, #tpu.memory_space<vmem>>, vector<1x8x128xf32>
    %63 = vector.shape_cast %62 : vector<1x8x128xf32> to vector<8x128xf32>
    %64 = vector.shape_cast %60 : vector<8x128xf32> to vector<1x8x128xf32>
    tpu.vector_store %arg5[%61, %c0_18, %c0_19], %64 {strides = array<i32>} : memref<8x8x128xf32, #tpu.memory_space<vmem>>, vector<1x8x128xf32>,
    %c2_i32 = arith.constant 2 : i32
    %65 = arith.index_cast %c2_i32 : i32 to index
    %c0_20 = arith.constant 0 : index
    %c0_21 = arith.constant 0 : index
    %66 = vector.load %arg3[%65, %c0_20, %c0_21] : memref<8x8x384xf32, #tpu.memory_space<vmem>>, vector<1x8x384xf32>
    %67 = vector.shape_cast %66 : vector<1x8x384xf32> to vector<8x384xf32>
    %68 = arith.truncf %60 : vector<8x128xf32> to vector<8x128xbf16>
    %cst_22 = arith.constant dense<0.000000e+00> : vector<8x384xf32>
    %69 = tpu.matmul %68, %3, %cst_22 {dimension_numbers = #tpu.dot_dimension_numbers<[1], [0], [0], [1], [0, 0, 1, 1], [], []>} : vector<8x128xbf16>, vector<128x384xbf16>, vector<8x384xf32> -> vector<8x384xf32>
    %70 = arith.addf %67, %69 : vector<8x384xf32>
    %71 = vector.extract_strided_slice %70 {offsets = [0, 0], sizes = [8, 128], strides = [1, 1]} : vector<8x384xf32> to vector<8x128xf32>
    %72 = arith.negf %71 : vector<8x128xf32>
    %73 = math.exp %72 : vector<8x128xf32>
    %cst_23 = arith.constant 1.000000e+00 : f32
    %74 = vector.broadcast %cst_23 : f32 to vector<8x128xf32>
    %75 = arith.addf %74, %73 : vector<8x128xf32>
    %76 = arith.divf %74, %75 : vector<8x128xf32>
    %77 = vector.extract_strided_slice %70 {offsets = [0, 128], sizes = [8, 128], strides = [1, 1]} : vector<8x384xf32> to vector<8x128xf32>
    %78 = arith.mulf %76, %77 : vector<8x128xf32>
    %79 = math.tanh %78 : vector<8x128xf32>
    %80 = vector.extract_strided_slice %70 {offsets = [0, 256], sizes = [8, 128], strides = [1, 1]} : vector<8x384xf32> to vector<8x128xf32>
    %cst_24 = arith.constant -1.000000e+00 : f32
    %81 = vector.broadcast %cst_24 : f32 to vector<8x128xf32>
    %82 = arith.addf %80, %81 : vector<8x128xf32>
    %83 = arith.negf %82 : vector<8x128xf32>
    %84 = math.exp %83 : vector<8x128xf32>
    %cst_25 = arith.constant 1.000000e+00 : f32
    %85 = vector.broadcast %cst_25 : f32 to vector<8x128xf32>
    %86 = arith.addf %85, %84 : vector<8x128xf32>
    %87 = arith.divf %85, %86 : vector<8x128xf32>
    %88 = arith.subf %79, %60 : vector<8x128xf32>
    %89 = arith.mulf %87, %88 : vector<8x128xf32>
    %90 = arith.addf %60, %89 : vector<8x128xf32>
    %91 = arith.index_cast %c2_i32 : i32 to index
    %c0_26 = arith.constant 0 : index
    %c0_27 = arith.constant 0 : index
    %92 = vector.load %arg5[%91, %c0_26, %c0_27] : memref<8x8x128xf32, #tpu.memory_space<vmem>>, vector<1x8x128xf32>
    %93 = vector.shape_cast %92 : vector<1x8x128xf32> to vector<8x128xf32>
    %94 = vector.shape_cast %90 : vector<8x128xf32> to vector<1x8x128xf32>
    tpu.vector_store %arg5[%91, %c0_26, %c0_27], %94 {strides = array<i32>} : memref<8x8x128xf32, #tpu.memory_space<vmem>>, vector<1x8x128xf32>,
    %c3_i32 = arith.constant 3 : i32
    %95 = arith.index_cast %c3_i32 : i32 to index
    %c0_28 = arith.constant 0 : index
    %c0_29 = arith.constant 0 : index
    %96 = vector.load %arg3[%95, %c0_28, %c0_29] : memref<8x8x384xf32, #tpu.memory_space<vmem>>, vector<1x8x384xf32>
    %97 = vector.shape_cast %96 : vector<1x8x384xf32> to vector<8x384xf32>
    %98 = arith.truncf %90 : vector<8x128xf32> to vector<8x128xbf16>
    %cst_30 = arith.constant dense<0.000000e+00> : vector<8x384xf32>
    %99 = tpu.matmul %98, %3, %cst_30 {dimension_numbers = #tpu.dot_dimension_numbers<[1], [0], [0], [1], [0, 0, 1, 1], [], []>} : vector<8x128xbf16>, vector<128x384xbf16>, vector<8x384xf32> -> vector<8x384xf32>
    %100 = arith.addf %97, %99 : vector<8x384xf32>
    %101 = vector.extract_strided_slice %100 {offsets = [0, 0], sizes = [8, 128], strides = [1, 1]} : vector<8x384xf32> to vector<8x128xf32>
    %102 = arith.negf %101 : vector<8x128xf32>
    %103 = math.exp %102 : vector<8x128xf32>
    %cst_31 = arith.constant 1.000000e+00 : f32
    %104 = vector.broadcast %cst_31 : f32 to vector<8x128xf32>
    %105 = arith.addf %104, %103 : vector<8x128xf32>
    %106 = arith.divf %104, %105 : vector<8x128xf32>
    %107 = vector.extract_strided_slice %100 {offsets = [0, 128], sizes = [8, 128], strides = [1, 1]} : vector<8x384xf32> to vector<8x128xf32>
    %108 = arith.mulf %106, %107 : vector<8x128xf32>
    %109 = math.tanh %108 : vector<8x128xf32>
    %110 = vector.extract_strided_slice %100 {offsets = [0, 256], sizes = [8, 128], strides = [1, 1]} : vector<8x384xf32> to vector<8x128xf32>
    %cst_32 = arith.constant -1.000000e+00 : f32
    %111 = vector.broadcast %cst_32 : f32 to vector<8x128xf32>
    %112 = arith.addf %110, %111 : vector<8x128xf32>
    %113 = arith.negf %112 : vector<8x128xf32>
    %114 = math.exp %113 : vector<8x128xf32>
    %cst_33 = arith.constant 1.000000e+00 : f32
    %115 = vector.broadcast %cst_33 : f32 to vector<8x128xf32>
    %116 = arith.addf %115, %114 : vector<8x128xf32>
    %117 = arith.divf %115, %116 : vector<8x128xf32>
    %118 = arith.subf %109, %90 : vector<8x128xf32>
    %119 = arith.mulf %117, %118 : vector<8x128xf32>
    %120 = arith.addf %90, %119 : vector<8x128xf32>
    %121 = arith.index_cast %c3_i32 : i32 to index
    %c0_34 = arith.constant 0 : index
    %c0_35 = arith.constant 0 : index
    %122 = vector.load %arg5[%121, %c0_34, %c0_35] : memref<8x8x128xf32, #tpu.memory_space<vmem>>, vector<1x8x128xf32>
    %123 = vector.shape_cast %122 : vector<1x8x128xf32> to vector<8x128xf32>
    %124 = vector.shape_cast %120 : vector<8x128xf32> to vector<1x8x128xf32>
    tpu.vector_store %arg5[%121, %c0_34, %c0_35], %124 {strides = array<i32>} : memref<8x8x128xf32, #tpu.memory_space<vmem>>, vector<1x8x128xf32>,
    %c4_i32 = arith.constant 4 : i32
    %125 = arith.index_cast %c4_i32 : i32 to index
    %c0_36 = arith.constant 0 : index
    %c0_37 = arith.constant 0 : index
    %126 = vector.load %arg3[%125, %c0_36, %c0_37] : memref<8x8x384xf32, #tpu.memory_space<vmem>>, vector<1x8x384xf32>
    %127 = vector.shape_cast %126 : vector<1x8x384xf32> to vector<8x384xf32>
    %128 = arith.truncf %120 : vector<8x128xf32> to vector<8x128xbf16>
    %cst_38 = arith.constant dense<0.000000e+00> : vector<8x384xf32>
    %129 = tpu.matmul %128, %3, %cst_38 {dimension_numbers = #tpu.dot_dimension_numbers<[1], [0], [0], [1], [0, 0, 1, 1], [], []>} : vector<8x128xbf16>, vector<128x384xbf16>, vector<8x384xf32> -> vector<8x384xf32>
    %130 = arith.addf %127, %129 : vector<8x384xf32>
    %131 = vector.extract_strided_slice %130 {offsets = [0, 0], sizes = [8, 128], strides = [1, 1]} : vector<8x384xf32> to vector<8x128xf32>
    %132 = arith.negf %131 : vector<8x128xf32>
    %133 = math.exp %132 : vector<8x128xf32>
    %cst_39 = arith.constant 1.000000e+00 : f32
    %134 = vector.broadcast %cst_39 : f32 to vector<8x128xf32>
    %135 = arith.addf %134, %133 : vector<8x128xf32>
    %136 = arith.divf %134, %135 : vector<8x128xf32>
    %137 = vector.extract_strided_slice %130 {offsets = [0, 128], sizes = [8, 128], strides = [1, 1]} : vector<8x384xf32> to vector<8x128xf32>
    %138 = arith.mulf %136, %137 : vector<8x128xf32>
    %139 = math.tanh %138 : vector<8x128xf32>
    %140 = vector.extract_strided_slice %130 {offsets = [0, 256], sizes = [8, 128], strides = [1, 1]} : vector<8x384xf32> to vector<8x128xf32>
    %cst_40 = arith.constant -1.000000e+00 : f32
    %141 = vector.broadcast %cst_40 : f32 to vector<8x128xf32>
    %142 = arith.addf %140, %141 : vector<8x128xf32>
    %143 = arith.negf %142 : vector<8x128xf32>
    %144 = math.exp %143 : vector<8x128xf32>
    %cst_41 = arith.constant 1.000000e+00 : f32
    %145 = vector.broadcast %cst_41 : f32 to vector<8x128xf32>
    %146 = arith.addf %145, %144 : vector<8x128xf32>
    %147 = arith.divf %145, %146 : vector<8x128xf32>
    %148 = arith.subf %139, %120 : vector<8x128xf32>
    %149 = arith.mulf %147, %148 : vector<8x128xf32>
    %150 = arith.addf %120, %149 : vector<8x128xf32>
    %151 = arith.index_cast %c4_i32 : i32 to index
    %c0_42 = arith.constant 0 : index
    %c0_43 = arith.constant 0 : index
    %152 = vector.load %arg5[%151, %c0_42, %c0_43] : memref<8x8x128xf32, #tpu.memory_space<vmem>>, vector<1x8x128xf32>
    %153 = vector.shape_cast %152 : vector<1x8x128xf32> to vector<8x128xf32>
    %154 = vector.shape_cast %150 : vector<8x128xf32> to vector<1x8x128xf32>
    tpu.vector_store %arg5[%151, %c0_42, %c0_43], %154 {strides = array<i32>} : memref<8x8x128xf32, #tpu.memory_space<vmem>>, vector<1x8x128xf32>,
    %c5_i32 = arith.constant 5 : i32
    %155 = arith.index_cast %c5_i32 : i32 to index
    %c0_44 = arith.constant 0 : index
    %c0_45 = arith.constant 0 : index
    %156 = vector.load %arg3[%155, %c0_44, %c0_45] : memref<8x8x384xf32, #tpu.memory_space<vmem>>, vector<1x8x384xf32>
    %157 = vector.shape_cast %156 : vector<1x8x384xf32> to vector<8x384xf32>
    %158 = arith.truncf %150 : vector<8x128xf32> to vector<8x128xbf16>
    %cst_46 = arith.constant dense<0.000000e+00> : vector<8x384xf32>
    %159 = tpu.matmul %158, %3, %cst_46 {dimension_numbers = #tpu.dot_dimension_numbers<[1], [0], [0], [1], [0, 0, 1, 1], [], []>} : vector<8x128xbf16>, vector<128x384xbf16>, vector<8x384xf32> -> vector<8x384xf32>
    %160 = arith.addf %157, %159 : vector<8x384xf32>
    %161 = vector.extract_strided_slice %160 {offsets = [0, 0], sizes = [8, 128], strides = [1, 1]} : vector<8x384xf32> to vector<8x128xf32>
    %162 = arith.negf %161 : vector<8x128xf32>
    %163 = math.exp %162 : vector<8x128xf32>
    %cst_47 = arith.constant 1.000000e+00 : f32
    %164 = vector.broadcast %cst_47 : f32 to vector<8x128xf32>
    %165 = arith.addf %164, %163 : vector<8x128xf32>
    %166 = arith.divf %164, %165 : vector<8x128xf32>
    %167 = vector.extract_strided_slice %160 {offsets = [0, 128], sizes = [8, 128], strides = [1, 1]} : vector<8x384xf32> to vector<8x128xf32>
    %168 = arith.mulf %166, %167 : vector<8x128xf32>
    %169 = math.tanh %168 : vector<8x128xf32>
    %170 = vector.extract_strided_slice %160 {offsets = [0, 256], sizes = [8, 128], strides = [1, 1]} : vector<8x384xf32> to vector<8x128xf32>
    %cst_48 = arith.constant -1.000000e+00 : f32
    %171 = vector.broadcast %cst_48 : f32 to vector<8x128xf32>
    %172 = arith.addf %170, %171 : vector<8x128xf32>
    %173 = arith.negf %172 : vector<8x128xf32>
    %174 = math.exp %173 : vector<8x128xf32>
    %cst_49 = arith.constant 1.000000e+00 : f32
    %175 = vector.broadcast %cst_49 : f32 to vector<8x128xf32>
    %176 = arith.addf %175, %174 : vector<8x128xf32>
    %177 = arith.divf %175, %176 : vector<8x128xf32>
    %178 = arith.subf %169, %150 : vector<8x128xf32>
    %179 = arith.mulf %177, %178 : vector<8x128xf32>
    %180 = arith.addf %150, %179 : vector<8x128xf32>
    %181 = arith.index_cast %c5_i32 : i32 to index
    %c0_50 = arith.constant 0 : index
    %c0_51 = arith.constant 0 : index
    %182 = vector.load %arg5[%181, %c0_50, %c0_51] : memref<8x8x128xf32, #tpu.memory_space<vmem>>, vector<1x8x128xf32>
    %183 = vector.shape_cast %182 : vector<1x8x128xf32> to vector<8x128xf32>
    %184 = vector.shape_cast %180 : vector<8x128xf32> to vector<1x8x128xf32>
    tpu.vector_store %arg5[%181, %c0_50, %c0_51], %184 {strides = array<i32>} : memref<8x8x128xf32, #tpu.memory_space<vmem>>, vector<1x8x128xf32>,
    %c6_i32 = arith.constant 6 : i32
    %185 = arith.index_cast %c6_i32 : i32 to index
    %c0_52 = arith.constant 0 : index
    %c0_53 = arith.constant 0 : index
    %186 = vector.load %arg3[%185, %c0_52, %c0_53] : memref<8x8x384xf32, #tpu.memory_space<vmem>>, vector<1x8x384xf32>
    %187 = vector.shape_cast %186 : vector<1x8x384xf32> to vector<8x384xf32>
    %188 = arith.truncf %180 : vector<8x128xf32> to vector<8x128xbf16>
    %cst_54 = arith.constant dense<0.000000e+00> : vector<8x384xf32>
    %189 = tpu.matmul %188, %3, %cst_54 {dimension_numbers = #tpu.dot_dimension_numbers<[1], [0], [0], [1], [0, 0, 1, 1], [], []>} : vector<8x128xbf16>, vector<128x384xbf16>, vector<8x384xf32> -> vector<8x384xf32>
    %190 = arith.addf %187, %189 : vector<8x384xf32>
    %191 = vector.extract_strided_slice %190 {offsets = [0, 0], sizes = [8, 128], strides = [1, 1]} : vector<8x384xf32> to vector<8x128xf32>
    %192 = arith.negf %191 : vector<8x128xf32>
    %193 = math.exp %192 : vector<8x128xf32>
    %cst_55 = arith.constant 1.000000e+00 : f32
    %194 = vector.broadcast %cst_55 : f32 to vector<8x128xf32>
    %195 = arith.addf %194, %193 : vector<8x128xf32>
    %196 = arith.divf %194, %195 : vector<8x128xf32>
    %197 = vector.extract_strided_slice %190 {offsets = [0, 128], sizes = [8, 128], strides = [1, 1]} : vector<8x384xf32> to vector<8x128xf32>
    %198 = arith.mulf %196, %197 : vector<8x128xf32>
    %199 = math.tanh %198 : vector<8x128xf32>
    %200 = vector.extract_strided_slice %190 {offsets = [0, 256], sizes = [8, 128], strides = [1, 1]} : vector<8x384xf32> to vector<8x128xf32>
    %cst_56 = arith.constant -1.000000e+00 : f32
    %201 = vector.broadcast %cst_56 : f32 to vector<8x128xf32>
    %202 = arith.addf %200, %201 : vector<8x128xf32>
    %203 = arith.negf %202 : vector<8x128xf32>
    %204 = math.exp %203 : vector<8x128xf32>
    %cst_57 = arith.constant 1.000000e+00 : f32
    %205 = vector.broadcast %cst_57 : f32 to vector<8x128xf32>
    %206 = arith.addf %205, %204 : vector<8x128xf32>
    %207 = arith.divf %205, %206 : vector<8x128xf32>
    %208 = arith.subf %199, %180 : vector<8x128xf32>
    %209 = arith.mulf %207, %208 : vector<8x128xf32>
    %210 = arith.addf %180, %209 : vector<8x128xf32>
    %211 = arith.index_cast %c6_i32 : i32 to index
    %c0_58 = arith.constant 0 : index
    %c0_59 = arith.constant 0 : index
    %212 = vector.load %arg5[%211, %c0_58, %c0_59] : memref<8x8x128xf32, #tpu.memory_space<vmem>>, vector<1x8x128xf32>
    %213 = vector.shape_cast %212 : vector<1x8x128xf32> to vector<8x128xf32>
    %214 = vector.shape_cast %210 : vector<8x128xf32> to vector<1x8x128xf32>
    tpu.vector_store %arg5[%211, %c0_58, %c0_59], %214 {strides = array<i32>} : memref<8x8x128xf32, #tpu.memory_space<vmem>>, vector<1x8x128xf32>,
    %c7_i32 = arith.constant 7 : i32
    %215 = arith.index_cast %c7_i32 : i32 to index
    %c0_60 = arith.constant 0 : index
    %c0_61 = arith.constant 0 : index
    %216 = vector.load %arg3[%215, %c0_60, %c0_61] : memref<8x8x384xf32, #tpu.memory_space<vmem>>, vector<1x8x384xf32>
    %217 = vector.shape_cast %216 : vector<1x8x384xf32> to vector<8x384xf32>
    %218 = arith.truncf %210 : vector<8x128xf32> to vector<8x128xbf16>
    %cst_62 = arith.constant dense<0.000000e+00> : vector<8x384xf32>
    %219 = tpu.matmul %218, %3, %cst_62 {dimension_numbers = #tpu.dot_dimension_numbers<[1], [0], [0], [1], [0, 0, 1, 1], [], []>} : vector<8x128xbf16>, vector<128x384xbf16>, vector<8x384xf32> -> vector<8x384xf32>
    %220 = arith.addf %217, %219 : vector<8x384xf32>
    %221 = vector.extract_strided_slice %220 {offsets = [0, 0], sizes = [8, 128], strides = [1, 1]} : vector<8x384xf32> to vector<8x128xf32>
    %222 = arith.negf %221 : vector<8x128xf32>
    %223 = math.exp %222 : vector<8x128xf32>
    %cst_63 = arith.constant 1.000000e+00 : f32
    %224 = vector.broadcast %cst_63 : f32 to vector<8x128xf32>
    %225 = arith.addf %224, %223 : vector<8x128xf32>
    %226 = arith.divf %224, %225 : vector<8x128xf32>
    %227 = vector.extract_strided_slice %220 {offsets = [0, 128], sizes = [8, 128], strides = [1, 1]} : vector<8x384xf32> to vector<8x128xf32>
    %228 = arith.mulf %226, %227 : vector<8x128xf32>
    %229 = math.tanh %228 : vector<8x128xf32>
    %230 = vector.extract_strided_slice %220 {offsets = [0, 256], sizes = [8, 128], strides = [1, 1]} : vector<8x384xf32> to vector<8x128xf32>
    %cst_64 = arith.constant -1.000000e+00 : f32
    %231 = vector.broadcast %cst_64 : f32 to vector<8x128xf32>
    %232 = arith.addf %230, %231 : vector<8x128xf32>
    %233 = arith.negf %232 : vector<8x128xf32>
    %234 = math.exp %233 : vector<8x128xf32>
    %cst_65 = arith.constant 1.000000e+00 : f32
    %235 = vector.broadcast %cst_65 : f32 to vector<8x128xf32>
    %236 = arith.addf %235, %234 : vector<8x128xf32>
    %237 = arith.divf %235, %236 : vector<8x128xf32>
    %238 = arith.subf %229, %210 : vector<8x128xf32>
    %239 = arith.mulf %237, %238 : vector<8x128xf32>
    %240 = arith.addf %210, %239 : vector<8x128xf32>
    %241 = arith.index_cast %c7_i32 : i32 to index
    %c0_66 = arith.constant 0 : index
    %c0_67 = arith.constant 0 : index
    %242 = vector.load %arg5[%241, %c0_66, %c0_67] : memref<8x8x128xf32, #tpu.memory_space<vmem>>, vector<1x8x128xf32>
    %243 = vector.shape_cast %242 : vector<1x8x128xf32> to vector<8x128xf32>
    %244 = vector.shape_cast %240 : vector<8x128xf32> to vector<1x8x128xf32>
    tpu.vector_store %arg5[%241, %c0_66, %c0_67], %244 {strides = array<i32>} : memref<8x8x128xf32, #tpu.memory_space<vmem>>, vector<1x8x128xf32>,
    %c8_i32 = arith.constant 8 : i32
    %c0_68 = arith.constant 0 : index
    %c0_69 = arith.constant 0 : index
    %245 = vector.load %arg6[%c0_68, %c0_69] : memref<8x128xf32, #tpu.memory_space<vmem>>, vector<8x128xf32>
    tpu.vector_store %arg6[%c0_68, %c0_69], %240 {strides = array<i32>} : memref<8x128xf32, #tpu.memory_space<vmem>>, vector<8x128xf32>,
    return
  }
  func.func @transform_0(%arg0: i32, %arg1: i32) -> (i32, i32) {
    %c0_i32 = arith.constant 0 : i32
    %c0_i32_0 = arith.constant 0 : i32
    return %arg0, %c0_i32 : i32, i32
  }
  func.func @transform_1(%arg0: i32, %arg1: i32) -> (i32, i32, i32) {
    %c0_i32 = arith.constant 0 : i32
    %c0_i32_0 = arith.constant 0 : i32
    return %arg1, %arg0, %c0_i32 : i32, i32, i32
  }
  func.func @transform_2(%arg0: i32, %arg1: i32) -> (i32, i32) {
    %c0_i32 = arith.constant 0 : i32
    %c0_i32_0 = arith.constant 0 : i32
    %c0_i32_1 = arith.constant 0 : i32
    return %c0_i32, %c0_i32_0 : i32, i32
  }
  func.func @transform_3(%arg0: i32, %arg1: i32) -> (i32, i32, i32) {
    %c0_i32 = arith.constant 0 : i32
    %c0_i32_0 = arith.constant 0 : i32
    return %arg1, %arg0, %c0_i32 : i32, i32, i32
  }
}

</mosaic_0001>

<llo_original>
// kernel: tpu_custom_call.1
$region0: #{tpu_custom_call.1}
  #allocation0 [shape = 'u32[]', space=smem, size = 0x4, offset = 0x4, fixed_abs, tag = 'smem constant byte address 0x4 - core index']
  #allocation1 [shape = 'u32[144,128]{1,0:T(1,128)}', space=vmem, size = 0x12000, scoped, tag = 'internal scratch']
  #allocation2 [shape = 'f32[8,128]{1,0:T(8,128)}', space=vmem, size = 0x1000, scoped, tag = 'scratch operand']
  %s0 = inlined_call_operand.hbm [shape: f32[8,128], index: 0, kind: input, shape index: {}]
  %s1 = inlined_call_operand.hbm [shape: f32[8,8,384], index: 1, kind: input, shape index: {}]
  %s2 = inlined_call_operand.hbm [shape: bf16[128,384], index: 2, kind: input, shape index: {}]
  %s3 = inlined_call_operand.hbm [shape: f32[8,8,128], index: 3, kind: output, shape index: {}]
  %s4 = sld [smem:[#allocation0]]
  $region38: #{tpu_custom_call.1} parent=0
    _
  %s6 = ssub.s32 1, %s4
  %s7 = scalar_select 0, %s6, %s4
  $region1: #{tpu_custom_call.1} parent=0
    #allocation3 [shape = 'u8[4096]{0}', space=vmem, size = 0x1000, scoped, tag = 'input window, operand 0, single buffered']
    #allocation4 [shape = 's32[1]{0}', space=sflag, size = 0x4, scoped, tag = 'scoped memory for tpu_custom_call.1']
    #allocation5 [shape = 's32[1]{0}', space=sflag, size = 0x4, scoped, tag = 'scoped memory for tpu_custom_call.1']
    #allocation6 [shape = 'u8[98304]{0}', space=vmem, size = 0x18000, scoped, tag = 'input window, operand 1, single buffered']
    #allocation7 [shape = 's32[1]{0}', space=sflag, size = 0x4, scoped, tag = 'scoped memory for tpu_custom_call.1']
    #allocation8 [shape = 'u8[98304]{0}', space=vmem, size = 0x18000, scoped, tag = 'input window, operand 2, single buffered']
    #allocation9 [shape = 'u8[32768]{0}', space=vmem, size = 0x8000, scoped, tag = 'output window, operand 0, single buffered']
    %8 = vsyncpa [#allocation4], 0
    %9 = vsyncpa [#allocation7], 0
    %10 = vsyncpa [#allocation5], 0
    // Predicated region
    $region2: #{tpu_custom_call.1} parent=1 // pred_check
      _
    $region3: #{tpu_custom_call.1} parent=1 // pred_check_branch
      %12 = sbr.rel (0) target = $region5
    $region4: #{tpu_custom_call.1} parent=1 // pred_region
      %s14 = ssub.s32 128, 128
      %15 = vsyncadd [#allocation4], %s14
      %s17 = sshll.u32 [#allocation3], 4
      %s18 = int_to_ptr.vmem [resolvable:$true] %s17
      %20 = dma.hbm_to_vmem [thread:$0]  %s0, 128, %s18, [#allocation4]
    $region5: #{tpu_custom_call.1} parent=1 // pred_fallthru
      _
    // Predicated region
    $region6: #{tpu_custom_call.1} parent=1 // pred_check
      _
    $region7: #{tpu_custom_call.1} parent=1 // pred_check_branch
      %22 = sbr.rel (0) target = $region9
    $region8: #{tpu_custom_call.1} parent=1 // pred_region
      %s24 = ssub.s32 3072, 3072
      %25 = vsyncadd [#allocation7], %s24
      %s26 = sshll.u32 [#allocation6], 4
      %s27 = int_to_ptr.vmem [resolvable:$true] %s26
      %32 = dma.hbm_to_vmem [thread:$0]  %s1, 3072, %s27, [#allocation7], 384, 384, 24
    $region9: #{tpu_custom_call.1} parent=1 // pred_fallthru
      _
    // Predicated region
    $region10: #{tpu_custom_call.1} parent=1 // pred_check
      _
    $region11: #{tpu_custom_call.1} parent=1 // pred_check_branch
      %34 = sbr.rel (0) target = $region13
    $region12: #{tpu_custom_call.1} parent=1 // pred_region
      %s36 = ssub.s32 3072, 3072
      %37 = vsyncadd [#allocation7], %s36
      %s38 = sshll.u32 [#allocation8], 4
      %s39 = int_to_ptr.vmem [resolvable:$true] %s38
      %44 = dma.hbm_to_vmem [thread:$0]  %s2, 3072, %s39, [#allocation7], 192, 192, 12
    $region13: #{tpu_custom_call.1} parent=1 // pred_fallthru
      _
    // Predicated region
    $region14: #{tpu_custom_call.1} parent=1 // pred_check
      _
    $region15: #{tpu_custom_call.1} parent=1 // pred_check_branch
      %46 = sbr.rel (0) target = $region17
    $region16: #{tpu_custom_call.1} parent=1 // pred_region
      %47 = dma.done [#allocation4], 128
    $region17: #{tpu_custom_call.1} parent=1 // pred_fallthru
      _
    // Predicated region
    $region18: #{tpu_custom_call.1} parent=1 // pred_check
      _
    $region19: #{tpu_custom_call.1} parent=1 // pred_check_branch
      %49 = sbr.rel (0) target = $region21
    $region20: #{tpu_custom_call.1} parent=1 // pred_region
      %50 = dma.done [#allocation7], 3072
    $region21: #{tpu_custom_call.1} parent=1 // pred_fallthru
      _
    // Predicated region
    $region22: #{tpu_custom_call.1} parent=1 // pred_check
      _
    $region23: #{tpu_custom_call.1} parent=1 // pred_check_branch
      %52 = sbr.rel (0) target = $region25
    $region24: #{tpu_custom_call.1} parent=1 // pred_region
      %53 = dma.done [#allocation7], 3072
    $region25: #{tpu_custom_call.1} parent=1 // pred_fallthru
      _
    %p55 = scmp.eq.s32.totalorder 0, 0
    // Predicated region
    $region26: #{tpu_custom_call.1} parent=1 // pred_check
      %p56 = pneg %p55
    $region27: #{tpu_custom_call.1} parent=1 // pred_check_branch
      %58 = sbr.rel (%p56) target = $region29
    $region28: #{tpu_custom_call.1} parent=1 // pred_region
      %v59 = vld [vmem:[#allocation3] sm:$0xff]
      %60 = vst [vmem:[#allocation2] sm:$0xff] %v59
    $region29: #{tpu_custom_call.1} parent=1 // pred_fallthru
      _
    %v61 = vld [vmem:[#allocation8] sm:$0xff]
    %v62 = vld [vmem:[#allocation8 + $0x8] sm:$0xf]
    %v63 = vld [vmem:[#allocation8 + $0xc] sm:$0xff]
    %v64 = vld [vmem:[#allocation8 + $0x14] sm:$0xf]
    %v65 = vld [vmem:[#allocation8 + $0x18] sm:$0xff]
    %v66 = vld [vmem:[#allocation8 + $0x20] sm:$0xf]
    %v67 = vld [vmem:[#allocation8 + $0x24] sm:$0xff]
    %v68 = vld [vmem:[#allocation8 + $0x2c] sm:$0xf]
    %v69 = vld [vmem:[#allocation8 + $0x30] sm:$0xff]
    %v70 = vld [vmem:[#allocation8 + $0x38] sm:$0xf]
    %v71 = vld [vmem:[#allocation8 + $0x3c] sm:$0xff]
    %v72 = vld [vmem:[#allocation8 + $0x44] sm:$0xf]
    %v73 = vld [vmem:[#allocation8 + $0x48] sm:$0xff]
    %v74 = vld [vmem:[#allocation8 + $0x50] sm:$0xf]
    %v75 = vld [vmem:[#allocation8 + $0x54] sm:$0xff]
    %v76 = vld [vmem:[#allocation8 + $0x5c] sm:$0xf]
    %v77 = vld [vmem:[#allocation8 + $0x60] sm:$0xff]
    %v78 = vld [vmem:[#allocation8 + $0x68] sm:$0xf]
    %v79 = vld [vmem:[#allocation8 + $0x6c] sm:$0xff]
    %v80 = vld [vmem:[#allocation8 + $0x74] sm:$0xf]
    %v81 = vld [vmem:[#allocation8 + $0x78] sm:$0xff]
    %v82 = vld [vmem:[#allocation8 + $0x80] sm:$0xf]
    %v83 = vld [vmem:[#allocation8 + $0x84] sm:$0xff]
    %v84 = vld [vmem:[#allocation8 + $0x8c] sm:$0xf]
    %v85 = vld [vmem:[#allocation8 + $0x90] sm:$0xff]
    %v86 = vld [vmem:[#allocation8 + $0x98] sm:$0xf]
    %v87 = vld [vmem:[#allocation8 + $0x9c] sm:$0xff]
    %v88 = vld [vmem:[#allocation8 + $0xa4] sm:$0xf]
    %v89 = vld [vmem:[#allocation8 + $0xa8] sm:$0xff]
    %v90 = vld [vmem:[#allocation8 + $0xb0] sm:$0xf]
    %v91 = vld [vmem:[#allocation8 + $0xb4] sm:$0xff]
    %v92 = vld [vmem:[#allocation8 + $0xbc] sm:$0xf]
    %v93 = vld [vmem:[#allocation2] sm:$0xff]
    %v94 = vld [vmem:[#allocation6] sm:$0xff]
    %v95 = vld [vmem:[#allocation6 + $0x8] sm:$0xff]
    %v96 = vld [vmem:[#allocation6 + $0x10] sm:$0xff]
    %v97 = vpack.c.bf16 %v93, %v93
    %v130 = vunpack.c.l.b16 %v61
    %v131 = vunpack.c.h.b16 %v61
    %v132 = vunpack.c.l.b16 %v62
    %v133 = vunpack.c.l.b16 %v63
    %v134 = vunpack.c.h.b16 %v63
    %v135 = vunpack.c.l.b16 %v64
    %v136 = vunpack.c.l.b16 %v65
    %v137 = vunpack.c.h.b16 %v65
    %v138 = vunpack.c.l.b16 %v66
    %v139 = vunpack.c.l.b16 %v67
    %v140 = vunpack.c.h.b16 %v67
    %v141 = vunpack.c.l.b16 %v68
    %v142 = vunpack.c.l.b16 %v69
    %v143 = vunpack.c.h.b16 %v69
    %v144 = vunpack.c.l.b16 %v70
    %v145 = vunpack.c.l.b16 %v71
    %v146 = vunpack.c.h.b16 %v71
    %v147 = vunpack.c.l.b16 %v72
    %v148 = vunpack.c.l.b16 %v73
    %v149 = vunpack.c.h.b16 %v73
    %v150 = vunpack.c.l.b16 %v74
    %v151 = vunpack.c.l.b16 %v75
    %v152 = vunpack.c.h.b16 %v75
    %v153 = vunpack.c.l.b16 %v76
    %v154 = vunpack.c.l.b16 %v77
    %v155 = vunpack.c.h.b16 %v77
    %v156 = vunpack.c.l.b16 %v78
    %v157 = vunpack.c.l.b16 %v79
    %v158 = vunpack.c.h.b16 %v79
    %v159 = vunpack.c.l.b16 %v80
    %v160 = vunpack.c.l.b16 %v81
    %v161 = vunpack.c.h.b16 %v81
    %v162 = vunpack.c.l.b16 %v82
    %v163 = vunpack.c.l.b16 %v83
    %v164 = vunpack.c.h.b16 %v83
    %v165 = vunpack.c.l.b16 %v84
    %v166 = vunpack.c.l.b16 %v85
    %v167 = vunpack.c.h.b16 %v85
    %v168 = vunpack.c.l.b16 %v86
    %v169 = vunpack.c.l.b16 %v87
    %v170 = vunpack.c.h.b16 %v87
    %v171 = vunpack.c.l.b16 %v88
    %v172 = vunpack.c.l.b16 %v89
    %v173 = vunpack.c.h.b16 %v89
    %v174 = vunpack.c.l.b16 %v90
    %v175 = vunpack.c.l.b16 %v91
    %v176 = vunpack.c.h.b16 %v91
    %v177 = vunpack.c.l.b16 %v92
    %v178 = vpack.c.b16 %v133, %v130
    %v179 = vpack.c.b16 %v134, %v131
    %v180 = vpack.c.b16 %v135, %v132
    %v181 = vpack.c.b16 %v139, %v136
    %v182 = vpack.c.b16 %v140, %v137
    %v183 = vpack.c.b16 %v141, %v138
    %v184 = vpack.c.b16 %v145, %v142
    %v185 = vpack.c.b16 %v146, %v143
    %v186 = vpack.c.b16 %v147, %v144
    %v187 = vpack.c.b16 %v151, %v148
    %v188 = vpack.c.b16 %v152, %v149
    %v189 = vpack.c.b16 %v153, %v150
    %v190 = vpack.c.b16 %v157, %v154
    %v191 = vpack.c.b16 %v158, %v155
    %v192 = vpack.c.b16 %v159, %v156
    %v193 = vpack.c.b16 %v163, %v160
    %v194 = vpack.c.b16 %v164, %v161
    %v195 = vpack.c.b16 %v165, %v162
    %v196 = vpack.c.b16 %v169, %v166
    %v197 = vpack.c.b16 %v170, %v167
    %v198 = vpack.c.b16 %v171, %v168
    %v199 = vpack.c.b16 %v175, %v172
    %v200 = vpack.c.b16 %v176, %v173
    %v201 = vpack.c.b16 %v177, %v174
    %226 = vmatprep.subr.bf16.mxu0 %v200
    %227 = vmatpush1.bf16.msra.mxu0 %v199
    %228 = vmatprep.subr.bf16.mxu0 %v197
    %229 = vmatpush1.bf16.msra.mxu0 %v196
    %230 = vmatprep.subr.bf16.mxu0 %v194
    %231 = vmatpush1.bf16.msra.mxu0 %v193
    %232 = vmatprep.subr.bf16.mxu0 %v191
    %233 = vmatpush1.bf16.msra.mxu0 %v190
    %234 = vmatprep.subr.bf16.mxu0 %v188
    %235 = vmatpush1.bf16.msra.mxu0 %v187
    %236 = vmatprep.subr.bf16.mxu0 %v185
    %237 = vmatpush1.bf16.msra.mxu0 %v184
    %238 = vmatprep.subr.bf16.mxu0 %v182
    %239 = vmatpush1.bf16.msra.mxu0 %v181
    %240 = vmatprep.subr.bf16.mxu0 %v179
    %241 = vmatpush1.bf16.msra.mxu0 %v178
    %242 = vmatprep.subr.bf16.mxu0 0
    %243 = vmatpush2.bf16.msra.mxu0 0
    %244 = vmatprep.subr.bf16.mxu0 0
    %245 = vmatpush2.bf16.msra.mxu0 0
    %246 = vmatprep.subr.bf16.mxu0 0
    %247 = vmatpush2.bf16.msra.mxu0 0
    %248 = vmatprep.subr.bf16.mxu0 0
    %249 = vmatpush2.bf16.msra.mxu0 0
    %250 = vmatprep.subr.bf16.mxu0 0
    %251 = vmatpush2.bf16.msra.mxu0 0
    %252 = vmatprep.subr.bf16.mxu0 0
    %253 = vmatpush2.bf16.msra.mxu0 0
    %254 = vmatprep.subr.bf16.mxu0 0
    %255 = vmatpush2.bf16.msra.mxu0 0
    %256 = vmatprep.subr.bf16.mxu0 0
    %257 = vmatpush2.bf16.msra.mxu0 0
    %258 = vmatprep.mubr.bf16.mxu0 0
    %259 = vmatmul.mubr.bf16.gmra.mxu0 %v97
    %v260 = vpop.f32.mrf.mxu0
    %v261 = vadd.f32 0.0, %v260
    %v262 = vpop.f32.mrf.mxu0
    %v263 = vadd.f32 0.0, %v262
    %v264 = vpop.f32.mrf.mxu0
    %v265 = vpop.f32.mrf.mxu0
    %266 = vdwg.mxu0
    %267 = vmatprep.subr.bf16.mxu0 0
    %268 = vmatpush1.bf16.msra.mxu0 %v201
    %269 = vmatprep.subr.bf16.mxu0 0
    %270 = vmatpush1.bf16.msra.mxu0 %v198
    %271 = vmatprep.subr.bf16.mxu0 0
    %272 = vmatpush1.bf16.msra.mxu0 %v195
    %273 = vmatprep.subr.bf16.mxu0 0
    %274 = vmatpush1.bf16.msra.mxu0 %v192
    %275 = vmatprep.subr.bf16.mxu0 0
    %276 = vmatpush1.bf16.msra.mxu0 %v189
    %277 = vmatprep.subr.bf16.mxu0 0
    %278 = vmatpush1.bf16.msra.mxu0 %v186
    %279 = vmatprep.subr.bf16.mxu0 0
    %280 = vmatpush1.bf16.msra.mxu0 %v183
    %281 = vmatprep.subr.bf16.mxu0 0
    %282 = vmatpush1.bf16.msra.mxu0 %v180
    %283 = vmatprep.subr.bf16.mxu0 0
    %284 = vmatpush2.bf16.msra.mxu0 0
    %285 = vmatprep.subr.bf16.mxu0 0
    %286 = vmatpush2.bf16.msra.mxu0 0
    %287 = vmatprep.subr.bf16.mxu0 0
    %288 = vmatpush2.bf16.msra.mxu0 0
    %289 = vmatprep.subr.bf16.mxu0 0
    %290 = vmatpush2.bf16.msra.mxu0 0
    %291 = vmatprep.subr.bf16.mxu0 0
    %292 = vmatpush2.bf16.msra.mxu0 0
    %293 = vmatprep.subr.bf16.mxu0 0
    %294 = vmatpush2.bf16.msra.mxu0 0
    %295 = vmatprep.subr.bf16.mxu0 0
    %296 = vmatpush2.bf16.msra.mxu0 0
    %297 = vmatprep.subr.bf16.mxu0 0
    %298 = vmatpush2.bf16.msra.mxu0 0
    %299 = vmatprep.mubr.bf16.mxu0 0
    %300 = vmatmul.mubr.bf16.gmra.mxu0 %v97
    %v301 = vpop.f32.mrf.mxu0
    %v302 = vadd.f32 0.0, %v301
    %v303 = vpop.f32.mrf.mxu0
    %v304 = vpop.f32.mrf.mxu0
    %v305 = vpop.f32.mrf.mxu0
    %306 = vdwg.mxu0
    %v307 = vadd.f32 %v94, %v261
    %v308 = vadd.f32 %v95, %v263
    %v309 = vadd.f32 %v96, %v302
    %v310 = vxor.u32 %v307, 2147483648
    %v311 = vmul.f32 %v310, 1.442695
    %v312 = vpow.pop %v311
    %v313 = vadd.f32 %v312, 1.0
    %v314 = vrcp.pop %v313
    %v315 = vmul.f32 1.0, %v314
    %v316 = vmul.f32 %v315, %v308
    %v317 = vtanh.pop %v316
    %v318 = vadd.f32 %v309, -1.0
    %v319 = vxor.u32 %v318, 2147483648
    %v320 = vmul.f32 %v319, 1.442695
    %v321 = vpow.pop %v320
    %v322 = vadd.f32 %v321, 1.0
    %v323 = vrcp.pop %v322
    %v324 = vmul.f32 1.0, %v323
    %v325 = vsub.f32 %v317, %v93
    %v326 = vmul.f32 %v324, %v325
    %v327 = vadd.f32 %v93, %v326
    %328 = vst [vmem:[#allocation9] sm:$0xff] %v327
    %s329 = scalar_lea.vmem [#allocation6], 24
    %v330 = vld [vmem:[%s329] sm:$0xff]
    %v331 = vld [vmem:[%s329 + $0x8] sm:$0xff]
    %v332 = vld [vmem:[%s329 + $0x10] sm:$0xff]
    %v333 = vpack.c.bf16 %v327, %v327
    %334 = vmatprep.subr.bf16.mxu0 %v200
    %335 = vmatpush1.bf16.msra.mxu0 %v199
    %336 = vmatprep.subr.bf16.mxu0 %v197
    %337 = vmatpush1.bf16.msra.mxu0 %v196
    %338 = vmatprep.subr.bf16.mxu0 %v194
    %339 = vmatpush1.bf16.msra.mxu0 %v193
    %340 = vmatprep.subr.bf16.mxu0 %v191
    %341 = vmatpush1.bf16.msra.mxu0 %v190
    %342 = vmatprep.subr.bf16.mxu0 %v188
    %343 = vmatpush1.bf16.msra.mxu0 %v187
    %344 = vmatprep.subr.bf16.mxu0 %v185
    %345 = vmatpush1.bf16.msra.mxu0 %v184
    %346 = vmatprep.subr.bf16.mxu0 %v182
    %347 = vmatpush1.bf16.msra.mxu0 %v181
    %348 = vmatprep.subr.bf16.mxu0 %v179
    %349 = vmatpush1.bf16.msra.mxu0 %v178
    %350 = vmatprep.subr.bf16.mxu0 0
    %351 = vmatpush2.bf16.msra.mxu0 0
    %352 = vmatprep.subr.bf16.mxu0 0
    %353 = vmatpush2.bf16.msra.mxu0 0
    %354 = vmatprep.subr.bf16.mxu0 0
    %355 = vmatpush2.bf16.msra.mxu0 0
    %356 = vmatprep.subr.bf16.mxu0 0
    %357 = vmatpush2.bf16.msra.mxu0 0
    %358 = vmatprep.subr.bf16.mxu0 0
    %359 = vmatpush2.bf16.msra.mxu0 0
    %360 = vmatprep.subr.bf16.mxu0 0
    %361 = vmatpush2.bf16.msra.mxu0 0
    %362 = vmatprep.subr.bf16.mxu0 0
    %363 = vmatpush2.bf16.msra.mxu0 0
    %364 = vmatprep.subr.bf16.mxu0 0
    %365 = vmatpush2.bf16.msra.mxu0 0
    %366 = vmatprep.mubr.bf16.mxu0 0
    %367 = vmatmul.mubr.bf16.gmra.mxu0 %v333
    %v368 = vpop.f32.mrf.mxu0
    %v369 = vadd.f32 0.0, %v368
    %v370 = vpop.f32.mrf.mxu0
    %v371 = vadd.f32 0.0, %v370
    %v372 = vpop.f32.mrf.mxu0
    %v373 = vpop.f32.mrf.mxu0
    %374 = vdwg.mxu0
    %375 = vmatprep.subr.bf16.mxu0 0
    %376 = vmatpush1.bf16.msra.mxu0 %v201
    %377 = vmatprep.subr.bf16.mxu0 0
    %378 = vmatpush1.bf16.msra.mxu0 %v198
    %379 = vmatprep.subr.bf16.mxu0 0
    %380 = vmatpush1.bf16.msra.mxu0 %v195
    %381 = vmatprep.subr.bf16.mxu0 0
    %382 = vmatpush1.bf16.msra.mxu0 %v192
    %383 = vmatprep.subr.bf16.mxu0 0
    %384 = vmatpush1.bf16.msra.mxu0 %v189
    %385 = vmatprep.subr.bf16.mxu0 0
    %386 = vmatpush1.bf16.msra.mxu0 %v186
    %387 = vmatprep.subr.bf16.mxu0 0
    %388 = vmatpush1.bf16.msra.mxu0 %v183
    %389 = vmatprep.subr.bf16.mxu0 0
    %390 = vmatpush1.bf16.msra.mxu0 %v180
    %391 = vmatprep.subr.bf16.mxu0 0
    %392 = vmatpush2.bf16.msra.mxu0 0
    %393 = vmatprep.subr.bf16.mxu0 0
    %394 = vmatpush2.bf16.msra.mxu0 0
    %395 = vmatprep.subr.bf16.mxu0 0
    %396 = vmatpush2.bf16.msra.mxu0 0
    %397 = vmatprep.subr.bf16.mxu0 0
    %398 = vmatpush2.bf16.msra.mxu0 0
    %399 = vmatprep.subr.bf16.mxu0 0
    %400 = vmatpush2.bf16.msra.mxu0 0
    %401 = vmatprep.subr.bf16.mxu0 0
    %402 = vmatpush2.bf16.msra.mxu0 0
    %403 = vmatprep.subr.bf16.mxu0 0
    %404 = vmatpush2.bf16.msra.mxu0 0
    %405 = vmatprep.subr.bf16.mxu0 0
    %406 = vmatpush2.bf16.msra.mxu0 0
    %407 = vmatprep.mubr.bf16.mxu0 0
    %408 = vmatmul.mubr.bf16.gmra.mxu0 %v333
    %v409 = vpop.f32.mrf.mxu0
    %v410 = vadd.f32 0.0, %v409
    %v411 = vpop.f32.mrf.mxu0
    %v412 = vpop.f32.mrf.mxu0
    %v413 = vpop.f32.mrf.mxu0
    %414 = vdwg.mxu0
    %v415 = vadd.f32 %v330, %v369
    %v416 = vadd.f32 %v331, %v371
    %v417 = vadd.f32 %v332, %v410
    %v418 = vxor.u32 %v415, 2147483648
    %v419 = vmul.f32 %v418, 1.442695
    %v420 = vpow.pop %v419
    %v421 = vadd.f32 %v420, 1.0
    %v422 = vrcp.pop %v421
    %v423 = vmul.f32 1.0, %v422
    %v424 = vmul.f32 %v423, %v416
    %v425 = vtanh.pop %v424
    %v426 = vadd.f32 %v417, -1.0
    %v427 = vxor.u32 %v426, 2147483648
    %v428 = vmul.f32 %v427, 1.442695
    %v429 = vpow.pop %v428
    %v430 = vadd.f32 %v429, 1.0
    %v431 = vrcp.pop %v430
    %v432 = vmul.f32 1.0, %v431
    %v433 = vsub.f32 %v425, %v327
    %v434 = vmul.f32 %v432, %v433
    %v435 = vadd.f32 %v327, %v434
    %s436 = scalar_lea.vmem [#allocation9], 8
    %437 = vst [vmem:[%s436] sm:$0xff] %v435
    %s438 = scalar_lea.vmem [#allocation6], 48
    %v439 = vld [vmem:[%s438] sm:$0xff]
    %v440 = vld [vmem:[%s438 + $0x8] sm:$0xff]
    %v441 = vld [vmem:[%s438 + $0x10] sm:$0xff]
    %v442 = vpack.c.bf16 %v435, %v435
    %443 = vmatprep.subr.bf16.mxu0 %v200
    %444 = vmatpush1.bf16.msra.mxu0 %v199
    %445 = vmatprep.subr.bf16.mxu0 %v197
    %446 = vmatpush1.bf16.msra.mxu0 %v196
    %447 = vmatprep.subr.bf16.mxu0 %v194
    %448 = vmatpush1.bf16.msra.mxu0 %v193
    %449 = vmatprep.subr.bf16.mxu0 %v191
    %450 = vmatpush1.bf16.msra.mxu0 %v190
    %451 = vmatprep.subr.bf16.mxu0 %v188
    %452 = vmatpush1.bf16.msra.mxu0 %v187
    %453 = vmatprep.subr.bf16.mxu0 %v185
    %454 = vmatpush1.bf16.msra.mxu0 %v184
    %455 = vmatprep.subr.bf16.mxu0 %v182
    %456 = vmatpush1.bf16.msra.mxu0 %v181
    %457 = vmatprep.subr.bf16.mxu0 %v179
    %458 = vmatpush1.bf16.msra.mxu0 %v178
    %459 = vmatprep.subr.bf16.mxu0 0
    %460 = vmatpush2.bf16.msra.mxu0 0
    %461 = vmatprep.subr.bf16.mxu0 0
    %462 = vmatpush2.bf16.msra.mxu0 0
    %463 = vmatprep.subr.bf16.mxu0 0
    %464 = vmatpush2.bf16.msra.mxu0 0
    %465 = vmatprep.subr.bf16.mxu0 0
    %466 = vmatpush2.bf16.msra.mxu0 0
    %467 = vmatprep.subr.bf16.mxu0 0
    %468 = vmatpush2.bf16.msra.mxu0 0
    %469 = vmatprep.subr.bf16.mxu0 0
    %470 = vmatpush2.bf16.msra.mxu0 0
    %471 = vmatprep.subr.bf16.mxu0 0
    %472 = vmatpush2.bf16.msra.mxu0 0
    %473 = vmatprep.subr.bf16.mxu0 0
    %474 = vmatpush2.bf16.msra.mxu0 0
    %475 = vmatprep.mubr.bf16.mxu0 0
    %476 = vmatmul.mubr.bf16.gmra.mxu0 %v442
    %v477 = vpop.f32.mrf.mxu0
    %v478 = vadd.f32 0.0, %v477
    %v479 = vpop.f32.mrf.mxu0
    %v480 = vadd.f32 0.0, %v479
    %v481 = vpop.f32.mrf.mxu0
    %v482 = vpop.f32.mrf.mxu0
    %483 = vdwg.mxu0
    %484 = vmatprep.subr.bf16.mxu0 0
    %485 = vmatpush1.bf16.msra.mxu0 %v201
    %486 = vmatprep.subr.bf16.mxu0 0
    %487 = vmatpush1.bf16.msra.mxu0 %v198
    %488 = vmatprep.subr.bf16.mxu0 0
    %489 = vmatpush1.bf16.msra.mxu0 %v195
    %490 = vmatprep.subr.bf16.mxu0 0
    %491 = vmatpush1.bf16.msra.mxu0 %v192
    %492 = vmatprep.subr.bf16.mxu0 0
    %493 = vmatpush1.bf16.msra.mxu0 %v189
    %494 = vmatprep.subr.bf16.mxu0 0
    %495 = vmatpush1.bf16.msra.mxu0 %v186
    %496 = vmatprep.subr.bf16.mxu0 0
    %497 = vmatpush1.bf16.msra.mxu0 %v183
    %498 = vmatprep.subr.bf16.mxu0 0
    %499 = vmatpush1.bf16.msra.mxu0 %v180
    %500 = vmatprep.subr.bf16.mxu0 0
    %501 = vmatpush2.bf16.msra.mxu0 0
    %502 = vmatprep.subr.bf16.mxu0 0
    %503 = vmatpush2.bf16.msra.mxu0 0
    %504 = vmatprep.subr.bf16.mxu0 0
    %505 = vmatpush2.bf16.msra.mxu0 0
    %506 = vmatprep.subr.bf16.mxu0 0
    %507 = vmatpush2.bf16.msra.mxu0 0
    %508 = vmatprep.subr.bf16.mxu0 0
    %509 = vmatpush2.bf16.msra.mxu0 0
    %510 = vmatprep.subr.bf16.mxu0 0
    %511 = vmatpush2.bf16.msra.mxu0 0
    %512 = vmatprep.subr.bf16.mxu0 0
    %513 = vmatpush2.bf16.msra.mxu0 0
    %514 = vmatprep.subr.bf16.mxu0 0
    %515 = vmatpush2.bf16.msra.mxu0 0
    %516 = vmatprep.mubr.bf16.mxu0 0
    %517 = vmatmul.mubr.bf16.gmra.mxu0 %v442
    %v518 = vpop.f32.mrf.mxu0
    %v519 = vadd.f32 0.0, %v518
    %v520 = vpop.f32.mrf.mxu0
    %v521 = vpop.f32.mrf.mxu0
    %v522 = vpop.f32.mrf.mxu0
    %523 = vdwg.mxu0
    %v524 = vadd.f32 %v439, %v478
    %v525 = vadd.f32 %v440, %v480
    %v526 = vadd.f32 %v441, %v519
    %v527 = vxor.u32 %v524, 2147483648
    %v528 = vmul.f32 %v527, 1.442695
    %v529 = vpow.pop %v528
    %v530 = vadd.f32 %v529, 1.0
    %v531 = vrcp.pop %v530
    %v532 = vmul.f32 1.0, %v531
    %v533 = vmul.f32 %v532, %v525
    %v534 = vtanh.pop %v533
    %v535 = vadd.f32 %v526, -1.0
    %v536 = vxor.u32 %v535, 2147483648
    %v537 = vmul.f32 %v536, 1.442695
    %v538 = vpow.pop %v537
    %v539 = vadd.f32 %v538, 1.0
    %v540 = vrcp.pop %v539
    %v541 = vmul.f32 1.0, %v540
    %v542 = vsub.f32 %v534, %v435
    %v543 = vmul.f32 %v541, %v542
    %v544 = vadd.f32 %v435, %v543
    %s545 = scalar_lea.vmem [#allocation9], 16
    %546 = vst [vmem:[%s545] sm:$0xff] %v544
    %s547 = scalar_lea.vmem [#allocation6], 72
    %v548 = vld [vmem:[%s547] sm:$0xff]
    %v549 = vld [vmem:[%s547 + $0x8] sm:$0xff]
    %v550 = vld [vmem:[%s547 + $0x10] sm:$0xff]
    %v551 = vpack.c.bf16 %v544, %v544
    %552 = vmatprep.subr.bf16.mxu0 %v200
    %553 = vmatpush1.bf16.msra.mxu0 %v199
    %554 = vmatprep.subr.bf16.mxu0 %v197
    %555 = vmatpush1.bf16.msra.mxu0 %v196
    %556 = vmatprep.subr.bf16.mxu0 %v194
    %557 = vmatpush1.bf16.msra.mxu0 %v193
    %558 = vmatprep.subr.bf16.mxu0 %v191
    %559 = vmatpush1.bf16.msra.mxu0 %v190
    %560 = vmatprep.subr.bf16.mxu0 %v188
    %561 = vmatpush1.bf16.msra.mxu0 %v187
    %562 = vmatprep.subr.bf16.mxu0 %v185
    %563 = vmatpush1.bf16.msra.mxu0 %v184
    %564 = vmatprep.subr.bf16.mxu0 %v182
    %565 = vmatpush1.bf16.msra.mxu0 %v181
    %566 = vmatprep.subr.bf16.mxu0 %v179
    %567 = vmatpush1.bf16.msra.mxu0 %v178
    %568 = vmatprep.subr.bf16.mxu0 0
    %569 = vmatpush2.bf16.msra.mxu0 0
    %570 = vmatprep.subr.bf16.mxu0 0
    %571 = vmatpush2.bf16.msra.mxu0 0
    %572 = vmatprep.subr.bf16.mxu0 0
    %573 = vmatpush2.bf16.msra.mxu0 0
    %574 = vmatprep.subr.bf16.mxu0 0
    %575 = vmatpush2.bf16.msra.mxu0 0
    %576 = vmatprep.subr.bf16.mxu0 0
    %577 = vmatpush2.bf16.msra.mxu0 0
    %578 = vmatprep.subr.bf16.mxu0 0
    %579 = vmatpush2.bf16.msra.mxu0 0
    %580 = vmatprep.subr.bf16.mxu0 0
    %581 = vmatpush2.bf16.msra.mxu0 0
    %582 = vmatprep.subr.bf16.mxu0 0
    %583 = vmatpush2.bf16.msra.mxu0 0
    %584 = vmatprep.mubr.bf16.mxu0 0
    %585 = vmatmul.mubr.bf16.gmra.mxu0 %v551
    %v586 = vpop.f32.mrf.mxu0
    %v587 = vadd.f32 0.0, %v586
    %v588 = vpop.f32.mrf.mxu0
    %v589 = vadd.f32 0.0, %v588
    %v590 = vpop.f32.mrf.mxu0
    %v591 = vpop.f32.mrf.mxu0
    %592 = vdwg.mxu0
    %593 = vmatprep.subr.bf16.mxu0 0
    %594 = vmatpush1.bf16.msra.mxu0 %v201
    %595 = vmatprep.subr.bf16.mxu0 0
    %596 = vmatpush1.bf16.msra.mxu0 %v198
    %597 = vmatprep.subr.bf16.mxu0 0
    %598 = vmatpush1.bf16.msra.mxu0 %v195
    %599 = vmatprep.subr.bf16.mxu0 0
    %600 = vmatpush1.bf16.msra.mxu0 %v192
    %601 = vmatprep.subr.bf16.mxu0 0
    %602 = vmatpush1.bf16.msra.mxu0 %v189
    %603 = vmatprep.subr.bf16.mxu0 0
    %604 = vmatpush1.bf16.msra.mxu0 %v186
    %605 = vmatprep.subr.bf16.mxu0 0
    %606 = vmatpush1.bf16.msra.mxu0 %v183
    %607 = vmatprep.subr.bf16.mxu0 0
    %608 = vmatpush1.bf16.msra.mxu0 %v180
    %609 = vmatprep.subr.bf16.mxu0 0
    %610 = vmatpush2.bf16.msra.mxu0 0
    %611 = vmatprep.subr.bf16.mxu0 0
    %612 = vmatpush2.bf16.msra.mxu0 0
    %613 = vmatprep.subr.bf16.mxu0 0
    %614 = vmatpush2.bf16.msra.mxu0 0
    %615 = vmatprep.subr.bf16.mxu0 0
    %616 = vmatpush2.bf16.msra.mxu0 0
    %617 = vmatprep.subr.bf16.mxu0 0
    %618 = vmatpush2.bf16.msra.mxu0 0
    %619 = vmatprep.subr.bf16.mxu0 0
    %620 = vmatpush2.bf16.msra.mxu0 0
    %621 = vmatprep.subr.bf16.mxu0 0
    %622 = vmatpush2.bf16.msra.mxu0 0
    %623 = vmatprep.subr.bf16.mxu0 0
    %624 = vmatpush2.bf16.msra.mxu0 0
    %625 = vmatprep.mubr.bf16.mxu0 0
    %626 = vmatmul.mubr.bf16.gmra.mxu0 %v551
    %v627 = vpop.f32.mrf.mxu0
    %v628 = vadd.f32 0.0, %v627
    %v629 = vpop.f32.mrf.mxu0
    %v630 = vpop.f32.mrf.mxu0
    %v631 = vpop.f32.mrf.mxu0
    %632 = vdwg.mxu0
    %v633 = vadd.f32 %v548, %v587
    %v634 = vadd.f32 %v549, %v589
    %v635 = vadd.f32 %v550, %v628
    %v636 = vxor.u32 %v633, 2147483648
    %v637 = vmul.f32 %v636, 1.442695
    %v638 = vpow.pop %v637
    %v639 = vadd.f32 %v638, 1.0
    %v640 = vrcp.pop %v639
    %v641 = vmul.f32 1.0, %v640
    %v642 = vmul.f32 %v641, %v634
    %v643 = vtanh.pop %v642
    %v644 = vadd.f32 %v635, -1.0
    %v645 = vxor.u32 %v644, 2147483648
    %v646 = vmul.f32 %v645, 1.442695
    %v647 = vpow.pop %v646
    %v648 = vadd.f32 %v647, 1.0
    %v649 = vrcp.pop %v648
    %v650 = vmul.f32 1.0, %v649
    %v651 = vsub.f32 %v643, %v544
    %v652 = vmul.f32 %v650, %v651
    %v653 = vadd.f32 %v544, %v652
    %s654 = scalar_lea.vmem [#allocation9], 24
    %655 = vst [vmem:[%s654] sm:$0xff] %v653
    %s656 = scalar_lea.vmem [#allocation6], 96
    %v657 = vld [vmem:[%s656] sm:$0xff]
    %v658 = vld [vmem:[%s656 + $0x8] sm:$0xff]
    %v659 = vld [vmem:[%s656 + $0x10] sm:$0xff]
    %v660 = vpack.c.bf16 %v653, %v653
    %661 = vmatprep.subr.bf16.mxu0 %v200
    %662 = vmatpush1.bf16.msra.mxu0 %v199
    %663 = vmatprep.subr.bf16.mxu0 %v197
    %664 = vmatpush1.bf16.msra.mxu0 %v196
    %665 = vmatprep.subr.bf16.mxu0 %v194
    %666 = vmatpush1.bf16.msra.mxu0 %v193
    %667 = vmatprep.subr.bf16.mxu0 %v191
    %668 = vmatpush1.bf16.msra.mxu0 %v190
    %669 = vmatprep.subr.bf16.mxu0 %v188
    %670 = vmatpush1.bf16.msra.mxu0 %v187
    %671 = vmatprep.subr.bf16.mxu0 %v185
    %672 = vmatpush1.bf16.msra.mxu0 %v184
    %673 = vmatprep.subr.bf16.mxu0 %v182
    %674 = vmatpush1.bf16.msra.mxu0 %v181
    %675 = vmatprep.subr.bf16.mxu0 %v179
    %676 = vmatpush1.bf16.msra.mxu0 %v178
    %677 = vmatprep.subr.bf16.mxu0 0
    %678 = vmatpush2.bf16.msra.mxu0 0
    %679 = vmatprep.subr.bf16.mxu0 0
    %680 = vmatpush2.bf16.msra.mxu0 0
    %681 = vmatprep.subr.bf16.mxu0 0
    %682 = vmatpush2.bf16.msra.mxu0 0
    %683 = vmatprep.subr.bf16.mxu0 0
    %684 = vmatpush2.bf16.msra.mxu0 0
    %685 = vmatprep.subr.bf16.mxu0 0
    %686 = vmatpush2.bf16.msra.mxu0 0
    %687 = vmatprep.subr.bf16.mxu0 0
    %688 = vmatpush2.bf16.msra.mxu0 0
    %689 = vmatprep.subr.bf16.mxu0 0
    %690 = vmatpush2.bf16.msra.mxu0 0
    %691 = vmatprep.subr.bf16.mxu0 0
    %692 = vmatpush2.bf16.msra.mxu0 0
    %693 = vmatprep.mubr.bf16.mxu0 0
    %694 = vmatmul.mubr.bf16.gmra.mxu0 %v660
    %v695 = vpop.f32.mrf.mxu0
    %v696 = vadd.f32 0.0, %v695
    %v697 = vpop.f32.mrf.mxu0
    %v698 = vadd.f32 0.0, %v697
    %v699 = vpop.f32.mrf.mxu0
    %v700 = vpop.f32.mrf.mxu0
    %701 = vdwg.mxu0
    %702 = vmatprep.subr.bf16.mxu0 0
    %703 = vmatpush1.bf16.msra.mxu0 %v201
    %704 = vmatprep.subr.bf16.mxu0 0
    %705 = vmatpush1.bf16.msra.mxu0 %v198
    %706 = vmatprep.subr.bf16.mxu0 0
    %707 = vmatpush1.bf16.msra.mxu0 %v195
    %708 = vmatprep.subr.bf16.mxu0 0
    %709 = vmatpush1.bf16.msra.mxu0 %v192
    %710 = vmatprep.subr.bf16.mxu0 0
    %711 = vmatpush1.bf16.msra.mxu0 %v189
    %712 = vmatprep.subr.bf16.mxu0 0
    %713 = vmatpush1.bf16.msra.mxu0 %v186
    %714 = vmatprep.subr.bf16.mxu0 0
    %715 = vmatpush1.bf16.msra.mxu0 %v183
    %716 = vmatprep.subr.bf16.mxu0 0
    %717 = vmatpush1.bf16.msra.mxu0 %v180
    %718 = vmatprep.subr.bf16.mxu0 0
    %719 = vmatpush2.bf16.msra.mxu0 0
    %720 = vmatprep.subr.bf16.mxu0 0
    %721 = vmatpush2.bf16.msra.mxu0 0
    %722 = vmatprep.subr.bf16.mxu0 0
    %723 = vmatpush2.bf16.msra.mxu0 0
    %724 = vmatprep.subr.bf16.mxu0 0
    %725 = vmatpush2.bf16.msra.mxu0 0
    %726 = vmatprep.subr.bf16.mxu0 0
    %727 = vmatpush2.bf16.msra.mxu0 0
    %728 = vmatprep.subr.bf16.mxu0 0
    %729 = vmatpush2.bf16.msra.mxu0 0
    %730 = vmatprep.subr.bf16.mxu0 0
    %731 = vmatpush2.bf16.msra.mxu0 0
    %732 = vmatprep.subr.bf16.mxu0 0
    %733 = vmatpush2.bf16.msra.mxu0 0
    %734 = vmatprep.mubr.bf16.mxu0 0
    %735 = vmatmul.mubr.bf16.gmra.mxu0 %v660
    %v736 = vpop.f32.mrf.mxu0
    %v737 = vadd.f32 0.0, %v736
    %v738 = vpop.f32.mrf.mxu0
    %v739 = vpop.f32.mrf.mxu0
    %v740 = vpop.f32.mrf.mxu0
    %741 = vdwg.mxu0
    %v742 = vadd.f32 %v657, %v696
    %v743 = vadd.f32 %v658, %v698
    %v744 = vadd.f32 %v659, %v737
    %v745 = vxor.u32 %v742, 2147483648
    %v746 = vmul.f32 %v745, 1.442695
    %v747 = vpow.pop %v746
    %v748 = vadd.f32 %v747, 1.0
    %v749 = vrcp.pop %v748
    %v750 = vmul.f32 1.0, %v749
    %v751 = vmul.f32 %v750, %v743
    %v752 = vtanh.pop %v751
    %v753 = vadd.f32 %v744, -1.0
    %v754 = vxor.u32 %v753, 2147483648
    %v755 = vmul.f32 %v754, 1.442695
    %v756 = vpow.pop %v755
    %v757 = vadd.f32 %v756, 1.0
    %v758 = vrcp.pop %v757
    %v759 = vmul.f32 1.0, %v758
    %v760 = vsub.f32 %v752, %v653
    %v761 = vmul.f32 %v759, %v760
    %v762 = vadd.f32 %v653, %v761
    %s763 = scalar_lea.vmem [#allocation9], 32
    %764 = vst [vmem:[%s763] sm:$0xff] %v762
    %s765 = scalar_lea.vmem [#allocation6], 120
    %v766 = vld [vmem:[%s765] sm:$0xff]
    %v767 = vld [vmem:[%s765 + $0x8] sm:$0xff]
    %v768 = vld [vmem:[%s765 + $0x10] sm:$0xff]
    %v769 = vpack.c.bf16 %v762, %v762
    %770 = vmatprep.subr.bf16.mxu0 %v200
    %771 = vmatpush1.bf16.msra.mxu0 %v199
    %772 = vmatprep.subr.bf16.mxu0 %v197
    %773 = vmatpush1.bf16.msra.mxu0 %v196
    %774 = vmatprep.subr.bf16.mxu0 %v194
    %775 = vmatpush1.bf16.msra.mxu0 %v193
    %776 = vmatprep.subr.bf16.mxu0 %v191
    %777 = vmatpush1.bf16.msra.mxu0 %v190
    %778 = vmatprep.subr.bf16.mxu0 %v188
    %779 = vmatpush1.bf16.msra.mxu0 %v187
    %780 = vmatprep.subr.bf16.mxu0 %v185
    %781 = vmatpush1.bf16.msra.mxu0 %v184
    %782 = vmatprep.subr.bf16.mxu0 %v182
    %783 = vmatpush1.bf16.msra.mxu0 %v181
    %784 = vmatprep.subr.bf16.mxu0 %v179
    %785 = vmatpush1.bf16.msra.mxu0 %v178
    %786 = vmatprep.subr.bf16.mxu0 0
    %787 = vmatpush2.bf16.msra.mxu0 0
    %788 = vmatprep.subr.bf16.mxu0 0
    %789 = vmatpush2.bf16.msra.mxu0 0
    %790 = vmatprep.subr.bf16.mxu0 0
    %791 = vmatpush2.bf16.msra.mxu0 0
    %792 = vmatprep.subr.bf16.mxu0 0
    %793 = vmatpush2.bf16.msra.mxu0 0
    %794 = vmatprep.subr.bf16.mxu0 0
    %795 = vmatpush2.bf16.msra.mxu0 0
    %796 = vmatprep.subr.bf16.mxu0 0
    %797 = vmatpush2.bf16.msra.mxu0 0
    %798 = vmatprep.subr.bf16.mxu0 0
    %799 = vmatpush2.bf16.msra.mxu0 0
    %800 = vmatprep.subr.bf16.mxu0 0
    %801 = vmatpush2.bf16.msra.mxu0 0
    %802 = vmatprep.mubr.bf16.mxu0 0
    %803 = vmatmul.mubr.bf16.gmra.mxu0 %v769
    %v804 = vpop.f32.mrf.mxu0
    %v805 = vadd.f32 0.0, %v804
    %v806 = vpop.f32.mrf.mxu0
    %v807 = vadd.f32 0.0, %v806
    %v808 = vpop.f32.mrf.mxu0
    %v809 = vpop.f32.mrf.mxu0
    %810 = vdwg.mxu0
    %811 = vmatprep.subr.bf16.mxu0 0
    %812 = vmatpush1.bf16.msra.mxu0 %v201
    %813 = vmatprep.subr.bf16.mxu0 0
    %814 = vmatpush1.bf16.msra.mxu0 %v198
    %815 = vmatprep.subr.bf16.mxu0 0
    %816 = vmatpush1.bf16.msra.mxu0 %v195
    %817 = vmatprep.subr.bf16.mxu0 0
    %818 = vmatpush1.bf16.msra.mxu0 %v192
    %819 = vmatprep.subr.bf16.mxu0 0
    %820 = vmatpush1.bf16.msra.mxu0 %v189
    %821 = vmatprep.subr.bf16.mxu0 0
    %822 = vmatpush1.bf16.msra.mxu0 %v186
    %823 = vmatprep.subr.bf16.mxu0 0
    %824 = vmatpush1.bf16.msra.mxu0 %v183
    %825 = vmatprep.subr.bf16.mxu0 0
    %826 = vmatpush1.bf16.msra.mxu0 %v180
    %827 = vmatprep.subr.bf16.mxu0 0
    %828 = vmatpush2.bf16.msra.mxu0 0
    %829 = vmatprep.subr.bf16.mxu0 0
    %830 = vmatpush2.bf16.msra.mxu0 0
    %831 = vmatprep.subr.bf16.mxu0 0
    %832 = vmatpush2.bf16.msra.mxu0 0
    %833 = vmatprep.subr.bf16.mxu0 0
    %834 = vmatpush2.bf16.msra.mxu0 0
    %835 = vmatprep.subr.bf16.mxu0 0
    %836 = vmatpush2.bf16.msra.mxu0 0
    %837 = vmatprep.subr.bf16.mxu0 0
    %838 = vmatpush2.bf16.msra.mxu0 0
    %839 = vmatprep.subr.bf16.mxu0 0
    %840 = vmatpush2.bf16.msra.mxu0 0
    %841 = vmatprep.subr.bf16.mxu0 0
    %842 = vmatpush2.bf16.msra.mxu0 0
    %843 = vmatprep.mubr.bf16.mxu0 0
    %844 = vmatmul.mubr.bf16.gmra.mxu0 %v769
    %v845 = vpop.f32.mrf.mxu0
    %v846 = vadd.f32 0.0, %v845
    %v847 = vpop.f32.mrf.mxu0
    %v848 = vpop.f32.mrf.mxu0
    %v849 = vpop.f32.mrf.mxu0
    %850 = vdwg.mxu0
    %v851 = vadd.f32 %v766, %v805
    %v852 = vadd.f32 %v767, %v807
    %v853 = vadd.f32 %v768, %v846
    %v854 = vxor.u32 %v851, 2147483648
    %v855 = vmul.f32 %v854, 1.442695
    %v856 = vpow.pop %v855
    %v857 = vadd.f32 %v856, 1.0
    %v858 = vrcp.pop %v857
    %v859 = vmul.f32 1.0, %v858
    %v860 = vmul.f32 %v859, %v852
    %v861 = vtanh.pop %v860
    %v862 = vadd.f32 %v853, -1.0
    %v863 = vxor.u32 %v862, 2147483648
    %v864 = vmul.f32 %v863, 1.442695
    %v865 = vpow.pop %v864
    %v866 = vadd.f32 %v865, 1.0
    %v867 = vrcp.pop %v866
    %v868 = vmul.f32 1.0, %v867
    %v869 = vsub.f32 %v861, %v762
    %v870 = vmul.f32 %v868, %v869
    %v871 = vadd.f32 %v762, %v870
    %s872 = scalar_lea.vmem [#allocation9], 40
    %873 = vst [vmem:[%s872] sm:$0xff] %v871
    %s874 = scalar_lea.vmem [#allocation6], 144
    %v875 = vld [vmem:[%s874] sm:$0xff]
    %v876 = vld [vmem:[%s874 + $0x8] sm:$0xff]
    %v877 = vld [vmem:[%s874 + $0x10] sm:$0xff]
    %v878 = vpack.c.bf16 %v871, %v871
    %879 = vmatprep.subr.bf16.mxu0 %v200
    %880 = vmatpush1.bf16.msra.mxu0 %v199
    %881 = vmatprep.subr.bf16.mxu0 %v197
    %882 = vmatpush1.bf16.msra.mxu0 %v196
    %883 = vmatprep.subr.bf16.mxu0 %v194
    %884 = vmatpush1.bf16.msra.mxu0 %v193
    %885 = vmatprep.subr.bf16.mxu0 %v191
    %886 = vmatpush1.bf16.msra.mxu0 %v190
    %887 = vmatprep.subr.bf16.mxu0 %v188
    %888 = vmatpush1.bf16.msra.mxu0 %v187
    %889 = vmatprep.subr.bf16.mxu0 %v185
    %890 = vmatpush1.bf16.msra.mxu0 %v184
    %891 = vmatprep.subr.bf16.mxu0 %v182
    %892 = vmatpush1.bf16.msra.mxu0 %v181
    %893 = vmatprep.subr.bf16.mxu0 %v179
    %894 = vmatpush1.bf16.msra.mxu0 %v178
    %895 = vmatprep.subr.bf16.mxu0 0
    %896 = vmatpush2.bf16.msra.mxu0 0
    %897 = vmatprep.subr.bf16.mxu0 0
    %898 = vmatpush2.bf16.msra.mxu0 0
    %899 = vmatprep.subr.bf16.mxu0 0
    %900 = vmatpush2.bf16.msra.mxu0 0
    %901 = vmatprep.subr.bf16.mxu0 0
    %902 = vmatpush2.bf16.msra.mxu0 0
    %903 = vmatprep.subr.bf16.mxu0 0
    %904 = vmatpush2.bf16.msra.mxu0 0
    %905 = vmatprep.subr.bf16.mxu0 0
    %906 = vmatpush2.bf16.msra.mxu0 0
    %907 = vmatprep.subr.bf16.mxu0 0
    %908 = vmatpush2.bf16.msra.mxu0 0
    %909 = vmatprep.subr.bf16.mxu0 0
    %910 = vmatpush2.bf16.msra.mxu0 0
    %911 = vmatprep.mubr.bf16.mxu0 0
    %912 = vmatmul.mubr.bf16.gmra.mxu0 %v878
    %v913 = vpop.f32.mrf.mxu0
    %v914 = vadd.f32 0.0, %v913
    %v915 = vpop.f32.mrf.mxu0
    %v916 = vadd.f32 0.0, %v915
    %v917 = vpop.f32.mrf.mxu0
    %v918 = vpop.f32.mrf.mxu0
    %919 = vdwg.mxu0
    %920 = vmatprep.subr.bf16.mxu0 0
    %921 = vmatpush1.bf16.msra.mxu0 %v201
    %922 = vmatprep.subr.bf16.mxu0 0
    %923 = vmatpush1.bf16.msra.mxu0 %v198
    %924 = vmatprep.subr.bf16.mxu0 0
    %925 = vmatpush1.bf16.msra.mxu0 %v195
    %926 = vmatprep.subr.bf16.mxu0 0
    %927 = vmatpush1.bf16.msra.mxu0 %v192
    %928 = vmatprep.subr.bf16.mxu0 0
    %929 = vmatpush1.bf16.msra.mxu0 %v189
    %930 = vmatprep.subr.bf16.mxu0 0
    %931 = vmatpush1.bf16.msra.mxu0 %v186
    %932 = vmatprep.subr.bf16.mxu0 0
    %933 = vmatpush1.bf16.msra.mxu0 %v183
    %934 = vmatprep.subr.bf16.mxu0 0
    %935 = vmatpush1.bf16.msra.mxu0 %v180
    %936 = vmatprep.subr.bf16.mxu0 0
    %937 = vmatpush2.bf16.msra.mxu0 0
    %938 = vmatprep.subr.bf16.mxu0 0
    %939 = vmatpush2.bf16.msra.mxu0 0
    %940 = vmatprep.subr.bf16.mxu0 0
    %941 = vmatpush2.bf16.msra.mxu0 0
    %942 = vmatprep.subr.bf16.mxu0 0
    %943 = vmatpush2.bf16.msra.mxu0 0
    %944 = vmatprep.subr.bf16.mxu0 0
    %945 = vmatpush2.bf16.msra.mxu0 0
    %946 = vmatprep.subr.bf16.mxu0 0
    %947 = vmatpush2.bf16.msra.mxu0 0
    %948 = vmatprep.subr.bf16.mxu0 0
    %949 = vmatpush2.bf16.msra.mxu0 0
    %950 = vmatprep.subr.bf16.mxu0 0
    %951 = vmatpush2.bf16.msra.mxu0 0
    %952 = vmatprep.mubr.bf16.mxu0 0
    %953 = vmatmul.mubr.bf16.gmra.mxu0 %v878
    %v954 = vpop.f32.mrf.mxu0
    %v955 = vadd.f32 0.0, %v954
    %v956 = vpop.f32.mrf.mxu0
    %v957 = vpop.f32.mrf.mxu0
    %v958 = vpop.f32.mrf.mxu0
    %959 = vdwg.mxu0
    %v960 = vadd.f32 %v875, %v914
    %v961 = vadd.f32 %v876, %v916
    %v962 = vadd.f32 %v877, %v955
    %v963 = vxor.u32 %v960, 2147483648
    %v964 = vmul.f32 %v963, 1.442695
    %v965 = vpow.pop %v964
    %v966 = vadd.f32 %v965, 1.0
    %v967 = vrcp.pop %v966
    %v968 = vmul.f32 1.0, %v967
    %v969 = vmul.f32 %v968, %v961
    %v970 = vtanh.pop %v969
    %v971 = vadd.f32 %v962, -1.0
    %v972 = vxor.u32 %v971, 2147483648
    %v973 = vmul.f32 %v972, 1.442695
    %v974 = vpow.pop %v973
    %v975 = vadd.f32 %v974, 1.0
    %v976 = vrcp.pop %v975
    %v977 = vmul.f32 1.0, %v976
    %v978 = vsub.f32 %v970, %v871
    %v979 = vmul.f32 %v977, %v978
    %v980 = vadd.f32 %v871, %v979
    %s981 = scalar_lea.vmem [#allocation9], 48
    %982 = vst [vmem:[%s981] sm:$0xff] %v980
    %s983 = scalar_lea.vmem [#allocation6], 168
    %v984 = vld [vmem:[%s983] sm:$0xff]
    %v985 = vld [vmem:[%s983 + $0x8] sm:$0xff]
    %v986 = vld [vmem:[%s983 + $0x10] sm:$0xff]
    %v987 = vpack.c.bf16 %v980, %v980
    %988 = vmatprep.subr.bf16.mxu0 %v200
    %989 = vmatpush1.bf16.msra.mxu0 %v199
    %990 = vmatprep.subr.bf16.mxu0 %v197
    %991 = vmatpush1.bf16.msra.mxu0 %v196
    %992 = vmatprep.subr.bf16.mxu0 %v194
    %993 = vmatpush1.bf16.msra.mxu0 %v193
    %994 = vmatprep.subr.bf16.mxu0 %v191
    %995 = vmatpush1.bf16.msra.mxu0 %v190
    %996 = vmatprep.subr.bf16.mxu0 %v188
    %997 = vmatpush1.bf16.msra.mxu0 %v187
    %998 = vmatprep.subr.bf16.mxu0 %v185
    %999 = vmatpush1.bf16.msra.mxu0 %v184
    %1000 = vmatprep.subr.bf16.mxu0 %v182
    %1001 = vmatpush1.bf16.msra.mxu0 %v181
    %1002 = vmatprep.subr.bf16.mxu0 %v179
    %1003 = vmatpush1.bf16.msra.mxu0 %v178
    %1004 = vmatprep.subr.bf16.mxu0 0
    %1005 = vmatpush2.bf16.msra.mxu0 0
    %1006 = vmatprep.subr.bf16.mxu0 0
    %1007 = vmatpush2.bf16.msra.mxu0 0
    %1008 = vmatprep.subr.bf16.mxu0 0
    %1009 = vmatpush2.bf16.msra.mxu0 0
    %1010 = vmatprep.subr.bf16.mxu0 0
    %1011 = vmatpush2.bf16.msra.mxu0 0
    %1012 = vmatprep.subr.bf16.mxu0 0
    %1013 = vmatpush2.bf16.msra.mxu0 0
    %1014 = vmatprep.subr.bf16.mxu0 0
    %1015 = vmatpush2.bf16.msra.mxu0 0
    %1016 = vmatprep.subr.bf16.mxu0 0
    %1017 = vmatpush2.bf16.msra.mxu0 0
    %1018 = vmatprep.subr.bf16.mxu0 0
    %1019 = vmatpush2.bf16.msra.mxu0 0
    %1020 = vmatprep.mubr.bf16.mxu0 0
    %1021 = vmatmul.mubr.bf16.gmra.mxu0 %v987
    %v1022 = vpop.f32.mrf.mxu0
    %v1023 = vadd.f32 0.0, %v1022
    %v1024 = vpop.f32.mrf.mxu0
    %v1025 = vadd.f32 0.0, %v1024
    %v1026 = vpop.f32.mrf.mxu0
    %v1027 = vpop.f32.mrf.mxu0
    %1028 = vdwg.mxu0
    %1029 = vmatprep.subr.bf16.mxu0 0
    %1030 = vmatpush1.bf16.msra.mxu0 %v201
    %1031 = vmatprep.subr.bf16.mxu0 0
    %1032 = vmatpush1.bf16.msra.mxu0 %v198
    %1033 = vmatprep.subr.bf16.mxu0 0
    %1034 = vmatpush1.bf16.msra.mxu0 %v195
    %1035 = vmatprep.subr.bf16.mxu0 0
    %1036 = vmatpush1.bf16.msra.mxu0 %v192
    %1037 = vmatprep.subr.bf16.mxu0 0
    %1038 = vmatpush1.bf16.msra.mxu0 %v189
    %1039 = vmatprep.subr.bf16.mxu0 0
    %1040 = vmatpush1.bf16.msra.mxu0 %v186
    %1041 = vmatprep.subr.bf16.mxu0 0
    %1042 = vmatpush1.bf16.msra.mxu0 %v183
    %1043 = vmatprep.subr.bf16.mxu0 0
    %1044 = vmatpush1.bf16.msra.mxu0 %v180
    %1045 = vmatprep.subr.bf16.mxu0 0
    %1046 = vmatpush2.bf16.msra.mxu0 0
    %1047 = vmatprep.subr.bf16.mxu0 0
    %1048 = vmatpush2.bf16.msra.mxu0 0
    %1049 = vmatprep.subr.bf16.mxu0 0
    %1050 = vmatpush2.bf16.msra.mxu0 0
    %1051 = vmatprep.subr.bf16.mxu0 0
    %1052 = vmatpush2.bf16.msra.mxu0 0
    %1053 = vmatprep.subr.bf16.mxu0 0
    %1054 = vmatpush2.bf16.msra.mxu0 0
    %1055 = vmatprep.subr.bf16.mxu0 0
    %1056 = vmatpush2.bf16.msra.mxu0 0
    %1057 = vmatprep.subr.bf16.mxu0 0
    %1058 = vmatpush2.bf16.msra.mxu0 0
    %1059 = vmatprep.subr.bf16.mxu0 0
    %1060 = vmatpush2.bf16.msra.mxu0 0
    %1061 = vmatprep.mubr.bf16.mxu0 0
    %1062 = vmatmul.mubr.bf16.gmra.mxu0 %v987
    %v1063 = vpop.f32.mrf.mxu0
    %v1064 = vadd.f32 0.0, %v1063
    %v1065 = vpop.f32.mrf.mxu0
    %v1066 = vpop.f32.mrf.mxu0
    %v1067 = vpop.f32.mrf.mxu0
    %1068 = vdwg.mxu0
    %v1069 = vadd.f32 %v984, %v1023
    %v1070 = vadd.f32 %v985, %v1025
    %v1071 = vadd.f32 %v986, %v1064
    %v1072 = vxor.u32 %v1069, 2147483648
    %v1073 = vmul.f32 %v1072, 1.442695
    %v1074 = vpow.pop %v1073
    %v1075 = vadd.f32 %v1074, 1.0
    %v1076 = vrcp.pop %v1075
    %v1077 = vmul.f32 1.0, %v1076
    %v1078 = vmul.f32 %v1077, %v1070
    %v1079 = vtanh.pop %v1078
    %v1080 = vadd.f32 %v1071, -1.0
    %v1081 = vxor.u32 %v1080, 2147483648
    %v1082 = vmul.f32 %v1081, 1.442695
    %v1083 = vpow.pop %v1082
    %v1084 = vadd.f32 %v1083, 1.0
    %v1085 = vrcp.pop %v1084
    %v1086 = vmul.f32 1.0, %v1085
    %v1087 = vsub.f32 %v1079, %v980
    %v1088 = vmul.f32 %v1086, %v1087
    %v1089 = vadd.f32 %v980, %v1088
    %s1090 = scalar_lea.vmem [#allocation9], 56
    %1091 = vst [vmem:[%s1090] sm:$0xff] %v1089
    %1092 = vst [vmem:[#allocation2] sm:$0xff] %v1089
    // Predicated region
    $region30: #{tpu_custom_call.1} parent=1 // pred_check
      _
    $region31: #{tpu_custom_call.1} parent=1 // pred_check_branch
      %1094 = sbr.rel (0) target = $region33
    $region32: #{tpu_custom_call.1} parent=1 // pred_region
      %s1096 = ssub.s32 1024, 1024
      %1097 = vsyncadd [#allocation5], %s1096
      %s1098 = sshll.u32 [#allocation9], 4
      %s1099 = int_to_ptr.vmem [resolvable:$true] %s1098
      %1104 = dma.vmem_to_hbm [thread:$0]  %s1099, 1024, %s3, [#allocation5], 128, 128, 8
    $region33: #{tpu_custom_call.1} parent=1 // pred_fallthru
      _
    // Predicated region
    $region34: #{tpu_custom_call.1} parent=1 // pred_check
      _
    $region35: #{tpu_custom_call.1} parent=1 // pred_check_branch
      %1106 = sbr.rel (0) target = $region37
    $region36: #{tpu_custom_call.1} parent=1 // pred_region
      %1107 = dma.done [#allocation5], 1024
    $region37: #{tpu_custom_call.1} parent=1 // pred_fallthru
      _
    %1108 = vsyncpa [#allocation4], 1
    %1109 = vsyncpa [#allocation7], 1
    %1110 = vsyncpa [#allocation5], 1

// kernel: tpu_custom_call.1
$region0: #{tpu_custom_call.1}
  #allocation0 [shape = 'u32[]', space=smem, size = 0x4, offset = 0x4, fixed_abs, tag = 'smem constant byte address 0x4 - core index']
  #allocation1 [shape = 'u32[144,128]{1,0:T(1,128)}', space=vmem, size = 0x12000, scoped, tag = 'internal scratch']
  #allocation2 [shape = 'f32[8,128]{1,0:T(8,128)}', space=vmem, size = 0x1000, scoped, tag = 'scratch operand']
  %s0 = inlined_call_operand.hbm [shape: f32[8,128], index: 0, kind: input, shape index: {}]
  %s1 = inlined_call_operand.hbm [shape: f32[8,8,384], index: 1, kind: input, shape index: {}]
  %s2 = inlined_call_operand.hbm [shape: bf16[128,384], index: 2, kind: input, shape index: {}]
  %s3 = inlined_call_operand.hbm [shape: f32[8,8,128], index: 3, kind: output, shape index: {}]
  %s4 = sld [smem:[#allocation0]]
  $region38: #{tpu_custom_call.1} parent=0
    _
  %s6 = ssub.s32 1, %s4
  %s7 = scalar_select 0, %s6, %s4
  $region1: #{tpu_custom_call.1} parent=0
    #allocation3 [shape = 'u8[4096]{0}', space=vmem, size = 0x1000, scoped, tag = 'input window, operand 0, single buffered']
    #allocation4 [shape = 's32[1]{0}', space=sflag, size = 0x4, scoped, tag = 'scoped memory for tpu_custom_call.1']
    #allocation5 [shape = 's32[1]{0}', space=sflag, size = 0x4, scoped, tag = 'scoped memory for tpu_custom_call.1']
    #allocation6 [shape = 'u8[98304]{0}', space=vmem, size = 0x18000, scoped, tag = 'input window, operand 1, single buffered']
    #allocation7 [shape = 's32[1]{0}', space=sflag, size = 0x4, scoped, tag = 'scoped memory for tpu_custom_call.1']
    #allocation8 [shape = 'u8[98304]{0}', space=vmem, size = 0x18000, scoped, tag = 'input window, operand 2, single buffered']
    #allocation9 [shape = 'u8[32768]{0}', space=vmem, size = 0x8000, scoped, tag = 'output window, operand 0, single buffered']
    %8 = vsyncpa [#allocation4], 0
    %9 = vsyncpa [#allocation7], 0
    %10 = vsyncpa [#allocation5], 0
    // Predicated region
    $region2: #{tpu_custom_call.1} parent=1 // pred_check
      _
    $region3: #{tpu_custom_call.1} parent=1 // pred_check_branch
      %12 = sbr.rel (0) target = $region5
    $region4: #{tpu_custom_call.1} parent=1 // pred_region
      %s14 = ssub.s32 128, 128
      %15 = vsyncadd [#allocation4], %s14
      %s17 = sshll.u32 [#allocation3], 4
      %s18 = int_to_ptr.vmem [resolvable:$true] %s17
      %20 = dma.hbm_to_vmem [thread:$0]  %s0, 128, %s18, [#allocation4]
    $region5: #{tpu_custom_call.1} parent=1 // pred_fallthru
      _
    // Predicated region
    $region6: #{tpu_custom_call.1} parent=1 // pred_check
      _
    $region7: #{tpu_custom_call.1} parent=1 // pred_check_branch
      %22 = sbr.rel (0) target = $region9
    $region8: #{tpu_custom_call.1} parent=1 // pred_region
      %s24 = ssub.s32 3072, 3072
      %25 = vsyncadd [#allocation7], %s24
      %s26 = sshll.u32 [#allocation6], 4
      %s27 = int_to_ptr.vmem [resolvable:$true] %s26
      %32 = dma.hbm_to_vmem [thread:$0]  %s1, 3072, %s27, [#allocation7], 384, 384, 24
    $region9: #{tpu_custom_call.1} parent=1 // pred_fallthru
      _
    // Predicated region
    $region10: #{tpu_custom_call.1} parent=1 // pred_check
      _
    $region11: #{tpu_custom_call.1} parent=1 // pred_check_branch
      %34 = sbr.rel (0) target = $region13
    $region12: #{tpu_custom_call.1} parent=1 // pred_region
      %s36 = ssub.s32 3072, 3072
      %37 = vsyncadd [#allocation7], %s36
      %s38 = sshll.u32 [#allocation8], 4
      %s39 = int_to_ptr.vmem [resolvable:$true] %s38
      %44 = dma.hbm_to_vmem [thread:$0]  %s2, 3072, %s39, [#allocation7], 192, 192, 12
    $region13: #{tpu_custom_call.1} parent=1 // pred_fallthru
      _
    // Predicated region
    $region14: #{tpu_custom_call.1} parent=1 // pred_check
      _
    $region15: #{tpu_custom_call.1} parent=1 // pred_check_branch
      %46 = sbr.rel (0) target = $region17
    $region16: #{tpu_custom_call.1} parent=1 // pred_region
      %47 = dma.done [#allocation4], 128
    $region17: #{tpu_custom_call.1} parent=1 // pred_fallthru
      _
    // Predicated region
    $region18: #{tpu_custom_call.1} parent=1 // pred_check
      _
    $region19: #{tpu_custom_call.1} parent=1 // pred_check_branch
      %49 = sbr.rel (0) target = $region21
    $region20: #{tpu_custom_call.1} parent=1 // pred_region
      %50 = dma.done [#allocation7], 3072
    $region21: #{tpu_custom_call.1} parent=1 // pred_fallthru
      _
    // Predicated region
    $region22: #{tpu_custom_call.1} parent=1 // pred_check
      _
    $region23: #{tpu_custom_call.1} parent=1 // pred_check_branch
      %52 = sbr.rel (0) target = $region25
    $region24: #{tpu_custom_call.1} parent=1 // pred_region
      %53 = dma.done [#allocation7], 3072
    $region25: #{tpu_custom_call.1} parent=1 // pred_fallthru
      _
    %p55 = scmp.eq.s32.totalorder 0, 0
    // Predicated region
    $region26: #{tpu_custom_call.1} parent=1 // pred_check
      %p56 = pneg %p55
    $region27: #{tpu_custom_call.1} parent=1 // pred_check_branch
      %58 = sbr.rel (%p56) target = $region29
    $region28: #{tpu_custom_call.1} parent=1 // pred_region
      %v59 = vld [vmem:[#allocation3] sm:$0xff]
      %60 = vst [vmem:[#allocation2] sm:$0xff] %v59
    $region29: #{tpu_custom_call.1} parent=1 // pred_fallthru
      _
    %v61 = vld [vmem:[#allocation8] sm:$0xff]
    %v62 = vld [vmem:[#allocation8 + $0x8] sm:$0xf]
    %v63 = vld [vmem:[#allocation8 + $0xc] sm:$0xff]
    %v64 = vld [vmem:[#allocation8 + $0x14] sm:$0xf]
    %v65 = vld [vmem:[#allocation8 + $0x18] sm:$0xff]
    %v66 = vld [vmem:[#allocation8 + $0x20] sm:$0xf]
    %v67 = vld [vmem:[#allocation8 + $0x24] sm:$0xff]
    %v68 = vld [vmem:[#allocation8 + $0x2c] sm:$0xf]
    %v69 = vld [vmem:[#allocation8 + $0x30] sm:$0xff]
    %v70 = vld [vmem:[#allocation8 + $0x38] sm:$0xf]
    %v71 = vld [vmem:[#allocation8 + $0x3c] sm:$0xff]
    %v72 = vld [vmem:[#allocation8 + $0x44] sm:$0xf]
    %v73 = vld [vmem:[#allocation8 + $0x48] sm:$0xff]
    %v74 = vld [vmem:[#allocation8 + $0x50] sm:$0xf]
    %v75 = vld [vmem:[#allocation8 + $0x54] sm:$0xff]
    %v76 = vld [vmem:[#allocation8 + $0x5c] sm:$0xf]
    %v77 = vld [vmem:[#allocation8 + $0x60] sm:$0xff]
    %v78 = vld [vmem:[#allocation8 + $0x68] sm:$0xf]
    %v79 = vld [vmem:[#allocation8 + $0x6c] sm:$0xff]
    %v80 = vld [vmem:[#allocation8 + $0x74] sm:$0xf]
    %v81 = vld [vmem:[#allocation8 + $0x78] sm:$0xff]
    %v82 = vld [vmem:[#allocation8 + $0x80] sm:$0xf]
    %v83 = vld [vmem:[#allocation8 + $0x84] sm:$0xff]
    %v84 = vld [vmem:[#allocation8 + $0x8c] sm:$0xf]
    %v85 = vld [vmem:[#allocation8 + $0x90] sm:$0xff]
    %v86 = vld [vmem:[#allocation8 + $0x98] sm:$0xf]
    %v87 = vld [vmem:[#allocation8 + $0x9c] sm:$0xff]
    %v88 = vld [vmem:[#allocation8 + $0xa4] sm:$0xf]
    %v89 = vld [vmem:[#allocation8 + $0xa8] sm:$0xff]
    %v90 = vld [vmem:[#allocation8 + $0xb0] sm:$0xf]
    %v91 = vld [vmem:[#allocation8 + $0xb4] sm:$0xff]
    %v92 = vld [vmem:[#allocation8 + $0xbc] sm:$0xf]
    %v93 = vld [vmem:[#allocation2] sm:$0xff]
    %v94 = vld [vmem:[#allocation6] sm:$0xff]
    %v95 = vld [vmem:[#allocation6 + $0x8] sm:$0xff]
    %v96 = vld [vmem:[#allocation6 + $0x10] sm:$0xff]
    %v97 = vpack.c.bf16 %v93, %v93
    %v130 = vunpack.c.l.b16 %v61
    %v131 = vunpack.c.h.b16 %v61
    %v132 = vunpack.c.l.b16 %v62
    %v133 = vunpack.c.l.b16 %v63
    %v134 = vunpack.c.h.b16 %v63
    %v135 = vunpack.c.l.b16 %v64
    %v136 = vunpack.c.l.b16 %v65
    %v137 = vunpack.c.h.b16 %v65
    %v138 = vunpack.c.l.b16 %v66
    %v139 = vunpack.c.l.b16 %v67
    %v140 = vunpack.c.h.b16 %v67
    %v141 = vunpack.c.l.b16 %v68
    %v142 = vunpack.c.l.b16 %v69
    %v143 = vunpack.c.h.b16 %v69
    %v144 = vunpack.c.l.b16 %v70
    %v145 = vunpack.c.l.b16 %v71
    %v146 = vunpack.c.h.b16 %v71
    %v147 = vunpack.c.l.b16 %v72
    %v148 = vunpack.c.l.b16 %v73
    %v149 = vunpack.c.h.b16 %v73
    %v150 = vunpack.c.l.b16 %v74
    %v151 = vunpack.c.l.b16 %v75
    %v152 = vunpack.c.h.b16 %v75
    %v153 = vunpack.c.l.b16 %v76
    %v154 = vunpack.c.l.b16 %v77
    %v155 = vunpack.c.h.b16 %v77
    %v156 = vunpack.c.l.b16 %v78
    %v157 = vunpack.c.l.b16 %v79
    %v158 = vunpack.c.h.b16 %v79
    %v159 = vunpack.c.l.b16 %v80
    %v160 = vunpack.c.l.b16 %v81
    %v161 = vunpack.c.h.b16 %v81
    %v162 = vunpack.c.l.b16 %v82
    %v163 = vunpack.c.l.b16 %v83
    %v164 = vunpack.c.h.b16 %v83
    %v165 = vunpack.c.l.b16 %v84
    %v166 = vunpack.c.l.b16 %v85
    %v167 = vunpack.c.h.b16 %v85
    %v168 = vunpack.c.l.b16 %v86
    %v169 = vunpack.c.l.b16 %v87
    %v170 = vunpack.c.h.b16 %v87
    %v171 = vunpack.c.l.b16 %v88
    %v172 = vunpack.c.l.b16 %v89
    %v173 = vunpack.c.h.b16 %v89
    %v174 = vunpack.c.l.b16 %v90
    %v175 = vunpack.c.l.b16 %v91
    %v176 = vunpack.c.h.b16 %v91
    %v177 = vunpack.c.l.b16 %v92
    %v178 = vpack.c.b16 %v133, %v130
    %v179 = vpack.c.b16 %v134, %v131
    %v180 = vpack.c.b16 %v135, %v132
    %v181 = vpack.c.b16 %v139, %v136
    %v182 = vpack.c.b16 %v140, %v137
    %v183 = vpack.c.b16 %v141, %v138
    %v184 = vpack.c.b16 %v145, %v142
    %v185 = vpack.c.b16 %v146, %v143
    %v186 = vpack.c.b16 %v147, %v144
    %v187 = vpack.c.b16 %v151, %v148
    %v188 = vpack.c.b16 %v152, %v149
    %v189 = vpack.c.b16 %v153, %v150
    %v190 = vpack.c.b16 %v157, %v154
    %v191 = vpack.c.b16 %v158, %v155
    %v192 = vpack.c.b16 %v159, %v156
    %v193 = vpack.c.b16 %v163, %v160
    %v194 = vpack.c.b16 %v164, %v161
    %v195 = vpack.c.b16 %v165, %v162
    %v196 = vpack.c.b16 %v169, %v166
    %v197 = vpack.c.b16 %v170, %v167
    %v198 = vpack.c.b16 %v171, %v168
    %v199 = vpack.c.b16 %v175, %v172
    %v200 = vpack.c.b16 %v176, %v173
    %v201 = vpack.c.b16 %v177, %v174
    %226 = vmatprep.subr.bf16.mxu0 %v200
    %227 = vmatpush1.bf16.msra.mxu0 %v199
    %228 = vmatprep.subr.bf16.mxu0 %v197
    %229 = vmatpush1.bf16.msra.mxu0 %v196
    %230 = vmatprep.subr.bf16.mxu0 %v194
    %231 = vmatpush1.bf16.msra.mxu0 %v193
    %232 = vmatprep.subr.bf16.mxu0 %v191
    %233 = vmatpush1.bf16.msra.mxu0 %v190
    %234 = vmatprep.subr.bf16.mxu0 %v188
    %235 = vmatpush1.bf16.msra.mxu0 %v187
    %236 = vmatprep.subr.bf16.mxu0 %v185
    %237 = vmatpush1.bf16.msra.mxu0 %v184
    %238 = vmatprep.subr.bf16.mxu0 %v182
    %239 = vmatpush1.bf16.msra.mxu0 %v181
    %240 = vmatprep.subr.bf16.mxu0 %v179
    %241 = vmatpush1.bf16.msra.mxu0 %v178
    %242 = vmatprep.subr.bf16.mxu0 0
    %243 = vmatpush2.bf16.msra.mxu0 0
    %244 = vmatprep.subr.bf16.mxu0 0
    %245 = vmatpush2.bf16.msra.mxu0 0
    %246 = vmatprep.subr.bf16.mxu0 0
    %247 = vmatpush2.bf16.msra.mxu0 0
    %248 = vmatprep.subr.bf16.mxu0 0
    %249 = vmatpush2.bf16.msra.mxu0 0
    %250 = vmatprep.subr.bf16.mxu0 0
    %251 = vmatpush2.bf16.msra.mxu0 0
    %252 = vmatprep.subr.bf16.mxu0 0
    %253 = vmatpush2.bf16.msra.mxu0 0
    %254 = vmatprep.subr.bf16.mxu0 0
    %255 = vmatpush2.bf16.msra.mxu0 0
    %256 = vmatprep.subr.bf16.mxu0 0
    %257 = vmatpush2.bf16.msra.mxu0 0
    %258 = vmatprep.mubr.bf16.mxu0 0
    %259 = vmatmul.mubr.bf16.gmra.mxu0 %v97
    %v260 = vpop.f32.mrf.mxu0
    %v261 = vadd.f32 0.0, %v260
    %v262 = vpop.f32.mrf.mxu0
    %v263 = vadd.f32 0.0, %v262
    %v264 = vpop.f32.mrf.mxu0
    %v265 = vpop.f32.mrf.mxu0
    %266 = vdwg.mxu0
    %267 = vmatprep.subr.bf16.mxu0 0
    %268 = vmatpush1.bf16.msra.mxu0 %v201
    %269 = vmatprep.subr.bf16.mxu0 0
    %270 = vmatpush1.bf16.msra.mxu0 %v198
    %271 = vmatprep.subr.bf16.mxu0 0
    %272 = vmatpush1.bf16.msra.mxu0 %v195
    %273 = vmatprep.subr.bf16.mxu0 0
    %274 = vmatpush1.bf16.msra.mxu0 %v192
    %275 = vmatprep.subr.bf16.mxu0 0
    %276 = vmatpush1.bf16.msra.mxu0 %v189
    %277 = vmatprep.subr.bf16.mxu0 0
    %278 = vmatpush1.bf16.msra.mxu0 %v186
    %279 = vmatprep.subr.bf16.mxu0 0
    %280 = vmatpush1.bf16.msra.mxu0 %v183
    %281 = vmatprep.subr.bf16.mxu0 0
    %282 = vmatpush1.bf16.msra.mxu0 %v180
    %283 = vmatprep.subr.bf16.mxu0 0
    %284 = vmatpush2.bf16.msra.mxu0 0
    %285 = vmatprep.subr.bf16.mxu0 0
    %286 = vmatpush2.bf16.msra.mxu0 0
    %287 = vmatprep.subr.bf16.mxu0 0
    %288 = vmatpush2.bf16.msra.mxu0 0
    %289 = vmatprep.subr.bf16.mxu0 0
    %290 = vmatpush2.bf16.msra.mxu0 0
    %291 = vmatprep.subr.bf16.mxu0 0
    %292 = vmatpush2.bf16.msra.mxu0 0
    %293 = vmatprep.subr.bf16.mxu0 0
    %294 = vmatpush2.bf16.msra.mxu0 0
    %295 = vmatprep.subr.bf16.mxu0 0
    %296 = vmatpush2.bf16.msra.mxu0 0
    %297 = vmatprep.subr.bf16.mxu0 0
    %298 = vmatpush2.bf16.msra.mxu0 0
    %299 = vmatprep.mubr.bf16.mxu0 0
    %300 = vmatmul.mubr.bf16.gmra.mxu0 %v97
    %v301 = vpop.f32.mrf.mxu0
    %v302 = vadd.f32 0.0, %v301
    %v303 = vpop.f32.mrf.mxu0
    %v304 = vpop.f32.mrf.mxu0
    %v305 = vpop.f32.mrf.mxu0
    %306 = vdwg.mxu0
    %v307 = vadd.f32 %v94, %v261
    %v308 = vadd.f32 %v95, %v263
    %v309 = vadd.f32 %v96, %v302
    %v310 = vxor.u32 %v307, 2147483648
    %v311 = vmul.f32 %v310, 1.442695
    %v312 = vpow.pop %v311
    %v313 = vadd.f32 %v312, 1.0
    %v314 = vrcp.pop %v313
    %v315 = vmul.f32 1.0, %v314
    %v316 = vmul.f32 %v315, %v308
    %v317 = vtanh.pop %v316
    %v318 = vadd.f32 %v309, -1.0
    %v319 = vxor.u32 %v318, 2147483648
    %v320 = vmul.f32 %v319, 1.442695
    %v321 = vpow.pop %v320
    %v322 = vadd.f32 %v321, 1.0
    %v323 = vrcp.pop %v322
    %v324 = vmul.f32 1.0, %v323
    %v325 = vsub.f32 %v317, %v93
    %v326 = vmul.f32 %v324, %v325
    %v327 = vadd.f32 %v93, %v326
    %328 = vst [vmem:[#allocation9] sm:$0xff] %v327
    %s329 = scalar_lea.vmem [#allocation6], 24
    %v330 = vld [vmem:[%s329] sm:$0xff]
    %v331 = vld [vmem:[%s329 + $0x8] sm:$0xff]
    %v332 = vld [vmem:[%s329 + $0x10] sm:$0xff]
    %v333 = vpack.c.bf16 %v327, %v327
    %334 = vmatprep.subr.bf16.mxu0 %v200
    %335 = vmatpush1.bf16.msra.mxu0 %v199
    %336 = vmatprep.subr.bf16.mxu0 %v197
    %337 = vmatpush1.bf16.msra.mxu0 %v196
    %338 = vmatprep.subr.bf16.mxu0 %v194
    %339 = vmatpush1.bf16.msra.mxu0 %v193
    %340 = vmatprep.subr.bf16.mxu0 %v191
    %341 = vmatpush1.bf16.msra.mxu0 %v190
    %342 = vmatprep.subr.bf16.mxu0 %v188
    %343 = vmatpush1.bf16.msra.mxu0 %v187
    %344 = vmatprep.subr.bf16.mxu0 %v185
    %345 = vmatpush1.bf16.msra.mxu0 %v184
    %346 = vmatprep.subr.bf16.mxu0 %v182
    %347 = vmatpush1.bf16.msra.mxu0 %v181
    %348 = vmatprep.subr.bf16.mxu0 %v179
    %349 = vmatpush1.bf16.msra.mxu0 %v178
    %350 = vmatprep.subr.bf16.mxu0 0
    %351 = vmatpush2.bf16.msra.mxu0 0
    %352 = vmatprep.subr.bf16.mxu0 0
    %353 = vmatpush2.bf16.msra.mxu0 0
    %354 = vmatprep.subr.bf16.mxu0 0
    %355 = vmatpush2.bf16.msra.mxu0 0
    %356 = vmatprep.subr.bf16.mxu0 0
    %357 = vmatpush2.bf16.msra.mxu0 0
    %358 = vmatprep.subr.bf16.mxu0 0
    %359 = vmatpush2.bf16.msra.mxu0 0
    %360 = vmatprep.subr.bf16.mxu0 0
    %361 = vmatpush2.bf16.msra.mxu0 0
    %362 = vmatprep.subr.bf16.mxu0 0
    %363 = vmatpush2.bf16.msra.mxu0 0
    %364 = vmatprep.subr.bf16.mxu0 0
    %365 = vmatpush2.bf16.msra.mxu0 0
    %366 = vmatprep.mubr.bf16.mxu0 0
    %367 = vmatmul.mubr.bf16.gmra.mxu0 %v333
    %v368 = vpop.f32.mrf.mxu0
    %v369 = vadd.f32 0.0, %v368
    %v370 = vpop.f32.mrf.mxu0
    %v371 = vadd.f32 0.0, %v370
    %v372 = vpop.f32.mrf.mxu0
    %v373 = vpop.f32.mrf.mxu0
    %374 = vdwg.mxu0
    %375 = vmatprep.subr.bf16.mxu0 0
    %376 = vmatpush1.bf16.msra.mxu0 %v201
    %377 = vmatprep.subr.bf16.mxu0 0
    %378 = vmatpush1.bf16.msra.mxu0 %v198
    %379 = vmatprep.subr.bf16.mxu0 0
    %380 = vmatpush1.bf16.msra.mxu0 %v195
    %381 = vmatprep.subr.bf16.mxu0 0
    %382 = vmatpush1.bf16.msra.mxu0 %v192
    %383 = vmatprep.subr.bf16.mxu0 0
    %384 = vmatpush1.bf16.msra.mxu0 %v189
    %385 = vmatprep.subr.bf16.mxu0 0
    %386 = vmatpush1.bf16.msra.mxu0 %v186
    %387 = vmatprep.subr.bf16.mxu0 0
    %388 = vmatpush1.bf16.msra.mxu0 %v183
    %389 = vmatprep.subr.bf16.mxu0 0
    %390 = vmatpush1.bf16.msra.mxu0 %v180
    %391 = vmatprep.subr.bf16.mxu0 0
    %392 = vmatpush2.bf16.msra.mxu0 0
    %393 = vmatprep.subr.bf16.mxu0 0
    %394 = vmatpush2.bf16.msra.mxu0 0
    %395 = vmatprep.subr.bf16.mxu0 0
    %396 = vmatpush2.bf16.msra.mxu0 0
    %397 = vmatprep.subr.bf16.mxu0 0
    %398 = vmatpush2.bf16.msra.mxu0 0
    %399 = vmatprep.subr.bf16.mxu0 0
    %400 = vmatpush2.bf16.msra.mxu0 0
    %401 = vmatprep.subr.bf16.mxu0 0
    %402 = vmatpush2.bf16.msra.mxu0 0
    %403 = vmatprep.subr.bf16.mxu0 0
    %404 = vmatpush2.bf16.msra.mxu0 0
    %405 = vmatprep.subr.bf16.mxu0 0
    %406 = vmatpush2.bf16.msra.mxu0 0
    %407 = vmatprep.mubr.bf16.mxu0 0
    %408 = vmatmul.mubr.bf16.gmra.mxu0 %v333
    %v409 = vpop.f32.mrf.mxu0
    %v410 = vadd.f32 0.0, %v409
    %v411 = vpop.f32.mrf.mxu0
    %v412 = vpop.f32.mrf.mxu0
    %v413 = vpop.f32.mrf.mxu0
    %414 = vdwg.mxu0
    %v415 = vadd.f32 %v330, %v369
    %v416 = vadd.f32 %v331, %v371
    %v417 = vadd.f32 %v332, %v410
    %v418 = vxor.u32 %v415, 2147483648
    %v419 = vmul.f32 %v418, 1.442695
    %v420 = vpow.pop %v419
    %v421 = vadd.f32 %v420, 1.0
    %v422 = vrcp.pop %v421
    %v423 = vmul.f32 1.0, %v422
    %v424 = vmul.f32 %v423, %v416
    %v425 = vtanh.pop %v424
    %v426 = vadd.f32 %v417, -1.0
    %v427 = vxor.u32 %v426, 2147483648
    %v428 = vmul.f32 %v427, 1.442695
    %v429 = vpow.pop %v428
    %v430 = vadd.f32 %v429, 1.0
    %v431 = vrcp.pop %v430
    %v432 = vmul.f32 1.0, %v431
    %v433 = vsub.f32 %v425, %v327
    %v434 = vmul.f32 %v432, %v433
    %v435 = vadd.f32 %v327, %v434
    %s436 = scalar_lea.vmem [#allocation9], 8
    %437 = vst [vmem:[%s436] sm:$0xff] %v435
    %s438 = scalar_lea.vmem [#allocation6], 48
    %v439 = vld [vmem:[%s438] sm:$0xff]
    %v440 = vld [vmem:[%s438 + $0x8] sm:$0xff]
    %v441 = vld [vmem:[%s438 + $0x10] sm:$0xff]
    %v442 = vpack.c.bf16 %v435, %v435
    %443 = vmatprep.subr.bf16.mxu0 %v200
    %444 = vmatpush1.bf16.msra.mxu0 %v199
    %445 = vmatprep.subr.bf16.mxu0 %v197
    %446 = vmatpush1.bf16.msra.mxu0 %v196
    %447 = vmatprep.subr.bf16.mxu0 %v194
    %448 = vmatpush1.bf16.msra.mxu0 %v193
    %449 = vmatprep.subr.bf16.mxu0 %v191
    %450 = vmatpush1.bf16.msra.mxu0 %v190
    %451 = vmatprep.subr.bf16.mxu0 %v188
    %452 = vmatpush1.bf16.msra.mxu0 %v187
    %453 = vmatprep.subr.bf16.mxu0 %v185
    %454 = vmatpush1.bf16.msra.mxu0 %v184
    %455 = vmatprep.subr.bf16.mxu0 %v182
    %456 = vmatpush1.bf16.msra.mxu0 %v181
    %457 = vmatprep.subr.bf16.mxu0 %v179
    %458 = vmatpush1.bf16.msra.mxu0 %v178
    %459 = vmatprep.subr.bf16.mxu0 0
    %460 = vmatpush2.bf16.msra.mxu0 0
    %461 = vmatprep.subr.bf16.mxu0 0
    %462 = vmatpush2.bf16.msra.mxu0 0
    %463 = vmatprep.subr.bf16.mxu0 0
    %464 = vmatpush2.bf16.msra.mxu0 0
    %465 = vmatprep.subr.bf16.mxu0 0
    %466 = vmatpush2.bf16.msra.mxu0 0
    %467 = vmatprep.subr.bf16.mxu0 0
    %468 = vmatpush2.bf16.msra.mxu0 0
    %469 = vmatprep.subr.bf16.mxu0 0
    %470 = vmatpush2.bf16.msra.mxu0 0
    %471 = vmatprep.subr.bf16.mxu0 0
    %472 = vmatpush2.bf16.msra.mxu0 0
    %473 = vmatprep.subr.bf16.mxu0 0
    %474 = vmatpush2.bf16.msra.mxu0 0
    %475 = vmatprep.mubr.bf16.mxu0 0
    %476 = vmatmul.mubr.bf16.gmra.mxu0 %v442
    %v477 = vpop.f32.mrf.mxu0
    %v478 = vadd.f32 0.0, %v477
    %v479 = vpop.f32.mrf.mxu0
    %v480 = vadd.f32 0.0, %v479
    %v481 = vpop.f32.mrf.mxu0
    %v482 = vpop.f32.mrf.mxu0
    %483 = vdwg.mxu0
    %484 = vmatprep.subr.bf16.mxu0 0
    %485 = vmatpush1.bf16.msra.mxu0 %v201
    %486 = vmatprep.subr.bf16.mxu0 0
    %487 = vmatpush1.bf16.msra.mxu0 %v198
    %488 = vmatprep.subr.bf16.mxu0 0
    %489 = vmatpush1.bf16.msra.mxu0 %v195
    %490 = vmatprep.subr.bf16.mxu0 0
    %491 = vmatpush1.bf16.msra.mxu0 %v192
    %492 = vmatprep.subr.bf16.mxu0 0
    %493 = vmatpush1.bf16.msra.mxu0 %v189
    %494 = vmatprep.subr.bf16.mxu0 0
    %495 = vmatpush1.bf16.msra.mxu0 %v186
    %496 = vmatprep.subr.bf16.mxu0 0
    %497 = vmatpush1.bf16.msra.mxu0 %v183
    %498 = vmatprep.subr.bf16.mxu0 0
    %499 = vmatpush1.bf16.msra.mxu0 %v180
    %500 = vmatprep.subr.bf16.mxu0 0
    %501 = vmatpush2.bf16.msra.mxu0 0
    %502 = vmatprep.subr.bf16.mxu0 0
    %503 = vmatpush2.bf16.msra.mxu0 0
    %504 = vmatprep.subr.bf16.mxu0 0
    %505 = vmatpush2.bf16.msra.mxu0 0
    %506 = vmatprep.subr.bf16.mxu0 0
    %507 = vmatpush2.bf16.msra.mxu0 0
    %508 = vmatprep.subr.bf16.mxu0 0
    %509 = vmatpush2.bf16.msra.mxu0 0
    %510 = vmatprep.subr.bf16.mxu0 0
    %511 = vmatpush2.bf16.msra.mxu0 0
    %512 = vmatprep.subr.bf16.mxu0 0
    %513 = vmatpush2.bf16.msra.mxu0 0
    %514 = vmatprep.subr.bf16.mxu0 0
    %515 = vmatpush2.bf16.msra.mxu0 0
    %516 = vmatprep.mubr.bf16.mxu0 0
    %517 = vmatmul.mubr.bf16.gmra.mxu0 %v442
    %v518 = vpop.f32.mrf.mxu0
    %v519 = vadd.f32 0.0, %v518
    %v520 = vpop.f32.mrf.mxu0
    %v521 = vpop.f32.mrf.mxu0
    %v522 = vpop.f32.mrf.mxu0
    %523 = vdwg.mxu0
    %v524 = vadd.f32 %v439, %v478
    %v525 = vadd.f32 %v440, %v480
    %v526 = vadd.f32 %v441, %v519
    %v527 = vxor.u32 %v524, 2147483648
    %v528 = vmul.f32 %v527, 1.442695
    %v529 = vpow.pop %v528
    %v530 = vadd.f32 %v529, 1.0
    %v531 = vrcp.pop %v530
    %v532 = vmul.f32 1.0, %v531
    %v533 = vmul.f32 %v532, %v525
    %v534 = vtanh.pop %v533
    %v535 = vadd.f32 %v526, -1.0
    %v536 = vxor.u32 %v535, 2147483648
    %v537 = vmul.f32 %v536, 1.442695
    %v538 = vpow.pop %v537
    %v539 = vadd.f32 %v538, 1.0
    %v540 = vrcp.pop %v539
    %v541 = vmul.f32 1.0, %v540
    %v542 = vsub.f32 %v534, %v435
    %v543 = vmul.f32 %v541, %v542
    %v544 = vadd.f32 %v435, %v543
    %s545 = scalar_lea.vmem [#allocation9], 16
    %546 = vst [vmem:[%s545] sm:$0xff] %v544
    %s547 = scalar_lea.vmem [#allocation6], 72
    %v548 = vld [vmem:[%s547] sm:$0xff]
    %v549 = vld [vmem:[%s547 + $0x8] sm:$0xff]
    %v550 = vld [vmem:[%s547 + $0x10] sm:$0xff]
    %v551 = vpack.c.bf16 %v544, %v544
    %552 = vmatprep.subr.bf16.mxu0 %v200
    %553 = vmatpush1.bf16.msra.mxu0 %v199
    %554 = vmatprep.subr.bf16.mxu0 %v197
    %555 = vmatpush1.bf16.msra.mxu0 %v196
    %556 = vmatprep.subr.bf16.mxu0 %v194
    %557 = vmatpush1.bf16.msra.mxu0 %v193
    %558 = vmatprep.subr.bf16.mxu0 %v191
    %559 = vmatpush1.bf16.msra.mxu0 %v190
    %560 = vmatprep.subr.bf16.mxu0 %v188
    %561 = vmatpush1.bf16.msra.mxu0 %v187
    %562 = vmatprep.subr.bf16.mxu0 %v185
    %563 = vmatpush1.bf16.msra.mxu0 %v184
    %564 = vmatprep.subr.bf16.mxu0 %v182
    %565 = vmatpush1.bf16.msra.mxu0 %v181
    %566 = vmatprep.subr.bf16.mxu0 %v179
    %567 = vmatpush1.bf16.msra.mxu0 %v178
    %568 = vmatprep.subr.bf16.mxu0 0
    %569 = vmatpush2.bf16.msra.mxu0 0
    %570 = vmatprep.subr.bf16.mxu0 0
    %571 = vmatpush2.bf16.msra.mxu0 0
    %572 = vmatprep.subr.bf16.mxu0 0
    %573 = vmatpush2.bf16.msra.mxu0 0
    %574 = vmatprep.subr.bf16.mxu0 0
    %575 = vmatpush2.bf16.msra.mxu0 0
    %576 = vmatprep.subr.bf16.mxu0 0
    %577 = vmatpush2.bf16.msra.mxu0 0
    %578 = vmatprep.subr.bf16.mxu0 0
    %579 = vmatpush2.bf16.msra.mxu0 0
    %580 = vmatprep.subr.bf16.mxu0 0
    %581 = vmatpush2.bf16.msra.mxu0 0
    %582 = vmatprep.subr.bf16.mxu0 0
    %583 = vmatpush2.bf16.msra.mxu0 0
    %584 = vmatprep.mubr.bf16.mxu0 0
    %585 = vmatmul.mubr.bf16.gmra.mxu0 %v551
    %v586 = vpop.f32.mrf.mxu0
    %v587 = vadd.f32 0.0, %v586
    %v588 = vpop.f32.mrf.mxu0
    %v589 = vadd.f32 0.0, %v588
    %v590 = vpop.f32.mrf.mxu0
    %v591 = vpop.f32.mrf.mxu0
    %592 = vdwg.mxu0
    %593 = vmatprep.subr.bf16.mxu0 0
    %594 = vmatpush1.bf16.msra.mxu0 %v201
    %595 = vmatprep.subr.bf16.mxu0 0
    %596 = vmatpush1.bf16.msra.mxu0 %v198
    %597 = vmatprep.subr.bf16.mxu0 0
    %598 = vmatpush1.bf16.msra.mxu0 %v195
    %599 = vmatprep.subr.bf16.mxu0 0
    %600 = vmatpush1.bf16.msra.mxu0 %v192
    %601 = vmatprep.subr.bf16.mxu0 0
    %602 = vmatpush1.bf16.msra.mxu0 %v189
    %603 = vmatprep.subr.bf16.mxu0 0
    %604 = vmatpush1.bf16.msra.mxu0 %v186
    %605 = vmatprep.subr.bf16.mxu0 0
    %606 = vmatpush1.bf16.msra.mxu0 %v183
    %607 = vmatprep.subr.bf16.mxu0 0
    %608 = vmatpush1.bf16.msra.mxu0 %v180
    %609 = vmatprep.subr.bf16.mxu0 0
    %610 = vmatpush2.bf16.msra.mxu0 0
    %611 = vmatprep.subr.bf16.mxu0 0
    %612 = vmatpush2.bf16.msra.mxu0 0
    %613 = vmatprep.subr.bf16.mxu0 0
    %614 = vmatpush2.bf16.msra.mxu0 0
    %615 = vmatprep.subr.bf16.mxu0 0
    %616 = vmatpush2.bf16.msra.mxu0 0
    %617 = vmatprep.subr.bf16.mxu0 0
    %618 = vmatpush2.bf16.msra.mxu0 0
    %619 = vmatprep.subr.bf16.mxu0 0
    %620 = vmatpush2.bf16.msra.mxu0 0
    %621 = vmatprep.subr.bf16.mxu0 0
    %622 = vmatpush2.bf16.msra.mxu0 0
    %623 = vmatprep.subr.bf16.mxu0 0
    %624 = vmatpush2.bf16.msra.mxu0 0
    %625 = vmatprep.mubr.bf16.mxu0 0
    %626 = vmatmul.mubr.bf16.gmra.mxu0 %v551
    %v627 = vpop.f32.mrf.mxu0
    %v628 = vadd.f32 0.0, %v627
    %v629 = vpop.f32.mrf.mxu0
    %v630 = vpop.f32.mrf.mxu0
    %v631 = vpop.f32.mrf.mxu0
    %632 = vdwg.mxu0
    %v633 = vadd.f32 %v548, %v587
    %v634 = vadd.f32 %v549, %v589
    %v635 = vadd.f32 %v550, %v628
    %v636 = vxor.u32 %v633, 2147483648
    %v637 = vmul.f32 %v636, 1.442695
    %v638 = vpow.pop %v637
    %v639 = vadd.f32 %v638, 1.0
    %v640 = vrcp.pop %v639
    %v641 = vmul.f32 1.0, %v640
    %v642 = vmul.f32 %v641, %v634
    %v643 = vtanh.pop %v642
    %v644 = vadd.f32 %v635, -1.0
    %v645 = vxor.u32 %v644, 2147483648
    %v646 = vmul.f32 %v645, 1.442695
    %v647 = vpow.pop %v646
    %v648 = vadd.f32 %v647, 1.0
    %v649 = vrcp.pop %v648
    %v650 = vmul.f32 1.0, %v649
    %v651 = vsub.f32 %v643, %v544
    %v652 = vmul.f32 %v650, %v651
    %v653 = vadd.f32 %v544, %v652
    %s654 = scalar_lea.vmem [#allocation9], 24
    %655 = vst [vmem:[%s654] sm:$0xff] %v653
    %s656 = scalar_lea.vmem [#allocation6], 96
    %v657 = vld [vmem:[%s656] sm:$0xff]
    %v658 = vld [vmem:[%s656 + $0x8] sm:$0xff]
    %v659 = vld [vmem:[%s656 + $0x10] sm:$0xff]
    %v660 = vpack.c.bf16 %v653, %v653
    %661 = vmatprep.subr.bf16.mxu0 %v200
    %662 = vmatpush1.bf16.msra.mxu0 %v199
    %663 = vmatprep.subr.bf16.mxu0 %v197
    %664 = vmatpush1.bf16.msra.mxu0 %v196
    %665 = vmatprep.subr.bf16.mxu0 %v194
    %666 = vmatpush1.bf16.msra.mxu0 %v193
    %667 = vmatprep.subr.bf16.mxu0 %v191
    %668 = vmatpush1.bf16.msra.mxu0 %v190
    %669 = vmatprep.subr.bf16.mxu0 %v188
    %670 = vmatpush1.bf16.msra.mxu0 %v187
    %671 = vmatprep.subr.bf16.mxu0 %v185
    %672 = vmatpush1.bf16.msra.mxu0 %v184
    %673 = vmatprep.subr.bf16.mxu0 %v182
    %674 = vmatpush1.bf16.msra.mxu0 %v181
    %675 = vmatprep.subr.bf16.mxu0 %v179
    %676 = vmatpush1.bf16.msra.mxu0 %v178
    %677 = vmatprep.subr.bf16.mxu0 0
    %678 = vmatpush2.bf16.msra.mxu0 0
    %679 = vmatprep.subr.bf16.mxu0 0
    %680 = vmatpush2.bf16.msra.mxu0 0
    %681 = vmatprep.subr.bf16.mxu0 0
    %682 = vmatpush2.bf16.msra.mxu0 0
    %683 = vmatprep.subr.bf16.mxu0 0
    %684 = vmatpush2.bf16.msra.mxu0 0
    %685 = vmatprep.subr.bf16.mxu0 0
    %686 = vmatpush2.bf16.msra.mxu0 0
    %687 = vmatprep.subr.bf16.mxu0 0
    %688 = vmatpush2.bf16.msra.mxu0 0
    %689 = vmatprep.subr.bf16.mxu0 0
    %690 = vmatpush2.bf16.msra.mxu0 0
    %691 = vmatprep.subr.bf16.mxu0 0
    %692 = vmatpush2.bf16.msra.mxu0 0
    %693 = vmatprep.mubr.bf16.mxu0 0
    %694 = vmatmul.mubr.bf16.gmra.mxu0 %v660
    %v695 = vpop.f32.mrf.mxu0
    %v696 = vadd.f32 0.0, %v695
    %v697 = vpop.f32.mrf.mxu0
    %v698 = vadd.f32 0.0, %v697
    %v699 = vpop.f32.mrf.mxu0
    %v700 = vpop.f32.mrf.mxu0
    %701 = vdwg.mxu0
    %702 = vmatprep.subr.bf16.mxu0 0
    %703 = vmatpush1.bf16.msra.mxu0 %v201
    %704 = vmatprep.subr.bf16.mxu0 0
    %705 = vmatpush1.bf16.msra.mxu0 %v198
    %706 = vmatprep.subr.bf16.mxu0 0
    %707 = vmatpush1.bf16.msra.mxu0 %v195
    %708 = vmatprep.subr.bf16.mxu0 0
    %709 = vmatpush1.bf16.msra.mxu0 %v192
    %710 = vmatprep.subr.bf16.mxu0 0
    %711 = vmatpush1.bf16.msra.mxu0 %v189
    %712 = vmatprep.subr.bf16.mxu0 0
    %713 = vmatpush1.bf16.msra.mxu0 %v186
    %714 = vmatprep.subr.bf16.mxu0 0
    %715 = vmatpush1.bf16.msra.mxu0 %v183
    %716 = vmatprep.subr.bf16.mxu0 0
    %717 = vmatpush1.bf16.msra.mxu0 %v180
    %718 = vmatprep.subr.bf16.mxu0 0
    %719 = vmatpush2.bf16.msra.mxu0 0
    %720 = vmatprep.subr.bf16.mxu0 0
    %721 = vmatpush2.bf16.msra.mxu0 0
    %722 = vmatprep.subr.bf16.mxu0 0
    %723 = vmatpush2.bf16.msra.mxu0 0
    %724 = vmatprep.subr.bf16.mxu0 0
    %725 = vmatpush2.bf16.msra.mxu0 0
    %726 = vmatprep.subr.bf16.mxu0 0
    %727 = vmatpush2.bf16.msra.mxu0 0
    %728 = vmatprep.subr.bf16.mxu0 0
    %729 = vmatpush2.bf16.msra.mxu0 0
    %730 = vmatprep.subr.bf16.mxu0 0
    %731 = vmatpush2.bf16.msra.mxu0 0
    %732 = vmatprep.subr.bf16.mxu0 0
    %733 = vmatpush2.bf16.msra.mxu0 0
    %734 = vmatprep.mubr.bf16.mxu0 0
    %735 = vmatmul.mubr.bf16.gmra.mxu0 %v660
    %v736 = vpop.f32.mrf.mxu0
    %v737 = vadd.f32 0.0, %v736
    %v738 = vpop.f32.mrf.mxu0
    %v739 = vpop.f32.mrf.mxu0
    %v740 = vpop.f32.mrf.mxu0
    %741 = vdwg.mxu0
    %v742 = vadd.f32 %v657, %v696
    %v743 = vadd.f32 %v658, %v698
    %v744 = vadd.f32 %v659, %v737
    %v745 = vxor.u32 %v742, 2147483648
    %v746 = vmul.f32 %v745, 1.442695
    %v747 = vpow.pop %v746
    %v748 = vadd.f32 %v747, 1.0
    %v749 = vrcp.pop %v748
    %v750 = vmul.f32 1.0, %v749
    %v751 = vmul.f32 %v750, %v743
    %v752 = vtanh.pop %v751
    %v753 = vadd.f32 %v744, -1.0
    %v754 = vxor.u32 %v753, 2147483648
    %v755 = vmul.f32 %v754, 1.442695
    %v756 = vpow.pop %v755
    %v757 = vadd.f32 %v756, 1.0
    %v758 = vrcp.pop %v757
    %v759 = vmul.f32 1.0, %v758
    %v760 = vsub.f32 %v752, %v653
    %v761 = vmul.f32 %v759, %v760
    %v762 = vadd.f32 %v653, %v761
    %s763 = scalar_lea.vmem [#allocation9], 32
    %764 = vst [vmem:[%s763] sm:$0xff] %v762
    %s765 = scalar_lea.vmem [#allocation6], 120
    %v766 = vld [vmem:[%s765] sm:$0xff]
    %v767 = vld [vmem:[%s765 + $0x8] sm:$0xff]
    %v768 = vld [vmem:[%s765 + $0x10] sm:$0xff]
    %v769 = vpack.c.bf16 %v762, %v762
    %770 = vmatprep.subr.bf16.mxu0 %v200
    %771 = vmatpush1.bf16.msra.mxu0 %v199
    %772 = vmatprep.subr.bf16.mxu0 %v197
    %773 = vmatpush1.bf16.msra.mxu0 %v196
    %774 = vmatprep.subr.bf16.mxu0 %v194
    %775 = vmatpush1.bf16.msra.mxu0 %v193
    %776 = vmatprep.subr.bf16.mxu0 %v191
    %777 = vmatpush1.bf16.msra.mxu0 %v190
    %778 = vmatprep.subr.bf16.mxu0 %v188
    %779 = vmatpush1.bf16.msra.mxu0 %v187
    %780 = vmatprep.subr.bf16.mxu0 %v185
    %781 = vmatpush1.bf16.msra.mxu0 %v184
    %782 = vmatprep.subr.bf16.mxu0 %v182
    %783 = vmatpush1.bf16.msra.mxu0 %v181
    %784 = vmatprep.subr.bf16.mxu0 %v179
    %785 = vmatpush1.bf16.msra.mxu0 %v178
    %786 = vmatprep.subr.bf16.mxu0 0
    %787 = vmatpush2.bf16.msra.mxu0 0
    %788 = vmatprep.subr.bf16.mxu0 0
    %789 = vmatpush2.bf16.msra.mxu0 0
    %790 = vmatprep.subr.bf16.mxu0 0
    %791 = vmatpush2.bf16.msra.mxu0 0
    %792 = vmatprep.subr.bf16.mxu0 0
    %793 = vmatpush2.bf16.msra.mxu0 0
    %794 = vmatprep.subr.bf16.mxu0 0
    %795 = vmatpush2.bf16.msra.mxu0 0
    %796 = vmatprep.subr.bf16.mxu0 0
    %797 = vmatpush2.bf16.msra.mxu0 0
    %798 = vmatprep.subr.bf16.mxu0 0
    %799 = vmatpush2.bf16.msra.mxu0 0
    %800 = vmatprep.subr.bf16.mxu0 0
    %801 = vmatpush2.bf16.msra.mxu0 0
    %802 = vmatprep.mubr.bf16.mxu0 0
    %803 = vmatmul.mubr.bf16.gmra.mxu0 %v769
    %v804 = vpop.f32.mrf.mxu0
    %v805 = vadd.f32 0.0, %v804
    %v806 = vpop.f32.mrf.mxu0
    %v807 = vadd.f32 0.0, %v806
    %v808 = vpop.f32.mrf.mxu0
    %v809 = vpop.f32.mrf.mxu0
    %810 = vdwg.mxu0
    %811 = vmatprep.subr.bf16.mxu0 0
    %812 = vmatpush1.bf16.msra.mxu0 %v201
    %813 = vmatprep.subr.bf16.mxu0 0
    %814 = vmatpush1.bf16.msra.mxu0 %v198
    %815 = vmatprep.subr.bf16.mxu0 0
    %816 = vmatpush1.bf16.msra.mxu0 %v195
    %817 = vmatprep.subr.bf16.mxu0 0
    %818 = vmatpush1.bf16.msra.mxu0 %v192
    %819 = vmatprep.subr.bf16.mxu0 0
    %820 = vmatpush1.bf16.msra.mxu0 %v189
    %821 = vmatprep.subr.bf16.mxu0 0
    %822 = vmatpush1.bf16.msra.mxu0 %v186
    %823 = vmatprep.subr.bf16.mxu0 0
    %824 = vmatpush1.bf16.msra.mxu0 %v183
    %825 = vmatprep.subr.bf16.mxu0 0
    %826 = vmatpush1.bf16.msra.mxu0 %v180
    %827 = vmatprep.subr.bf16.mxu0 0
    %828 = vmatpush2.bf16.msra.mxu0 0
    %829 = vmatprep.subr.bf16.mxu0 0
    %830 = vmatpush2.bf16.msra.mxu0 0
    %831 = vmatprep.subr.bf16.mxu0 0
    %832 = vmatpush2.bf16.msra.mxu0 0
    %833 = vmatprep.subr.bf16.mxu0 0
    %834 = vmatpush2.bf16.msra.mxu0 0
    %835 = vmatprep.subr.bf16.mxu0 0
    %836 = vmatpush2.bf16.msra.mxu0 0
    %837 = vmatprep.subr.bf16.mxu0 0
    %838 = vmatpush2.bf16.msra.mxu0 0
    %839 = vmatprep.subr.bf16.mxu0 0
    %840 = vmatpush2.bf16.msra.mxu0 0
    %841 = vmatprep.subr.bf16.mxu0 0
    %842 = vmatpush2.bf16.msra.mxu0 0
    %843 = vmatprep.mubr.bf16.mxu0 0
    %844 = vmatmul.mubr.bf16.gmra.mxu0 %v769
    %v845 = vpop.f32.mrf.mxu0
    %v846 = vadd.f32 0.0, %v845
    %v847 = vpop.f32.mrf.mxu0
    %v848 = vpop.f32.mrf.mxu0
    %v849 = vpop.f32.mrf.mxu0
    %850 = vdwg.mxu0
    %v851 = vadd.f32 %v766, %v805
    %v852 = vadd.f32 %v767, %v807
    %v853 = vadd.f32 %v768, %v846
    %v854 = vxor.u32 %v851, 2147483648
    %v855 = vmul.f32 %v854, 1.442695
    %v856 = vpow.pop %v855
    %v857 = vadd.f32 %v856, 1.0
    %v858 = vrcp.pop %v857
    %v859 = vmul.f32 1.0, %v858
    %v860 = vmul.f32 %v859, %v852
    %v861 = vtanh.pop %v860
    %v862 = vadd.f32 %v853, -1.0
    %v863 = vxor.u32 %v862, 2147483648
    %v864 = vmul.f32 %v863, 1.442695
    %v865 = vpow.pop %v864
    %v866 = vadd.f32 %v865, 1.0
    %v867 = vrcp.pop %v866
    %v868 = vmul.f32 1.0, %v867
    %v869 = vsub.f32 %v861, %v762
    %v870 = vmul.f32 %v868, %v869
    %v871 = vadd.f32 %v762, %v870
    %s872 = scalar_lea.vmem [#allocation9], 40
    %873 = vst [vmem:[%s872] sm:$0xff] %v871
    %s874 = scalar_lea.vmem [#allocation6], 144
    %v875 = vld [vmem:[%s874] sm:$0xff]
    %v876 = vld [vmem:[%s874 + $0x8] sm:$0xff]
    %v877 = vld [vmem:[%s874 + $0x10] sm:$0xff]
    %v878 = vpack.c.bf16 %v871, %v871
    %879 = vmatprep.subr.bf16.mxu0 %v200
    %880 = vmatpush1.bf16.msra.mxu0 %v199
    %881 = vmatprep.subr.bf16.mxu0 %v197
    %882 = vmatpush1.bf16.msra.mxu0 %v196
    %883 = vmatprep.subr.bf16.mxu0 %v194
    %884 = vmatpush1.bf16.msra.mxu0 %v193
    %885 = vmatprep.subr.bf16.mxu0 %v191
    %886 = vmatpush1.bf16.msra.mxu0 %v190
    %887 = vmatprep.subr.bf16.mxu0 %v188
    %888 = vmatpush1.bf16.msra.mxu0 %v187
    %889 = vmatprep.subr.bf16.mxu0 %v185
    %890 = vmatpush1.bf16.msra.mxu0 %v184
    %891 = vmatprep.subr.bf16.mxu0 %v182
    %892 = vmatpush1.bf16.msra.mxu0 %v181
    %893 = vmatprep.subr.bf16.mxu0 %v179
    %894 = vmatpush1.bf16.msra.mxu0 %v178
    %895 = vmatprep.subr.bf16.mxu0 0
    %896 = vmatpush2.bf16.msra.mxu0 0
    %897 = vmatprep.subr.bf16.mxu0 0
    %898 = vmatpush2.bf16.msra.mxu0 0
    %899 = vmatprep.subr.bf16.mxu0 0
    %900 = vmatpush2.bf16.msra.mxu0 0
    %901 = vmatprep.subr.bf16.mxu0 0
    %902 = vmatpush2.bf16.msra.mxu0 0
    %903 = vmatprep.subr.bf16.mxu0 0
    %904 = vmatpush2.bf16.msra.mxu0 0
    %905 = vmatprep.subr.bf16.mxu0 0
    %906 = vmatpush2.bf16.msra.mxu0 0
    %907 = vmatprep.subr.bf16.mxu0 0
    %908 = vmatpush2.bf16.msra.mxu0 0
    %909 = vmatprep.subr.bf16.mxu0 0
    %910 = vmatpush2.bf16.msra.mxu0 0
    %911 = vmatprep.mubr.bf16.mxu0 0
    %912 = vmatmul.mubr.bf16.gmra.mxu0 %v878
    %v913 = vpop.f32.mrf.mxu0
    %v914 = vadd.f32 0.0, %v913
    %v915 = vpop.f32.mrf.mxu0
    %v916 = vadd.f32 0.0, %v915
    %v917 = vpop.f32.mrf.mxu0
    %v918 = vpop.f32.mrf.mxu0
    %919 = vdwg.mxu0
    %920 = vmatprep.subr.bf16.mxu0 0
    %921 = vmatpush1.bf16.msra.mxu0 %v201
    %922 = vmatprep.subr.bf16.mxu0 0
    %923 = vmatpush1.bf16.msra.mxu0 %v198
    %924 = vmatprep.subr.bf16.mxu0 0
    %925 = vmatpush1.bf16.msra.mxu0 %v195
    %926 = vmatprep.subr.bf16.mxu0 0
    %927 = vmatpush1.bf16.msra.mxu0 %v192
    %928 = vmatprep.subr.bf16.mxu0 0
    %929 = vmatpush1.bf16.msra.mxu0 %v189
    %930 = vmatprep.subr.bf16.mxu0 0
    %931 = vmatpush1.bf16.msra.mxu0 %v186
    %932 = vmatprep.subr.bf16.mxu0 0
    %933 = vmatpush1.bf16.msra.mxu0 %v183
    %934 = vmatprep.subr.bf16.mxu0 0
    %935 = vmatpush1.bf16.msra.mxu0 %v180
    %936 = vmatprep.subr.bf16.mxu0 0
    %937 = vmatpush2.bf16.msra.mxu0 0
    %938 = vmatprep.subr.bf16.mxu0 0
    %939 = vmatpush2.bf16.msra.mxu0 0
    %940 = vmatprep.subr.bf16.mxu0 0
    %941 = vmatpush2.bf16.msra.mxu0 0
    %942 = vmatprep.subr.bf16.mxu0 0
    %943 = vmatpush2.bf16.msra.mxu0 0
    %944 = vmatprep.subr.bf16.mxu0 0
    %945 = vmatpush2.bf16.msra.mxu0 0
    %946 = vmatprep.subr.bf16.mxu0 0
    %947 = vmatpush2.bf16.msra.mxu0 0
    %948 = vmatprep.subr.bf16.mxu0 0
    %949 = vmatpush2.bf16.msra.mxu0 0
    %950 = vmatprep.subr.bf16.mxu0 0
    %951 = vmatpush2.bf16.msra.mxu0 0
    %952 = vmatprep.mubr.bf16.mxu0 0
    %953 = vmatmul.mubr.bf16.gmra.mxu0 %v878
    %v954 = vpop.f32.mrf.mxu0
    %v955 = vadd.f32 0.0, %v954
    %v956 = vpop.f32.mrf.mxu0
    %v957 = vpop.f32.mrf.mxu0
    %v958 = vpop.f32.mrf.mxu0
    %959 = vdwg.mxu0
    %v960 = vadd.f32 %v875, %v914
    %v961 = vadd.f32 %v876, %v916
    %v962 = vadd.f32 %v877, %v955
    %v963 = vxor.u32 %v960, 2147483648
    %v964 = vmul.f32 %v963, 1.442695
    %v965 = vpow.pop %v964
    %v966 = vadd.f32 %v965, 1.0
    %v967 = vrcp.pop %v966
    %v968 = vmul.f32 1.0, %v967
    %v969 = vmul.f32 %v968, %v961
    %v970 = vtanh.pop %v969
    %v971 = vadd.f32 %v962, -1.0
    %v972 = vxor.u32 %v971, 2147483648
    %v973 = vmul.f32 %v972, 1.442695
    %v974 = vpow.pop %v973
    %v975 = vadd.f32 %v974, 1.0
    %v976 = vrcp.pop %v975
    %v977 = vmul.f32 1.0, %v976
    %v978 = vsub.f32 %v970, %v871
    %v979 = vmul.f32 %v977, %v978
    %v980 = vadd.f32 %v871, %v979
    %s981 = scalar_lea.vmem [#allocation9], 48
    %982 = vst [vmem:[%s981] sm:$0xff] %v980
    %s983 = scalar_lea.vmem [#allocation6], 168
    %v984 = vld [vmem:[%s983] sm:$0xff]
    %v985 = vld [vmem:[%s983 + $0x8] sm:$0xff]
    %v986 = vld [vmem:[%s983 + $0x10] sm:$0xff]
    %v987 = vpack.c.bf16 %v980, %v980
    %988 = vmatprep.subr.bf16.mxu0 %v200
    %989 = vmatpush1.bf16.msra.mxu0 %v199
    %990 = vmatprep.subr.bf16.mxu0 %v197
    %991 = vmatpush1.bf16.msra.mxu0 %v196
    %992 = vmatprep.subr.bf16.mxu0 %v194
    %993 = vmatpush1.bf16.msra.mxu0 %v193
    %994 = vmatprep.subr.bf16.mxu0 %v191
    %995 = vmatpush1.bf16.msra.mxu0 %v190
    %996 = vmatprep.subr.bf16.mxu0 %v188
    %997 = vmatpush1.bf16.msra.mxu0 %v187
    %998 = vmatprep.subr.bf16.mxu0 %v185
    %999 = vmatpush1.bf16.msra.mxu0 %v184
    %1000 = vmatprep.subr.bf16.mxu0 %v182
    %1001 = vmatpush1.bf16.msra.mxu0 %v181
    %1002 = vmatprep.subr.bf16.mxu0 %v179
    %1003 = vmatpush1.bf16.msra.mxu0 %v178
    %1004 = vmatprep.subr.bf16.mxu0 0
    %1005 = vmatpush2.bf16.msra.mxu0 0
    %1006 = vmatprep.subr.bf16.mxu0 0
    %1007 = vmatpush2.bf16.msra.mxu0 0
    %1008 = vmatprep.subr.bf16.mxu0 0
    %1009 = vmatpush2.bf16.msra.mxu0 0
    %1010 = vmatprep.subr.bf16.mxu0 0
    %1011 = vmatpush2.bf16.msra.mxu0 0
    %1012 = vmatprep.subr.bf16.mxu0 0
    %1013 = vmatpush2.bf16.msra.mxu0 0
    %1014 = vmatprep.subr.bf16.mxu0 0
    %1015 = vmatpush2.bf16.msra.mxu0 0
    %1016 = vmatprep.subr.bf16.mxu0 0
    %1017 = vmatpush2.bf16.msra.mxu0 0
    %1018 = vmatprep.subr.bf16.mxu0 0
    %1019 = vmatpush2.bf16.msra.mxu0 0
    %1020 = vmatprep.mubr.bf16.mxu0 0
    %1021 = vmatmul.mubr.bf16.gmra.mxu0 %v987
    %v1022 = vpop.f32.mrf.mxu0
    %v1023 = vadd.f32 0.0, %v1022
    %v1024 = vpop.f32.mrf.mxu0
    %v1025 = vadd.f32 0.0, %v1024
    %v1026 = vpop.f32.mrf.mxu0
    %v1027 = vpop.f32.mrf.mxu0
    %1028 = vdwg.mxu0
    %1029 = vmatprep.subr.bf16.mxu0 0
    %1030 = vmatpush1.bf16.msra.mxu0 %v201
    %1031 = vmatprep.subr.bf16.mxu0 0
    %1032 = vmatpush1.bf16.msra.mxu0 %v198
    %1033 = vmatprep.subr.bf16.mxu0 0
    %1034 = vmatpush1.bf16.msra.mxu0 %v195
    %1035 = vmatprep.subr.bf16.mxu0 0
    %1036 = vmatpush1.bf16.msra.mxu0 %v192
    %1037 = vmatprep.subr.bf16.mxu0 0
    %1038 = vmatpush1.bf16.msra.mxu0 %v189
    %1039 = vmatprep.subr.bf16.mxu0 0
    %1040 = vmatpush1.bf16.msra.mxu0 %v186
    %1041 = vmatprep.subr.bf16.mxu0 0
    %1042 = vmatpush1.bf16.msra.mxu0 %v183
    %1043 = vmatprep.subr.bf16.mxu0 0
    %1044 = vmatpush1.bf16.msra.mxu0 %v180
    %1045 = vmatprep.subr.bf16.mxu0 0
    %1046 = vmatpush2.bf16.msra.mxu0 0
    %1047 = vmatprep.subr.bf16.mxu0 0
    %1048 = vmatpush2.bf16.msra.mxu0 0
    %1049 = vmatprep.subr.bf16.mxu0 0
    %1050 = vmatpush2.bf16.msra.mxu0 0
    %1051 = vmatprep.subr.bf16.mxu0 0
    %1052 = vmatpush2.bf16.msra.mxu0 0
    %1053 = vmatprep.subr.bf16.mxu0 0
    %1054 = vmatpush2.bf16.msra.mxu0 0
    %1055 = vmatprep.subr.bf16.mxu0 0
    %1056 = vmatpush2.bf16.msra.mxu0 0
    %1057 = vmatprep.subr.bf16.mxu0 0
    %1058 = vmatpush2.bf16.msra.mxu0 0
    %1059 = vmatprep.subr.bf16.mxu0 0
    %1060 = vmatpush2.bf16.msra.mxu0 0
    %1061 = vmatprep.mubr.bf16.mxu0 0
    %1062 = vmatmul.mubr.bf16.gmra.mxu0 %v987
    %v1063 = vpop.f32.mrf.mxu0
    %v1064 = vadd.f32 0.0, %v1063
    %v1065 = vpop.f32.mrf.mxu0
    %v1066 = vpop.f32.mrf.mxu0
    %v1067 = vpop.f32.mrf.mxu0
    %1068 = vdwg.mxu0
    %v1069 = vadd.f32 %v984, %v1023
    %v1070 = vadd.f32 %v985, %v1025
    %v1071 = vadd.f32 %v986, %v1064
    %v1072 = vxor.u32 %v1069, 2147483648
    %v1073 = vmul.f32 %v1072, 1.442695
    %v1074 = vpow.pop %v1073
    %v1075 = vadd.f32 %v1074, 1.0
    %v1076 = vrcp.pop %v1075
    %v1077 = vmul.f32 1.0, %v1076
    %v1078 = vmul.f32 %v1077, %v1070
    %v1079 = vtanh.pop %v1078
    %v1080 = vadd.f32 %v1071, -1.0
    %v1081 = vxor.u32 %v1080, 2147483648
    %v1082 = vmul.f32 %v1081, 1.442695
    %v1083 = vpow.pop %v1082
    %v1084 = vadd.f32 %v1083, 1.0
    %v1085 = vrcp.pop %v1084
    %v1086 = vmul.f32 1.0, %v1085
    %v1087 = vsub.f32 %v1079, %v980
    %v1088 = vmul.f32 %v1086, %v1087
    %v1089 = vadd.f32 %v980, %v1088
    %s1090 = scalar_lea.vmem [#allocation9], 56
    %1091 = vst [vmem:[%s1090] sm:$0xff] %v1089
    %1092 = vst [vmem:[#allocation2] sm:$0xff] %v1089
    // Predicated region
    $region30: #{tpu_custom_call.1} parent=1 // pred_check
      _
    $region31: #{tpu_custom_call.1} parent=1 // pred_check_branch
      %1094 = sbr.rel (0) target = $region33
    $region32: #{tpu_custom_call.1} parent=1 // pred_region
      %s1096 = ssub.s32 1024, 1024
      %1097 = vsyncadd [#allocation5], %s1096
      %s1098 = sshll.u32 [#allocation9], 4
      %s1099 = int_to_ptr.vmem [resolvable:$true] %s1098
      %1104 = dma.vmem_to_hbm [thread:$0]  %s1099, 1024, %s3, [#allocation5], 128, 128, 8
    $region33: #{tpu_custom_call.1} parent=1 // pred_fallthru
      _
    // Predicated region
    $region34: #{tpu_custom_call.1} parent=1 // pred_check
      _
    $region35: #{tpu_custom_call.1} parent=1 // pred_check_branch
      %1106 = sbr.rel (0) target = $region37
    $region36: #{tpu_custom_call.1} parent=1 // pred_region
      %1107 = dma.done [#allocation5], 1024
    $region37: #{tpu_custom_call.1} parent=1 // pred_fallthru
      _
    %1108 = vsyncpa [#allocation4], 1
    %1109 = vsyncpa [#allocation7], 1
    %1110 = vsyncpa [#allocation5], 1

</llo_original>
